<compile_context>
chip_gen: v6e
topology: v6e:2x2x1
jax: 0.10.0
libtpu: 0.0.40
codegen_flags: <defaults>
</compile_context>

<pallas_src>
import math

import numpy as np

import jax
import jax.numpy as jnp
from jax import lax
from jax.experimental import pallas as pl
from jax.experimental.pallas import tpu as pltpu

DROP_P = 0.1
_DROP_THRESHOLD_24 = int(DROP_P * (1 << 24))        # keep iff hash_bits[8:32] >= thr

# lowbias32 hash constants (as wrapped int32 two's-complement values).
_HASH_C1 = 0x7FEB352D
_HASH_C2 = 0x846CA68B - (1 << 32)


def _lshr(x, s):
    """Logical right shift for int32 values (arithmetic shift + mask)."""
    return (x >> s) & ((1 << (32 - s)) - 1)


def _hash_i32(x):
    """lowbias32 integer hash; bit-identical to the uint32 version."""
    x = x ^ _lshr(x, 16)
    x = x * _HASH_C1
    x = x ^ _lshr(x, 15)
    x = x * _HASH_C2
    x = x ^ _lshr(x, 16)
    return x


def _attn_kernel(seed_ref, q_ref, k_ref, v_ref, mask_ref, o_ref):
    b = pl.program_id(0)                              # batch index

    q = q_ref[...]                                    # (H, Lq, D) f32
    k = k_ref[...]                                    # (H, Lk, D)
    v = v_ref[...]                                    # (H, Lk, D)
    m = mask_ref[0]                                   # (Lq, Lk) — broadcast over H

    H, Lq, D = q.shape
    Lk = k.shape[1]
    scale = 1.0 / math.sqrt(D)

    # Scale q (H*Lq*D muls) instead of the scores (H*Lq*Lk muls).
    q = q * scale

    # scores + mask : batched QK^T on the MXU (no explicit transpose of k).
    s = jnp.einsum("hqd,hkd->hqk", q, k,
                   preferred_element_type=jnp.float32)  # (H, Lq, Lk)
    s = s + m[None, :, :]

    # numerically-stable softmax numerator; keep the denominator for later.
    s_max = jnp.max(s, axis=-1, keepdims=True)
    p = jnp.exp(s - s_max)                              # (H, Lq, Lk)
    denom = jnp.sum(p, axis=-1, keepdims=True)          # (H, Lq, 1)

    # dropout(p=0.1): stateless counter-based RNG + integer threshold compare.
    hi = lax.broadcasted_iota(jnp.int32, (H, Lq, Lk), 0)
    qi = lax.broadcasted_iota(jnp.int32, (H, Lq, Lk), 1)
    ki = lax.broadcasted_iota(jnp.int32, (H, Lq, Lk), 2)
    ctr = ((b * H + hi) * Lq + qi) * Lk + ki + seed_ref[0]
    bits = _hash_i32(ctr)
    r24 = _lshr(bits, 8)                                # uniform in [0, 2^24)
    keep = r24 >= _DROP_THRESHOLD_24
    pk = jnp.where(keep, p, 0.0)                        # drop before PV matmul

    # PV matmul on unnormalized, dropped probabilities.
    o = jnp.einsum("hqk,hkd->hqd", pk, v,
                   preferred_element_type=jnp.float32)  # (H, Lq, D)

    # Deferred softmax normalization + inverted-dropout scale (per-row).
    inv = (1.0 / (1.0 - DROP_P)) / denom                # (H, Lq, 1)
    o_ref[...] = (o * inv).astype(o_ref.dtype)


def attention_dropout(query, key, value, attn_mask, seed=0):
    """query/key/value: (B, H, L, D) f32, attn_mask: (1, 1, Lq, Lk) f32."""
    B, H, Lq, D = query.shape
    Lk = key.shape[2]

    q = query.reshape(B * H, Lq, D)
    k = key.reshape(B * H, Lk, D)
    v = value.reshape(B * H, Lk, D)
    m = attn_mask.reshape(1, Lq, Lk)
    seed_arr = jnp.array([seed], dtype=jnp.int32)

    out = pl.pallas_call(
        _attn_kernel,
        out_shape=jax.ShapeDtypeStruct((B * H, Lq, D), jnp.float32),
        grid_spec=pltpu.PrefetchScalarGridSpec(
            num_scalar_prefetch=1,
            grid=(B,),                                   # one step per batch element
            in_specs=[
                pl.BlockSpec((H, Lq, D), lambda b, seed: (b, 0, 0)),
                pl.BlockSpec((H, Lk, D), lambda b, seed: (b, 0, 0)),
                pl.BlockSpec((H, Lk, D), lambda b, seed: (b, 0, 0)),
                pl.BlockSpec((1, Lq, Lk), lambda b, seed: (0, 0, 0)),
            ],
            out_specs=pl.BlockSpec((H, Lq, D), lambda b, seed: (b, 0, 0)),
        ),
        compiler_params=pltpu.CompilerParams(
            dimension_semantics=("parallel",),           # megacore-friendly on v7x
        ),
    )(seed_arr, q, k, v, m)

    return out.reshape(B, H, Lq, D)


def attention_dropout_reference(query, key, value, attn_mask, seed=0):
    """Pure-JAX reference using the identical stateless dropout mask."""
    B, H, Lq, D = query.shape
    Lk = key.shape[2]
    s = jnp.einsum("bhqd,bhkd->bhqk", query, key,
                   preferred_element_type=jnp.float32) / math.sqrt(D)
    s = s + attn_mask
    w = jax.nn.softmax(s, axis=-1)

    bi = lax.broadcasted_iota(jnp.int32, (B, H, Lq, Lk), 0)
    hi = lax.broadcasted_iota(jnp.int32, (B, H, Lq, Lk), 1)
    qi = lax.broadcasted_iota(jnp.int32, (B, H, Lq, Lk), 2)
    ki = lax.broadcasted_iota(jnp.int32, (B, H, Lq, Lk), 3)
    ctr = ((bi * H + hi) * Lq + qi) * Lk + ki + jnp.int32(seed)
    keep = _lshr(_hash_i32(ctr), 8) >= _DROP_THRESHOLD_24
    w = jnp.where(keep, w * (1.0 / (1.0 - DROP_P)), 0.0)

    return jnp.einsum("bhqk,bhkd->bhqd", w, value,
                      preferred_element_type=jnp.float32)


if __name__ == "__main__":
    # Small shapes consistent with the module (B=1, 4 heads, modest seq/dim).
    B, H, Lq, Lk, D = 1, 4, 128, 128, 32

    root = jax.random.PRNGKey(0)
    kq, kk, kv, km = jax.random.split(root, 4)
    query = jax.random.normal(kq, (B, H, Lq, D), dtype=jnp.float32)
    key = jax.random.normal(kk, (B, H, Lk, D), dtype=jnp.float32)
    value = jax.random.normal(kv, (B, H, Lk, D), dtype=jnp.float32)
    attn_mask = jax.random.normal(km, (1, 1, Lq, Lk), dtype=jnp.float32)

    out = attention_dropout(query, key, value, attn_mask, seed=0)
    out = jax.block_until_ready(out)

    ref = attention_dropout_reference(query, key, value, attn_mask, seed=0)
    ref = jax.block_until_ready(ref)

    assert out.shape == (B, H, Lq, D) and out.dtype == jnp.float32
    np.testing.assert_allclose(np.asarray(out), np.asarray(ref),
                               rtol=2e-2, atol=2e-2)
    print("KERNEL_OK")
</pallas_src>

<mosaic_0001>
module attributes {stable_mosaic.version = 11 : i64} {
  func.func @_attn_kernel(%arg0: i32, %arg1: memref<1xi32, #tpu.memory_space<smem>>, %arg2: memref<4x128x32xf32, #tpu.memory_space<vmem>>, %arg3: memref<4x128x32xf32, #tpu.memory_space<vmem>>, %arg4: memref<4x128x32xf32, #tpu.memory_space<vmem>>, %arg5: memref<1x128x128xf32, #tpu.memory_space<vmem>>, %arg6: memref<4x128x32xf32, #tpu.memory_space<vmem>>) attributes {dimension_semantics = [#tpu.dimension_semantics<parallel>], iteration_bounds = array<i64: 1>, scalar_prefetch = 1 : i64, scratch_operands = 0 : i64, tpu.core_type = #tpu.core_type<tc>, window_params = [{transform_indices = @transform_0, window_bounds = array<i64: 4, 128, 32>}, {transform_indices = @transform_1, window_bounds = array<i64: 4, 128, 32>}, {transform_indices = @transform_2, window_bounds = array<i64: 4, 128, 32>}, {pipeline_mode = #tpu.pipeline_mode<synchronous>, transform_indices = @transform_3, window_bounds = array<i64: 1, 128, 128>}, {transform_indices = @transform_4, window_bounds = array<i64: 4, 128, 32>}]} {
    %c0 = arith.constant 0 : index
    %c0_0 = arith.constant 0 : index
    %c0_1 = arith.constant 0 : index
    %0 = vector.load %arg2[%c0, %c0_0, %c0_1] : memref<4x128x32xf32, #tpu.memory_space<vmem>>, vector<4x128x32xf32>
    %c0_2 = arith.constant 0 : index
    %c0_3 = arith.constant 0 : index
    %c0_4 = arith.constant 0 : index
    %1 = vector.load %arg3[%c0_2, %c0_3, %c0_4] : memref<4x128x32xf32, #tpu.memory_space<vmem>>, vector<4x128x32xf32>
    %c0_5 = arith.constant 0 : index
    %c0_6 = arith.constant 0 : index
    %c0_7 = arith.constant 0 : index
    %2 = vector.load %arg4[%c0_5, %c0_6, %c0_7] : memref<4x128x32xf32, #tpu.memory_space<vmem>>, vector<4x128x32xf32>
    %c0_8 = arith.constant 0 : index
    %c0_9 = arith.constant 0 : index
    %c0_10 = arith.constant 0 : index
    %3 = vector.load %arg5[%c0_8, %c0_9, %c0_10] : memref<1x128x128xf32, #tpu.memory_space<vmem>>, vector<1x128x128xf32>
    %4 = vector.shape_cast %3 : vector<1x128x128xf32> to vector<128x128xf32>
    %cst = arith.constant 0.176776692 : f32
    %5 = vector.broadcast %cst : f32 to vector<4x128x32xf32>
    %6 = arith.mulf %0, %5 : vector<4x128x32xf32>
    "tpu.trace_start"() <{level = 10 : i32, message = "hqd,hkd->hqk"}> : () -> ()
    %cst_11 = arith.constant dense<0.000000e+00> : vector<4x128x128xf32>
    %7 = tpu.matmul %6, %1, %cst_11 {dimension_numbers = #tpu.dot_dimension_numbers<[2], [2], [1], [1], [0, 0, 0, 1, 1, 1], [0], [0]>} : vector<4x128x32xf32>, vector<4x128x32xf32>, vector<4x128x128xf32> -> vector<4x128x128xf32>
    "tpu.trace_stop"() : () -> ()
    %8 = vector.shape_cast %4 : vector<128x128xf32> to vector<1x128x128xf32>
    %9 = vector.broadcast %8 : vector<1x128x128xf32> to vector<4x128x128xf32>
    %10 = arith.addf %7, %9 : vector<4x128x128xf32>
    %cst_12 = arith.constant dense<0xFF800000> : vector<4x128xf32>
    %11 = vector.multi_reduction <maximumf>, %10, %cst_12 [2] : vector<4x128x128xf32> to vector<4x128xf32>
    %12 = vector.shape_cast %11 : vector<4x128xf32> to vector<4x128x1xf32>
    %13 = vector.broadcast %12 : vector<4x128x1xf32> to vector<4x128x128xf32>
    %14 = arith.subf %10, %13 : vector<4x128x128xf32>
    %15 = math.exp %14 : vector<4x128x128xf32>
    %cst_13 = arith.constant dense<0.000000e+00> : vector<4x128xf32>
    %16 = vector.multi_reduction <add>, %15, %cst_13 [2] : vector<4x128x128xf32> to vector<4x128xf32>
    %17 = vector.shape_cast %16 : vector<4x128xf32> to vector<4x128x1xf32>
    %18 = tpu.iota {dimensions = array<i32: 0>} : vector<4x128x128xi32>
    %19 = tpu.iota {dimensions = array<i32: 1>} : vector<4x128x128xi32>
    %20 = tpu.iota {dimensions = array<i32: 2>} : vector<4x128x128xi32>
    %c4_i32 = arith.constant 4 : i32
    %21 = arith.muli %arg0, %c4_i32 : i32
    %22 = vector.broadcast %21 : i32 to vector<4x128x128xi32>
    %23 = arith.addi %22, %18 : vector<4x128x128xi32>
    %c128_i32 = arith.constant 128 : i32
    %24 = vector.broadcast %c128_i32 : i32 to vector<4x128x128xi32>
    %25 = arith.muli %23, %24 : vector<4x128x128xi32>
    %26 = arith.addi %25, %19 : vector<4x128x128xi32>
    %c128_i32_14 = arith.constant 128 : i32
    %27 = vector.broadcast %c128_i32_14 : i32 to vector<4x128x128xi32>
    %28 = arith.muli %26, %27 : vector<4x128x128xi32>
    %29 = arith.addi %28, %20 : vector<4x128x128xi32>
    %c0_15 = arith.constant 0 : index
    %30 = memref.load %arg1[%c0_15] : memref<1xi32, #tpu.memory_space<smem>>
    %31 = vector.broadcast %30 : i32 to vector<4x128x128xi32>
    %32 = arith.addi %29, %31 : vector<4x128x128xi32>
    %c16_i32 = arith.constant 16 : i32
    %33 = vector.broadcast %c16_i32 : i32 to vector<4x128x128xi32>
    %34 = arith.shrsi %32, %33 : vector<4x128x128xi32>
    %c65535_i32 = arith.constant 65535 : i32
    %35 = vector.broadcast %c65535_i32 : i32 to vector<4x128x128xi32>
    %36 = arith.andi %34, %35 : vector<4x128x128xi32>
    %37 = arith.xori %32, %36 : vector<4x128x128xi32>
    %c2146121005_i32 = arith.constant 2146121005 : i32
    %38 = vector.broadcast %c2146121005_i32 : i32 to vector<4x128x128xi32>
    %39 = arith.muli %37, %38 : vector<4x128x128xi32>
    %c15_i32 = arith.constant 15 : i32
    %40 = vector.broadcast %c15_i32 : i32 to vector<4x128x128xi32>
    %41 = arith.shrsi %39, %40 : vector<4x128x128xi32>
    %c131071_i32 = arith.constant 131071 : i32
    %42 = vector.broadcast %c131071_i32 : i32 to vector<4x128x128xi32>
    %43 = arith.andi %41, %42 : vector<4x128x128xi32>
    %44 = arith.xori %39, %43 : vector<4x128x128xi32>
    %c-2073254261_i32 = arith.constant -2073254261 : i32
    %45 = vector.broadcast %c-2073254261_i32 : i32 to vector<4x128x128xi32>
    %46 = arith.muli %44, %45 : vector<4x128x128xi32>
    %c16_i32_16 = arith.constant 16 : i32
    %47 = vector.broadcast %c16_i32_16 : i32 to vector<4x128x128xi32>
    %48 = arith.shrsi %46, %47 : vector<4x128x128xi32>
    %c65535_i32_17 = arith.constant 65535 : i32
    %49 = vector.broadcast %c65535_i32_17 : i32 to vector<4x128x128xi32>
    %50 = arith.andi %48, %49 : vector<4x128x128xi32>
    %51 = arith.xori %46, %50 : vector<4x128x128xi32>
    %c8_i32 = arith.constant 8 : i32
    %52 = vector.broadcast %c8_i32 : i32 to vector<4x128x128xi32>
    %53 = arith.shrsi %51, %52 : vector<4x128x128xi32>
    %c16777215_i32 = arith.constant 16777215 : i32
    %54 = vector.broadcast %c16777215_i32 : i32 to vector<4x128x128xi32>
    %55 = arith.andi %53, %54 : vector<4x128x128xi32>
    %c1677721_i32 = arith.constant 1677721 : i32
    %56 = vector.broadcast %c1677721_i32 : i32 to vector<4x128x128xi32>
    %57 = arith.cmpi sge, %55, %56 : vector<4x128x128xi32>
    %cst_18 = arith.constant 0.000000e+00 : f32
    %58 = vector.broadcast %cst_18 : f32 to vector<4x128x128xf32>
    %59 = arith.select %57, %15, %58 : vector<4x128x128xi1>, vector<4x128x128xf32>
    "tpu.trace_start"() <{level = 10 : i32, message = "hqk,hkd->hqd"}> : () -> ()
    %cst_19 = arith.constant dense<0.000000e+00> : vector<4x128x32xf32>
    %60 = tpu.matmul %59, %2, %cst_19 {dimension_numbers = #tpu.dot_dimension_numbers<[2], [1], [1], [2], [0, 0, 0, 1, 1, 2], [0], [0]>} : vector<4x128x128xf32>, vector<4x128x32xf32>, vector<4x128x32xf32> -> vector<4x128x32xf32>
    "tpu.trace_stop"() : () -> ()
    %cst_20 = arith.constant 1.11111116 : f32
    %61 = vector.broadcast %cst_20 : f32 to vector<4x128x1xf32>
    %62 = arith.divf %61, %17 : vector<4x128x1xf32>
    %63 = vector.broadcast %62 : vector<4x128x1xf32> to vector<4x128x32xf32>
    %64 = arith.mulf %60, %63 : vector<4x128x32xf32>
    %c0_21 = arith.constant 0 : index
    %c0_22 = arith.constant 0 : index
    %c0_23 = arith.constant 0 : index
    %65 = vector.load %arg6[%c0_21, %c0_22, %c0_23] : memref<4x128x32xf32, #tpu.memory_space<vmem>>, vector<4x128x32xf32>
    tpu.vector_store %arg6[%c0_21, %c0_22, %c0_23], %64 {strides = array<i32>} : memref<4x128x32xf32, #tpu.memory_space<vmem>>, vector<4x128x32xf32>,
    return
  }
  func.func @transform_0(%arg0: i32, %arg1: memref<1xi32, #tpu.memory_space<smem>>) -> (i32, i32, i32) {
    %c0_i32 = arith.constant 0 : i32
    %c0_i32_0 = arith.constant 0 : i32
    %c0_i32_1 = arith.constant 0 : i32
    return %arg0, %c0_i32, %c0_i32_0 : i32, i32, i32
  }
  func.func @transform_1(%arg0: i32, %arg1: memref<1xi32, #tpu.memory_space<smem>>) -> (i32, i32, i32) {
    %c0_i32 = arith.constant 0 : i32
    %c0_i32_0 = arith.constant 0 : i32
    %c0_i32_1 = arith.constant 0 : i32
    return %arg0, %c0_i32, %c0_i32_0 : i32, i32, i32
  }
  func.func @transform_2(%arg0: i32, %arg1: memref<1xi32, #tpu.memory_space<smem>>) -> (i32, i32, i32) {
    %c0_i32 = arith.constant 0 : i32
    %c0_i32_0 = arith.constant 0 : i32
    %c0_i32_1 = arith.constant 0 : i32
    return %arg0, %c0_i32, %c0_i32_0 : i32, i32, i32
  }
  func.func @transform_3(%arg0: i32, %arg1: memref<1xi32, #tpu.memory_space<smem>>) -> (i32, i32, i32) {
    %c0_i32 = arith.constant 0 : i32
    %c0_i32_0 = arith.constant 0 : i32
    %c0_i32_1 = arith.constant 0 : i32
    %c0_i32_2 = arith.constant 0 : i32
    return %c0_i32, %c0_i32_0, %c0_i32_1 : i32, i32, i32
  }
  func.func @transform_4(%arg0: i32, %arg1: memref<1xi32, #tpu.memory_space<smem>>) -> (i32, i32, i32) {
    %c0_i32 = arith.constant 0 : i32
    %c0_i32_0 = arith.constant 0 : i32
    %c0_i32_1 = arith.constant 0 : i32
    return %arg0, %c0_i32, %c0_i32_0 : i32, i32, i32
  }
}

</mosaic_0001>

<llo_original>
// kernel: tpu_custom_call.1
$region0: #{tpu_custom_call.1}
  #allocation0 [shape = 'u32[]', space=smem, size = 0x4, offset = 0x4, fixed_abs, tag = 'smem constant byte address 0x4 - core index']
  #allocation1 [shape = 'u32[144,128]{1,0:T(1,128)}', space=vmem, size = 0x12000, scoped, tag = 'internal scratch']
  #allocation2 [shape = 's32[1]{0}', space=sflag, size = 0x4, scoped, tag = 'scoped memory for tpu_custom_call.1']
  #allocation3 [shape = 's32[1]{0:T(128)S(6)}', space=smem, size = 0x200, scoped, tag = 'prefetched SMEM operand 0']
  %s0 = inlined_call_operand.<no memory space> [shape: s32[1], index: 0, kind: input, shape index: {}]
  %s1 = inlined_call_operand.vmem [shape: f32[4,128,32], index: 1, kind: input, shape index: {}]
  %s2 = inlined_call_operand.vmem [shape: f32[4,128,32], index: 2, kind: input, shape index: {}]
  %s3 = inlined_call_operand.vmem [shape: f32[4,128,32], index: 3, kind: input, shape index: {}]
  %s4 = inlined_call_operand.vmem [shape: f32[1,128,128], index: 4, kind: input, shape index: {}]
  %s5 = inlined_call_operand.vmem [shape: f32[4,128,32], index: 5, kind: output, shape index: {}]
  %s6 = sld [smem:[#allocation0]]
  $region26: #{tpu_custom_call.1} parent=0
    _
  %s8 = ssub.s32 1, %s6
  %s9 = scalar_select 0, %s8, %s6
  %10 = sst [smem:[#allocation3]] %s0
  // Predicated region
  $region2: #{tpu_custom_call.1} parent=0 // pred_check
    _
  $region3: #{tpu_custom_call.1} parent=0 // pred_check_branch
    %12 = sbr.rel (0) target = $region5
  $region4: #{tpu_custom_call.1} parent=0 // pred_region
    _
  $region5: #{tpu_custom_call.1} parent=0 // pred_fallthru
    _
  // Predicated region
  $region6: #{tpu_custom_call.1} parent=0 // pred_check
    _
  $region7: #{tpu_custom_call.1} parent=0 // pred_check_branch
    %14 = sbr.rel (0) target = $region9
  $region8: #{tpu_custom_call.1} parent=0 // pred_region
    _
  $region9: #{tpu_custom_call.1} parent=0 // pred_fallthru
    _
  // Predicated region
  $region10: #{tpu_custom_call.1} parent=0 // pred_check
    _
  $region11: #{tpu_custom_call.1} parent=0 // pred_check_branch
    %16 = sbr.rel (0) target = $region13
  $region12: #{tpu_custom_call.1} parent=0 // pred_region
    _
  $region13: #{tpu_custom_call.1} parent=0 // pred_fallthru
    _
  // Predicated region
  $region14: #{tpu_custom_call.1} parent=0 // pred_check
    _
  $region15: #{tpu_custom_call.1} parent=0 // pred_check_branch
    %18 = sbr.rel (0) target = $region17
  $region16: #{tpu_custom_call.1} parent=0 // pred_region
    _
  $region17: #{tpu_custom_call.1} parent=0 // pred_fallthru
    _
  %v19 = vld [vmem:[%s1] sm:$0xff]
  %v20 = vld [vmem:[%s1 + $0x8] sm:$0xff]
  %v21 = vld [vmem:[%s1 + $0x10] sm:$0xff]
  %v22 = vld [vmem:[%s1 + $0x18] sm:$0xff]
  %v23 = vld [vmem:[%s1 + $0x20] sm:$0xff]
  %v24 = vld [vmem:[%s1 + $0x28] sm:$0xff]
  %v25 = vld [vmem:[%s1 + $0x30] sm:$0xff]
  %v26 = vld [vmem:[%s1 + $0x38] sm:$0xff]
  %v27 = vld [vmem:[%s1 + $0x40] sm:$0xff]
  %v28 = vld [vmem:[%s1 + $0x48] sm:$0xff]
  %v29 = vld [vmem:[%s1 + $0x50] sm:$0xff]
  %v30 = vld [vmem:[%s1 + $0x58] sm:$0xff]
  %v31 = vld [vmem:[%s1 + $0x60] sm:$0xff]
  %v32 = vld [vmem:[%s1 + $0x68] sm:$0xff]
  %v33 = vld [vmem:[%s1 + $0x70] sm:$0xff]
  %v34 = vld [vmem:[%s1 + $0x78] sm:$0xff]
  %v35 = vld [vmem:[%s1 + $0x80] sm:$0xff]
  %v36 = vld [vmem:[%s1 + $0x88] sm:$0xff]
  %v37 = vld [vmem:[%s1 + $0x90] sm:$0xff]
  %v38 = vld [vmem:[%s1 + $0x98] sm:$0xff]
  %v39 = vld [vmem:[%s1 + $0xa0] sm:$0xff]
  %v40 = vld [vmem:[%s1 + $0xa8] sm:$0xff]
  %v41 = vld [vmem:[%s1 + $0xb0] sm:$0xff]
  %v42 = vld [vmem:[%s1 + $0xb8] sm:$0xff]
  %v43 = vld [vmem:[%s1 + $0xc0] sm:$0xff]
  %v44 = vld [vmem:[%s1 + $0xc8] sm:$0xff]
  %v45 = vld [vmem:[%s1 + $0xd0] sm:$0xff]
  %v46 = vld [vmem:[%s1 + $0xd8] sm:$0xff]
  %v47 = vld [vmem:[%s1 + $0xe0] sm:$0xff]
  %v48 = vld [vmem:[%s1 + $0xe8] sm:$0xff]
  %v49 = vld [vmem:[%s1 + $0xf0] sm:$0xff]
  %v50 = vld [vmem:[%s1 + $0xf8] sm:$0xff]
  %v51 = vld [vmem:[%s1 + $0x100] sm:$0xff]
  %v52 = vld [vmem:[%s1 + $0x108] sm:$0xff]
  %v53 = vld [vmem:[%s1 + $0x110] sm:$0xff]
  %v54 = vld [vmem:[%s1 + $0x118] sm:$0xff]
  %v55 = vld [vmem:[%s1 + $0x120] sm:$0xff]
  %v56 = vld [vmem:[%s1 + $0x128] sm:$0xff]
  %v57 = vld [vmem:[%s1 + $0x130] sm:$0xff]
  %v58 = vld [vmem:[%s1 + $0x138] sm:$0xff]
  %v59 = vld [vmem:[%s1 + $0x140] sm:$0xff]
  %v60 = vld [vmem:[%s1 + $0x148] sm:$0xff]
  %v61 = vld [vmem:[%s1 + $0x150] sm:$0xff]
  %v62 = vld [vmem:[%s1 + $0x158] sm:$0xff]
  %v63 = vld [vmem:[%s1 + $0x160] sm:$0xff]
  %v64 = vld [vmem:[%s1 + $0x168] sm:$0xff]
  %v65 = vld [vmem:[%s1 + $0x170] sm:$0xff]
  %v66 = vld [vmem:[%s1 + $0x178] sm:$0xff]
  %v67 = vld [vmem:[%s1 + $0x180] sm:$0xff]
  %v68 = vld [vmem:[%s1 + $0x188] sm:$0xff]
  %v69 = vld [vmem:[%s1 + $0x190] sm:$0xff]
  %v70 = vld [vmem:[%s1 + $0x198] sm:$0xff]
  %v71 = vld [vmem:[%s1 + $0x1a0] sm:$0xff]
  %v72 = vld [vmem:[%s1 + $0x1a8] sm:$0xff]
  %v73 = vld [vmem:[%s1 + $0x1b0] sm:$0xff]
  %v74 = vld [vmem:[%s1 + $0x1b8] sm:$0xff]
  %v75 = vld [vmem:[%s1 + $0x1c0] sm:$0xff]
  %v76 = vld [vmem:[%s1 + $0x1c8] sm:$0xff]
  %v77 = vld [vmem:[%s1 + $0x1d0] sm:$0xff]
  %v78 = vld [vmem:[%s1 + $0x1d8] sm:$0xff]
  %v79 = vld [vmem:[%s1 + $0x1e0] sm:$0xff]
  %v80 = vld [vmem:[%s1 + $0x1e8] sm:$0xff]
  %v81 = vld [vmem:[%s1 + $0x1f0] sm:$0xff]
  %v82 = vld [vmem:[%s1 + $0x1f8] sm:$0xff]
  %v83 = vld [vmem:[%s2] sm:$0xff]
  %v84 = vld [vmem:[%s2 + $0x8] sm:$0xff]
  %v85 = vld [vmem:[%s2 + $0x10] sm:$0xff]
  %v86 = vld [vmem:[%s2 + $0x18] sm:$0xff]
  %v87 = vld [vmem:[%s2 + $0x20] sm:$0xff]
  %v88 = vld [vmem:[%s2 + $0x28] sm:$0xff]
  %v89 = vld [vmem:[%s2 + $0x30] sm:$0xff]
  %v90 = vld [vmem:[%s2 + $0x38] sm:$0xff]
  %v91 = vld [vmem:[%s2 + $0x40] sm:$0xff]
  %v92 = vld [vmem:[%s2 + $0x48] sm:$0xff]
  %v93 = vld [vmem:[%s2 + $0x50] sm:$0xff]
  %v94 = vld [vmem:[%s2 + $0x58] sm:$0xff]
  %v95 = vld [vmem:[%s2 + $0x60] sm:$0xff]
  %v96 = vld [vmem:[%s2 + $0x68] sm:$0xff]
  %v97 = vld [vmem:[%s2 + $0x70] sm:$0xff]
  %v98 = vld [vmem:[%s2 + $0x78] sm:$0xff]
  %v99 = vld [vmem:[%s2 + $0x80] sm:$0xff]
  %v100 = vld [vmem:[%s2 + $0x88] sm:$0xff]
  %v101 = vld [vmem:[%s2 + $0x90] sm:$0xff]
  %v102 = vld [vmem:[%s2 + $0x98] sm:$0xff]
  %v103 = vld [vmem:[%s2 + $0xa0] sm:$0xff]
  %v104 = vld [vmem:[%s2 + $0xa8] sm:$0xff]
  %v105 = vld [vmem:[%s2 + $0xb0] sm:$0xff]
  %v106 = vld [vmem:[%s2 + $0xb8] sm:$0xff]
  %v107 = vld [vmem:[%s2 + $0xc0] sm:$0xff]
  %v108 = vld [vmem:[%s2 + $0xc8] sm:$0xff]
  %v109 = vld [vmem:[%s2 + $0xd0] sm:$0xff]
  %v110 = vld [vmem:[%s2 + $0xd8] sm:$0xff]
  %v111 = vld [vmem:[%s2 + $0xe0] sm:$0xff]
  %v112 = vld [vmem:[%s2 + $0xe8] sm:$0xff]
  %v113 = vld [vmem:[%s2 + $0xf0] sm:$0xff]
  %v114 = vld [vmem:[%s2 + $0xf8] sm:$0xff]
  %v115 = vld [vmem:[%s2 + $0x100] sm:$0xff]
  %v116 = vld [vmem:[%s2 + $0x108] sm:$0xff]
  %v117 = vld [vmem:[%s2 + $0x110] sm:$0xff]
  %v118 = vld [vmem:[%s2 + $0x118] sm:$0xff]
  %v119 = vld [vmem:[%s2 + $0x120] sm:$0xff]
  %v120 = vld [vmem:[%s2 + $0x128] sm:$0xff]
  %v121 = vld [vmem:[%s2 + $0x130] sm:$0xff]
  %v122 = vld [vmem:[%s2 + $0x138] sm:$0xff]
  %v123 = vld [vmem:[%s2 + $0x140] sm:$0xff]
  %v124 = vld [vmem:[%s2 + $0x148] sm:$0xff]
  %v125 = vld [vmem:[%s2 + $0x150] sm:$0xff]
  %v126 = vld [vmem:[%s2 + $0x158] sm:$0xff]
  %v127 = vld [vmem:[%s2 + $0x160] sm:$0xff]
  %v128 = vld [vmem:[%s2 + $0x168] sm:$0xff]
  %v129 = vld [vmem:[%s2 + $0x170] sm:$0xff]
  %v130 = vld [vmem:[%s2 + $0x178] sm:$0xff]
  %v131 = vld [vmem:[%s2 + $0x180] sm:$0xff]
  %v132 = vld [vmem:[%s2 + $0x188] sm:$0xff]
  %v133 = vld [vmem:[%s2 + $0x190] sm:$0xff]
  %v134 = vld [vmem:[%s2 + $0x198] sm:$0xff]
  %v135 = vld [vmem:[%s2 + $0x1a0] sm:$0xff]
  %v136 = vld [vmem:[%s2 + $0x1a8] sm:$0xff]
  %v137 = vld [vmem:[%s2 + $0x1b0] sm:$0xff]
  %v138 = vld [vmem:[%s2 + $0x1b8] sm:$0xff]
  %v139 = vld [vmem:[%s2 + $0x1c0] sm:$0xff]
  %v140 = vld [vmem:[%s2 + $0x1c8] sm:$0xff]
  %v141 = vld [vmem:[%s2 + $0x1d0] sm:$0xff]
  %v142 = vld [vmem:[%s2 + $0x1d8] sm:$0xff]
  %v143 = vld [vmem:[%s2 + $0x1e0] sm:$0xff]
  %v144 = vld [vmem:[%s2 + $0x1e8] sm:$0xff]
  %v145 = vld [vmem:[%s2 + $0x1f0] sm:$0xff]
  %v146 = vld [vmem:[%s2 + $0x1f8] sm:$0xff]
  %v147 = vld [vmem:[%s3] sm:$0xff]
  %v148 = vld [vmem:[%s3 + $0x8] sm:$0xff]
  %v149 = vld [vmem:[%s3 + $0x10] sm:$0xff]
  %v150 = vld [vmem:[%s3 + $0x18] sm:$0xff]
  %v151 = vld [vmem:[%s3 + $0x20] sm:$0xff]
  %v152 = vld [vmem:[%s3 + $0x28] sm:$0xff]
  %v153 = vld [vmem:[%s3 + $0x30] sm:$0xff]
  %v154 = vld [vmem:[%s3 + $0x38] sm:$0xff]
  %v155 = vld [vmem:[%s3 + $0x40] sm:$0xff]
  %v156 = vld [vmem:[%s3 + $0x48] sm:$0xff]
  %v157 = vld [vmem:[%s3 + $0x50] sm:$0xff]
  %v158 = vld [vmem:[%s3 + $0x58] sm:$0xff]
  %v159 = vld [vmem:[%s3 + $0x60] sm:$0xff]
  %v160 = vld [vmem:[%s3 + $0x68] sm:$0xff]
  %v161 = vld [vmem:[%s3 + $0x70] sm:$0xff]
  %v162 = vld [vmem:[%s3 + $0x78] sm:$0xff]
  %v163 = vld [vmem:[%s3 + $0x80] sm:$0xff]
  %v164 = vld [vmem:[%s3 + $0x88] sm:$0xff]
  %v165 = vld [vmem:[%s3 + $0x90] sm:$0xff]
  %v166 = vld [vmem:[%s3 + $0x98] sm:$0xff]
  %v167 = vld [vmem:[%s3 + $0xa0] sm:$0xff]
  %v168 = vld [vmem:[%s3 + $0xa8] sm:$0xff]
  %v169 = vld [vmem:[%s3 + $0xb0] sm:$0xff]
  %v170 = vld [vmem:[%s3 + $0xb8] sm:$0xff]
  %v171 = vld [vmem:[%s3 + $0xc0] sm:$0xff]
  %v172 = vld [vmem:[%s3 + $0xc8] sm:$0xff]
  %v173 = vld [vmem:[%s3 + $0xd0] sm:$0xff]
  %v174 = vld [vmem:[%s3 + $0xd8] sm:$0xff]
  %v175 = vld [vmem:[%s3 + $0xe0] sm:$0xff]
  %v176 = vld [vmem:[%s3 + $0xe8] sm:$0xff]
  %v177 = vld [vmem:[%s3 + $0xf0] sm:$0xff]
  %v178 = vld [vmem:[%s3 + $0xf8] sm:$0xff]
  %v179 = vld [vmem:[%s3 + $0x100] sm:$0xff]
  %v180 = vld [vmem:[%s3 + $0x108] sm:$0xff]
  %v181 = vld [vmem:[%s3 + $0x110] sm:$0xff]
  %v182 = vld [vmem:[%s3 + $0x118] sm:$0xff]
  %v183 = vld [vmem:[%s3 + $0x120] sm:$0xff]
  %v184 = vld [vmem:[%s3 + $0x128] sm:$0xff]
  %v185 = vld [vmem:[%s3 + $0x130] sm:$0xff]
  %v186 = vld [vmem:[%s3 + $0x138] sm:$0xff]
  %v187 = vld [vmem:[%s3 + $0x140] sm:$0xff]
  %v188 = vld [vmem:[%s3 + $0x148] sm:$0xff]
  %v189 = vld [vmem:[%s3 + $0x150] sm:$0xff]
  %v190 = vld [vmem:[%s3 + $0x158] sm:$0xff]
  %v191 = vld [vmem:[%s3 + $0x160] sm:$0xff]
  %v192 = vld [vmem:[%s3 + $0x168] sm:$0xff]
  %v193 = vld [vmem:[%s3 + $0x170] sm:$0xff]
  %v194 = vld [vmem:[%s3 + $0x178] sm:$0xff]
  %v195 = vld [vmem:[%s3 + $0x180] sm:$0xff]
  %v196 = vld [vmem:[%s3 + $0x188] sm:$0xff]
  %v197 = vld [vmem:[%s3 + $0x190] sm:$0xff]
  %v198 = vld [vmem:[%s3 + $0x198] sm:$0xff]
  %v199 = vld [vmem:[%s3 + $0x1a0] sm:$0xff]
  %v200 = vld [vmem:[%s3 + $0x1a8] sm:$0xff]
  %v201 = vld [vmem:[%s3 + $0x1b0] sm:$0xff]
  %v202 = vld [vmem:[%s3 + $0x1b8] sm:$0xff]
  %v203 = vld [vmem:[%s3 + $0x1c0] sm:$0xff]
  %v204 = vld [vmem:[%s3 + $0x1c8] sm:$0xff]
  %v205 = vld [vmem:[%s3 + $0x1d0] sm:$0xff]
  %v206 = vld [vmem:[%s3 + $0x1d8] sm:$0xff]
  %v207 = vld [vmem:[%s3 + $0x1e0] sm:$0xff]
  %v208 = vld [vmem:[%s3 + $0x1e8] sm:$0xff]
  %v209 = vld [vmem:[%s3 + $0x1f0] sm:$0xff]
  %v210 = vld [vmem:[%s3 + $0x1f8] sm:$0xff]
  %v211 = vld [vmem:[%s4] sm:$0xff]
  %v212 = vld [vmem:[%s4 + $0x8] sm:$0xff]
  %v213 = vld [vmem:[%s4 + $0x10] sm:$0xff]
  %v214 = vld [vmem:[%s4 + $0x18] sm:$0xff]
  %v215 = vld [vmem:[%s4 + $0x20] sm:$0xff]
  %v216 = vld [vmem:[%s4 + $0x28] sm:$0xff]
  %v217 = vld [vmem:[%s4 + $0x30] sm:$0xff]
  %v218 = vld [vmem:[%s4 + $0x38] sm:$0xff]
  %v219 = vld [vmem:[%s4 + $0x40] sm:$0xff]
  %v220 = vld [vmem:[%s4 + $0x48] sm:$0xff]
  %v221 = vld [vmem:[%s4 + $0x50] sm:$0xff]
  %v222 = vld [vmem:[%s4 + $0x58] sm:$0xff]
  %v223 = vld [vmem:[%s4 + $0x60] sm:$0xff]
  %v224 = vld [vmem:[%s4 + $0x68] sm:$0xff]
  %v225 = vld [vmem:[%s4 + $0x70] sm:$0xff]
  %v226 = vld [vmem:[%s4 + $0x78] sm:$0xff]
  %v227 = vmul.f32 %v19, 0.17677669
  %v228 = vmul.f32 %v20, 0.17677669
  %v229 = vmul.f32 %v21, 0.17677669
  %v230 = vmul.f32 %v22, 0.17677669
  %v231 = vmul.f32 %v23, 0.17677669
  %v232 = vmul.f32 %v24, 0.17677669
  %v233 = vmul.f32 %v25, 0.17677669
  %v234 = vmul.f32 %v26, 0.17677669
  %v235 = vmul.f32 %v27, 0.17677669
  %v236 = vmul.f32 %v28, 0.17677669
  %v237 = vmul.f32 %v29, 0.17677669
  %v238 = vmul.f32 %v30, 0.17677669
  %v239 = vmul.f32 %v31, 0.17677669
  %v240 = vmul.f32 %v32, 0.17677669
  %v241 = vmul.f32 %v33, 0.17677669
  %v242 = vmul.f32 %v34, 0.17677669
  %v243 = vmul.f32 %v35, 0.17677669
  %v244 = vmul.f32 %v36, 0.17677669
  %v245 = vmul.f32 %v37, 0.17677669
  %v246 = vmul.f32 %v38, 0.17677669
  %v247 = vmul.f32 %v39, 0.17677669
  %v248 = vmul.f32 %v40, 0.17677669
  %v249 = vmul.f32 %v41, 0.17677669
  %v250 = vmul.f32 %v42, 0.17677669
  %v251 = vmul.f32 %v43, 0.17677669
  %v252 = vmul.f32 %v44, 0.17677669
  %v253 = vmul.f32 %v45, 0.17677669
  %v254 = vmul.f32 %v46, 0.17677669
  %v255 = vmul.f32 %v47, 0.17677669
  %v256 = vmul.f32 %v48, 0.17677669
  %v257 = vmul.f32 %v49, 0.17677669
  %v258 = vmul.f32 %v50, 0.17677669
  %v259 = vmul.f32 %v51, 0.17677669
  %v260 = vmul.f32 %v52, 0.17677669
  %v261 = vmul.f32 %v53, 0.17677669
  %v262 = vmul.f32 %v54, 0.17677669
  %v263 = vmul.f32 %v55, 0.17677669
  %v264 = vmul.f32 %v56, 0.17677669
  %v265 = vmul.f32 %v57, 0.17677669
  %v266 = vmul.f32 %v58, 0.17677669
  %v267 = vmul.f32 %v59, 0.17677669
  %v268 = vmul.f32 %v60, 0.17677669
  %v269 = vmul.f32 %v61, 0.17677669
  %v270 = vmul.f32 %v62, 0.17677669
  %v271 = vmul.f32 %v63, 0.17677669
  %v272 = vmul.f32 %v64, 0.17677669
  %v273 = vmul.f32 %v65, 0.17677669
  %v274 = vmul.f32 %v66, 0.17677669
  %v275 = vmul.f32 %v67, 0.17677669
  %v276 = vmul.f32 %v68, 0.17677669
  %v277 = vmul.f32 %v69, 0.17677669
  %v278 = vmul.f32 %v70, 0.17677669
  %v279 = vmul.f32 %v71, 0.17677669
  %v280 = vmul.f32 %v72, 0.17677669
  %v281 = vmul.f32 %v73, 0.17677669
  %v282 = vmul.f32 %v74, 0.17677669
  %v283 = vmul.f32 %v75, 0.17677669
  %v284 = vmul.f32 %v76, 0.17677669
  %v285 = vmul.f32 %v77, 0.17677669
  %v286 = vmul.f32 %v78, 0.17677669
  %v287 = vmul.f32 %v79, 0.17677669
  %v288 = vmul.f32 %v80, 0.17677669
  %v289 = vmul.f32 %v81, 0.17677669
  %v290 = vmul.f32 %v82, 0.17677669
  %vm291 = vcmask 261120
  %v293 = vsel %vm291, %v227, 0
  %v296 = vsel %vm291, %v228, 0
  %v299 = vsel %vm291, %v229, 0
  %v302 = vsel %vm291, %v230, 0
  %v305 = vsel %vm291, %v231, 0
  %v308 = vsel %vm291, %v232, 0
  %v311 = vsel %vm291, %v233, 0
  %v314 = vsel %vm291, %v234, 0
  %v317 = vsel %vm291, %v235, 0
  %v320 = vsel %vm291, %v236, 0
  %v323 = vsel %vm291, %v237, 0
  %v326 = vsel %vm291, %v238, 0
  %v329 = vsel %vm291, %v239, 0
  %v332 = vsel %vm291, %v240, 0
  %v335 = vsel %vm291, %v241, 0
  %v338 = vsel %vm291, %v242, 0
  %v341 = vsel %vm291, %v83, 0
  %v344 = vsel %vm291, %v84, 0
  %v347 = vsel %vm291, %v85, 0
  %v350 = vsel %vm291, %v86, 0
  %v353 = vsel %vm291, %v87, 0
  %v356 = vsel %vm291, %v88, 0
  %v359 = vsel %vm291, %v89, 0
  %v362 = vsel %vm291, %v90, 0
  %v365 = vsel %vm291, %v91, 0
  %v368 = vsel %vm291, %v92, 0
  %v371 = vsel %vm291, %v93, 0
  %v374 = vsel %vm291, %v94, 0
  %v377 = vsel %vm291, %v95, 0
  %v380 = vsel %vm291, %v96, 0
  %v383 = vsel %vm291, %v97, 0
  %v386 = vsel %vm291, %v98, 0
  %388 = vmatprep.subr.mxu0 0.0
  %389 = vmatpush1.xpose.msra.mxu0 %v386
  %390 = vmatprep.subr.mxu0 0.0
  %391 = vmatpush1.xpose.msra.mxu0 %v383
  %392 = vmatprep.subr.mxu0 0.0
  %393 = vmatpush1.xpose.msra.mxu0 %v380
  %394 = vmatprep.subr.mxu0 0.0
  %395 = vmatpush1.xpose.msra.mxu0 %v377
  %396 = vmatprep.subr.mxu0 0.0
  %397 = vmatpush1.xpose.msra.mxu0 %v374
  %398 = vmatprep.subr.mxu0 0.0
  %399 = vmatpush1.xpose.msra.mxu0 %v371
  %400 = vmatprep.subr.mxu0 0.0
  %401 = vmatpush1.xpose.msra.mxu0 %v368
  %402 = vmatprep.subr.mxu0 0.0
  %403 = vmatpush1.xpose.msra.mxu0 %v365
  %404 = vmatprep.subr.mxu0 0.0
  %405 = vmatpush1.xpose.msra.mxu0 %v362
  %406 = vmatprep.subr.mxu0 0.0
  %407 = vmatpush1.xpose.msra.mxu0 %v359
  %408 = vmatprep.subr.mxu0 0.0
  %409 = vmatpush1.xpose.msra.mxu0 %v356
  %410 = vmatprep.subr.mxu0 0.0
  %411 = vmatpush1.xpose.msra.mxu0 %v353
  %412 = vmatprep.subr.mxu0 0.0
  %413 = vmatpush1.xpose.msra.mxu0 %v350
  %414 = vmatprep.subr.mxu0 0.0
  %415 = vmatpush1.xpose.msra.mxu0 %v347
  %416 = vmatprep.subr.mxu0 0.0
  %417 = vmatpush1.xpose.msra.mxu0 %v344
  %418 = vmatprep.subr.mxu0 0.0
  %419 = vmatpush1.xpose.msra.mxu0 %v341
  %420 = vmatprep.subr.mxu0 0.0
  %421 = vmatpush2.xpose.msra.mxu0 0.0
  %422 = vmatprep.subr.mxu0 0.0
  %423 = vmatpush2.xpose.msra.mxu0 0.0
  %424 = vmatprep.subr.mxu0 0.0
  %425 = vmatpush2.xpose.msra.mxu0 0.0
  %426 = vmatprep.subr.mxu0 0.0
  %427 = vmatpush2.xpose.msra.mxu0 0.0
  %428 = vmatprep.subr.mxu0 0.0
  %429 = vmatpush2.xpose.msra.mxu0 0.0
  %430 = vmatprep.subr.mxu0 0.0
  %431 = vmatpush2.xpose.msra.mxu0 0.0
  %432 = vmatprep.subr.mxu0 0.0
  %433 = vmatpush2.xpose.msra.mxu0 0.0
  %434 = vmatprep.subr.mxu0 0.0
  %435 = vmatpush2.xpose.msra.mxu0 0.0
  %436 = vmatprep.subr.mxu0 0.0
  %437 = vmatpush2.xpose.msra.mxu0 0.0
  %438 = vmatprep.subr.mxu0 0.0
  %439 = vmatpush2.xpose.msra.mxu0 0.0
  %440 = vmatprep.subr.mxu0 0.0
  %441 = vmatpush2.xpose.msra.mxu0 0.0
  %442 = vmatprep.subr.mxu0 0.0
  %443 = vmatpush2.xpose.msra.mxu0 0.0
  %444 = vmatprep.subr.mxu0 0.0
  %445 = vmatpush2.xpose.msra.mxu0 0.0
  %446 = vmatprep.subr.mxu0 0.0
  %447 = vmatpush2.xpose.msra.mxu0 0.0
  %448 = vmatprep.subr.mxu0 0.0
  %449 = vmatpush2.xpose.msra.mxu0 0.0
  %450 = vmatprep.subr.mxu0 0.0
  %451 = vmatpush2.xpose.msra.mxu0 0.0
  %452 = vmatprep.mubr.f32.mxu0 0.0
  %453 = vmatmul.mubr.f32.gmra.mxu0 %v293
  %v454 = vpop.f32.mrf.mxu0
  %v455 = vadd.f32 %v211, %v454
  %v456 = vpop.f32.mrf.mxu0
  %457 = vmatprep.mubr.f32.mxu0 0.0
  %458 = vmatmul.mubr.f32.gmra.mxu0 %v296
  %v459 = vpop.f32.mrf.mxu0
  %v460 = vadd.f32 %v212, %v459
  %v461 = vpop.f32.mrf.mxu0
  %462 = vmatprep.mubr.f32.mxu0 0.0
  %463 = vmatmul.mubr.f32.gmra.mxu0 %v299
  %v464 = vpop.f32.mrf.mxu0
  %v465 = vadd.f32 %v213, %v464
  %v466 = vpop.f32.mrf.mxu0
  %467 = vmatprep.mubr.f32.mxu0 0.0
  %468 = vmatmul.mubr.f32.gmra.mxu0 %v302
  %v469 = vpop.f32.mrf.mxu0
  %v470 = vadd.f32 %v214, %v469
  %v471 = vpop.f32.mrf.mxu0
  %472 = vmatprep.mubr.f32.mxu0 0.0
  %473 = vmatmul.mubr.f32.gmra.mxu0 %v305
  %v474 = vpop.f32.mrf.mxu0
  %v475 = vadd.f32 %v215, %v474
  %v476 = vpop.f32.mrf.mxu0
  %477 = vmatprep.mubr.f32.mxu0 0.0
  %478 = vmatmul.mubr.f32.gmra.mxu0 %v308
  %v479 = vpop.f32.mrf.mxu0
  %v480 = vadd.f32 %v216, %v479
  %v481 = vpop.f32.mrf.mxu0
  %482 = vmatprep.mubr.f32.mxu0 0.0
  %483 = vmatmul.mubr.f32.gmra.mxu0 %v311
  %v484 = vpop.f32.mrf.mxu0
  %v485 = vadd.f32 %v217, %v484
  %v486 = vpop.f32.mrf.mxu0
  %487 = vmatprep.mubr.f32.mxu0 0.0
  %488 = vmatmul.mubr.f32.gmra.mxu0 %v314
  %v489 = vpop.f32.mrf.mxu0
  %v490 = vadd.f32 %v218, %v489
  %v491 = vpop.f32.mrf.mxu0
  %492 = vmatprep.mubr.f32.mxu0 0.0
  %493 = vmatmul.mubr.f32.gmra.mxu0 %v317
  %v494 = vpop.f32.mrf.mxu0
  %v495 = vadd.f32 %v219, %v494
  %v496 = vpop.f32.mrf.mxu0
  %497 = vmatprep.mubr.f32.mxu0 0.0
  %498 = vmatmul.mubr.f32.gmra.mxu0 %v320
  %v499 = vpop.f32.mrf.mxu0
  %v500 = vadd.f32 %v220, %v499
  %v501 = vpop.f32.mrf.mxu0
  %502 = vmatprep.mubr.f32.mxu0 0.0
  %503 = vmatmul.mubr.f32.gmra.mxu0 %v323
  %v504 = vpop.f32.mrf.mxu0
  %v505 = vadd.f32 %v221, %v504
  %v506 = vpop.f32.mrf.mxu0
  %507 = vmatprep.mubr.f32.mxu0 0.0
  %508 = vmatmul.mubr.f32.gmra.mxu0 %v326
  %v509 = vpop.f32.mrf.mxu0
  %v510 = vadd.f32 %v222, %v509
  %v511 = vpop.f32.mrf.mxu0
  %512 = vmatprep.mubr.f32.mxu0 0.0
  %513 = vmatmul.mubr.f32.gmra.mxu0 %v329
  %v514 = vpop.f32.mrf.mxu0
  %v515 = vadd.f32 %v223, %v514
  %v516 = vpop.f32.mrf.mxu0
  %517 = vmatprep.mubr.f32.mxu0 0.0
  %518 = vmatmul.mubr.f32.gmra.mxu0 %v332
  %v519 = vpop.f32.mrf.mxu0
  %v520 = vadd.f32 %v224, %v519
  %v521 = vpop.f32.mrf.mxu0
  %522 = vmatprep.mubr.f32.mxu0 0.0
  %523 = vmatmul.mubr.f32.gmra.mxu0 %v335
  %v524 = vpop.f32.mrf.mxu0
  %v525 = vadd.f32 %v225, %v524
  %v526 = vpop.f32.mrf.mxu0
  %527 = vmatprep.mubr.f32.mxu0 0.0
  %528 = vmatmul.mubr.f32.gmra.mxu0 %v338
  %v529 = vpop.f32.mrf.mxu0
  %v530 = vadd.f32 %v226, %v529
  %v531 = vpop.f32.mrf.mxu0
  %532 = vdwg.mxu0
  %v534 = vsel %vm291, %v243, 0
  %v537 = vsel %vm291, %v244, 0
  %v540 = vsel %vm291, %v245, 0
  %v543 = vsel %vm291, %v246, 0
  %v546 = vsel %vm291, %v247, 0
  %v549 = vsel %vm291, %v248, 0
  %v552 = vsel %vm291, %v249, 0
  %v555 = vsel %vm291, %v250, 0
  %v558 = vsel %vm291, %v251, 0
  %v561 = vsel %vm291, %v252, 0
  %v564 = vsel %vm291, %v253, 0
  %v567 = vsel %vm291, %v254, 0
  %v570 = vsel %vm291, %v255, 0
  %v573 = vsel %vm291, %v256, 0
  %v576 = vsel %vm291, %v257, 0
  %v579 = vsel %vm291, %v258, 0
  %v582 = vsel %vm291, %v99, 0
  %v585 = vsel %vm291, %v100, 0
  %v588 = vsel %vm291, %v101, 0
  %v591 = vsel %vm291, %v102, 0
  %v594 = vsel %vm291, %v103, 0
  %v597 = vsel %vm291, %v104, 0
  %v600 = vsel %vm291, %v105, 0
  %v603 = vsel %vm291, %v106, 0
  %v606 = vsel %vm291, %v107, 0
  %v609 = vsel %vm291, %v108, 0
  %v612 = vsel %vm291, %v109, 0
  %v615 = vsel %vm291, %v110, 0
  %v618 = vsel %vm291, %v111, 0
  %v621 = vsel %vm291, %v112, 0
  %v624 = vsel %vm291, %v113, 0
  %v627 = vsel %vm291, %v114, 0
  %629 = vmatprep.subr.mxu0 0.0
  %630 = vmatpush1.xpose.msra.mxu0 %v627
  %631 = vmatprep.subr.mxu0 0.0
  %632 = vmatpush1.xpose.msra.mxu0 %v624
  %633 = vmatprep.subr.mxu0 0.0
  %634 = vmatpush1.xpose.msra.mxu0 %v621
  %635 = vmatprep.subr.mxu0 0.0
  %636 = vmatpush1.xpose.msra.mxu0 %v618
  %637 = vmatprep.subr.mxu0 0.0
  %638 = vmatpush1.xpose.msra.mxu0 %v615
  %639 = vmatprep.subr.mxu0 0.0
  %640 = vmatpush1.xpose.msra.mxu0 %v612
  %641 = vmatprep.subr.mxu0 0.0
  %642 = vmatpush1.xpose.msra.mxu0 %v609
  %643 = vmatprep.subr.mxu0 0.0
  %644 = vmatpush1.xpose.msra.mxu0 %v606
  %645 = vmatprep.subr.mxu0 0.0
  %646 = vmatpush1.xpose.msra.mxu0 %v603
  %647 = vmatprep.subr.mxu0 0.0
  %648 = vmatpush1.xpose.msra.mxu0 %v600
  %649 = vmatprep.subr.mxu0 0.0
  %650 = vmatpush1.xpose.msra.mxu0 %v597
  %651 = vmatprep.subr.mxu0 0.0
  %652 = vmatpush1.xpose.msra.mxu0 %v594
  %653 = vmatprep.subr.mxu0 0.0
  %654 = vmatpush1.xpose.msra.mxu0 %v591
  %655 = vmatprep.subr.mxu0 0.0
  %656 = vmatpush1.xpose.msra.mxu0 %v588
  %657 = vmatprep.subr.mxu0 0.0
  %658 = vmatpush1.xpose.msra.mxu0 %v585
  %659 = vmatprep.subr.mxu0 0.0
  %660 = vmatpush1.xpose.msra.mxu0 %v582
  %661 = vmatprep.subr.mxu0 0.0
  %662 = vmatpush2.xpose.msra.mxu0 0.0
  %663 = vmatprep.subr.mxu0 0.0
  %664 = vmatpush2.xpose.msra.mxu0 0.0
  %665 = vmatprep.subr.mxu0 0.0
  %666 = vmatpush2.xpose.msra.mxu0 0.0
  %667 = vmatprep.subr.mxu0 0.0
  %668 = vmatpush2.xpose.msra.mxu0 0.0
  %669 = vmatprep.subr.mxu0 0.0
  %670 = vmatpush2.xpose.msra.mxu0 0.0
  %671 = vmatprep.subr.mxu0 0.0
  %672 = vmatpush2.xpose.msra.mxu0 0.0
  %673 = vmatprep.subr.mxu0 0.0
  %674 = vmatpush2.xpose.msra.mxu0 0.0
  %675 = vmatprep.subr.mxu0 0.0
  %676 = vmatpush2.xpose.msra.mxu0 0.0
  %677 = vmatprep.subr.mxu0 0.0
  %678 = vmatpush2.xpose.msra.mxu0 0.0
  %679 = vmatprep.subr.mxu0 0.0
  %680 = vmatpush2.xpose.msra.mxu0 0.0
  %681 = vmatprep.subr.mxu0 0.0
  %682 = vmatpush2.xpose.msra.mxu0 0.0
  %683 = vmatprep.subr.mxu0 0.0
  %684 = vmatpush2.xpose.msra.mxu0 0.0
  %685 = vmatprep.subr.mxu0 0.0
  %686 = vmatpush2.xpose.msra.mxu0 0.0
  %687 = vmatprep.subr.mxu0 0.0
  %688 = vmatpush2.xpose.msra.mxu0 0.0
  %689 = vmatprep.subr.mxu0 0.0
  %690 = vmatpush2.xpose.msra.mxu0 0.0
  %691 = vmatprep.subr.mxu0 0.0
  %692 = vmatpush2.xpose.msra.mxu0 0.0
  %693 = vmatprep.mubr.f32.mxu0 0.0
  %694 = vmatmul.mubr.f32.gmra.mxu0 %v534
  %v695 = vpop.f32.mrf.mxu0
  %v696 = vadd.f32 %v211, %v695
  %v697 = vpop.f32.mrf.mxu0
  %698 = vmatprep.mubr.f32.mxu0 0.0
  %699 = vmatmul.mubr.f32.gmra.mxu0 %v537
  %v700 = vpop.f32.mrf.mxu0
  %v701 = vadd.f32 %v212, %v700
  %v702 = vpop.f32.mrf.mxu0
  %703 = vmatprep.mubr.f32.mxu0 0.0
  %704 = vmatmul.mubr.f32.gmra.mxu0 %v540
  %v705 = vpop.f32.mrf.mxu0
  %v706 = vadd.f32 %v213, %v705
  %v707 = vpop.f32.mrf.mxu0
  %708 = vmatprep.mubr.f32.mxu0 0.0
  %709 = vmatmul.mubr.f32.gmra.mxu0 %v543
  %v710 = vpop.f32.mrf.mxu0
  %v711 = vadd.f32 %v214, %v710
  %v712 = vpop.f32.mrf.mxu0
  %713 = vmatprep.mubr.f32.mxu0 0.0
  %714 = vmatmul.mubr.f32.gmra.mxu0 %v546
  %v715 = vpop.f32.mrf.mxu0
  %v716 = vadd.f32 %v215, %v715
  %v717 = vpop.f32.mrf.mxu0
  %718 = vmatprep.mubr.f32.mxu0 0.0
  %719 = vmatmul.mubr.f32.gmra.mxu0 %v549
  %v720 = vpop.f32.mrf.mxu0
  %v721 = vadd.f32 %v216, %v720
  %v722 = vpop.f32.mrf.mxu0
  %723 = vmatprep.mubr.f32.mxu0 0.0
  %724 = vmatmul.mubr.f32.gmra.mxu0 %v552
  %v725 = vpop.f32.mrf.mxu0
  %v726 = vadd.f32 %v217, %v725
  %v727 = vpop.f32.mrf.mxu0
  %728 = vmatprep.mubr.f32.mxu0 0.0
  %729 = vmatmul.mubr.f32.gmra.mxu0 %v555
  %v730 = vpop.f32.mrf.mxu0
  %v731 = vadd.f32 %v218, %v730
  %v732 = vpop.f32.mrf.mxu0
  %733 = vmatprep.mubr.f32.mxu0 0.0
  %734 = vmatmul.mubr.f32.gmra.mxu0 %v558
  %v735 = vpop.f32.mrf.mxu0
  %v736 = vadd.f32 %v219, %v735
  %v737 = vpop.f32.mrf.mxu0
  %738 = vmatprep.mubr.f32.mxu0 0.0
  %739 = vmatmul.mubr.f32.gmra.mxu0 %v561
  %v740 = vpop.f32.mrf.mxu0
  %v741 = vadd.f32 %v220, %v740
  %v742 = vpop.f32.mrf.mxu0
  %743 = vmatprep.mubr.f32.mxu0 0.0
  %744 = vmatmul.mubr.f32.gmra.mxu0 %v564
  %v745 = vpop.f32.mrf.mxu0
  %v746 = vadd.f32 %v221, %v745
  %v747 = vpop.f32.mrf.mxu0
  %748 = vmatprep.mubr.f32.mxu0 0.0
  %749 = vmatmul.mubr.f32.gmra.mxu0 %v567
  %v750 = vpop.f32.mrf.mxu0
  %v751 = vadd.f32 %v222, %v750
  %v752 = vpop.f32.mrf.mxu0
  %753 = vmatprep.mubr.f32.mxu0 0.0
  %754 = vmatmul.mubr.f32.gmra.mxu0 %v570
  %v755 = vpop.f32.mrf.mxu0
  %v756 = vadd.f32 %v223, %v755
  %v757 = vpop.f32.mrf.mxu0
  %758 = vmatprep.mubr.f32.mxu0 0.0
  %759 = vmatmul.mubr.f32.gmra.mxu0 %v573
  %v760 = vpop.f32.mrf.mxu0
  %v761 = vadd.f32 %v224, %v760
  %v762 = vpop.f32.mrf.mxu0
  %763 = vmatprep.mubr.f32.mxu0 0.0
  %764 = vmatmul.mubr.f32.gmra.mxu0 %v576
  %v765 = vpop.f32.mrf.mxu0
  %v766 = vadd.f32 %v225, %v765
  %v767 = vpop.f32.mrf.mxu0
  %768 = vmatprep.mubr.f32.mxu0 0.0
  %769 = vmatmul.mubr.f32.gmra.mxu0 %v579
  %v770 = vpop.f32.mrf.mxu0
  %v771 = vadd.f32 %v226, %v770
  %v772 = vpop.f32.mrf.mxu0
  %773 = vdwg.mxu0
  %v775 = vsel %vm291, %v259, 0
  %v778 = vsel %vm291, %v260, 0
  %v781 = vsel %vm291, %v261, 0
  %v784 = vsel %vm291, %v262, 0
  %v787 = vsel %vm291, %v263, 0
  %v790 = vsel %vm291, %v264, 0
  %v793 = vsel %vm291, %v265, 0
  %v796 = vsel %vm291, %v266, 0
  %v799 = vsel %vm291, %v267, 0
  %v802 = vsel %vm291, %v268, 0
  %v805 = vsel %vm291, %v269, 0
  %v808 = vsel %vm291, %v270, 0
  %v811 = vsel %vm291, %v271, 0
  %v814 = vsel %vm291, %v272, 0
  %v817 = vsel %vm291, %v273, 0
  %v820 = vsel %vm291, %v274, 0
  %v823 = vsel %vm291, %v115, 0
  %v826 = vsel %vm291, %v116, 0
  %v829 = vsel %vm291, %v117, 0
  %v832 = vsel %vm291, %v118, 0
  %v835 = vsel %vm291, %v119, 0
  %v838 = vsel %vm291, %v120, 0
  %v841 = vsel %vm291, %v121, 0
  %v844 = vsel %vm291, %v122, 0
  %v847 = vsel %vm291, %v123, 0
  %v850 = vsel %vm291, %v124, 0
  %v853 = vsel %vm291, %v125, 0
  %v856 = vsel %vm291, %v126, 0
  %v859 = vsel %vm291, %v127, 0
  %v862 = vsel %vm291, %v128, 0
  %v865 = vsel %vm291, %v129, 0
  %v868 = vsel %vm291, %v130, 0
  %870 = vmatprep.subr.mxu0 0.0
  %871 = vmatpush1.xpose.msra.mxu0 %v868
  %872 = vmatprep.subr.mxu0 0.0
  %873 = vmatpush1.xpose.msra.mxu0 %v865
  %874 = vmatprep.subr.mxu0 0.0
  %875 = vmatpush1.xpose.msra.mxu0 %v862
  %876 = vmatprep.subr.mxu0 0.0
  %877 = vmatpush1.xpose.msra.mxu0 %v859
  %878 = vmatprep.subr.mxu0 0.0
  %879 = vmatpush1.xpose.msra.mxu0 %v856
  %880 = vmatprep.subr.mxu0 0.0
  %881 = vmatpush1.xpose.msra.mxu0 %v853
  %882 = vmatprep.subr.mxu0 0.0
  %883 = vmatpush1.xpose.msra.mxu0 %v850
  %884 = vmatprep.subr.mxu0 0.0
  %885 = vmatpush1.xpose.msra.mxu0 %v847
  %886 = vmatprep.subr.mxu0 0.0
  %887 = vmatpush1.xpose.msra.mxu0 %v844
  %888 = vmatprep.subr.mxu0 0.0
  %889 = vmatpush1.xpose.msra.mxu0 %v841
  %890 = vmatprep.subr.mxu0 0.0
  %891 = vmatpush1.xpose.msra.mxu0 %v838
  %892 = vmatprep.subr.mxu0 0.0
  %893 = vmatpush1.xpose.msra.mxu0 %v835
  %894 = vmatprep.subr.mxu0 0.0
  %895 = vmatpush1.xpose.msra.mxu0 %v832
  %896 = vmatprep.subr.mxu0 0.0
  %897 = vmatpush1.xpose.msra.mxu0 %v829
  %898 = vmatprep.subr.mxu0 0.0
  %899 = vmatpush1.xpose.msra.mxu0 %v826
  %900 = vmatprep.subr.mxu0 0.0
  %901 = vmatpush1.xpose.msra.mxu0 %v823
  %902 = vmatprep.subr.mxu0 0.0
  %903 = vmatpush2.xpose.msra.mxu0 0.0
  %904 = vmatprep.subr.mxu0 0.0
  %905 = vmatpush2.xpose.msra.mxu0 0.0
  %906 = vmatprep.subr.mxu0 0.0
  %907 = vmatpush2.xpose.msra.mxu0 0.0
  %908 = vmatprep.subr.mxu0 0.0
  %909 = vmatpush2.xpose.msra.mxu0 0.0
  %910 = vmatprep.subr.mxu0 0.0
  %911 = vmatpush2.xpose.msra.mxu0 0.0
  %912 = vmatprep.subr.mxu0 0.0
  %913 = vmatpush2.xpose.msra.mxu0 0.0
  %914 = vmatprep.subr.mxu0 0.0
  %915 = vmatpush2.xpose.msra.mxu0 0.0
  %916 = vmatprep.subr.mxu0 0.0
  %917 = vmatpush2.xpose.msra.mxu0 0.0
  %918 = vmatprep.subr.mxu0 0.0
  %919 = vmatpush2.xpose.msra.mxu0 0.0
  %920 = vmatprep.subr.mxu0 0.0
  %921 = vmatpush2.xpose.msra.mxu0 0.0
  %922 = vmatprep.subr.mxu0 0.0
  %923 = vmatpush2.xpose.msra.mxu0 0.0
  %924 = vmatprep.subr.mxu0 0.0
  %925 = vmatpush2.xpose.msra.mxu0 0.0
  %926 = vmatprep.subr.mxu0 0.0
  %927 = vmatpush2.xpose.msra.mxu0 0.0
  %928 = vmatprep.subr.mxu0 0.0
  %929 = vmatpush2.xpose.msra.mxu0 0.0
  %930 = vmatprep.subr.mxu0 0.0
  %931 = vmatpush2.xpose.msra.mxu0 0.0
  %932 = vmatprep.subr.mxu0 0.0
  %933 = vmatpush2.xpose.msra.mxu0 0.0
  %934 = vmatprep.mubr.f32.mxu0 0.0
  %935 = vmatmul.mubr.f32.gmra.mxu0 %v775
  %v936 = vpop.f32.mrf.mxu0
  %v937 = vadd.f32 %v211, %v936
  %v938 = vpop.f32.mrf.mxu0
  %939 = vmatprep.mubr.f32.mxu0 0.0
  %940 = vmatmul.mubr.f32.gmra.mxu0 %v778
  %v941 = vpop.f32.mrf.mxu0
  %v942 = vadd.f32 %v212, %v941
  %v943 = vpop.f32.mrf.mxu0
  %944 = vmatprep.mubr.f32.mxu0 0.0
  %945 = vmatmul.mubr.f32.gmra.mxu0 %v781
  %v946 = vpop.f32.mrf.mxu0
  %v947 = vadd.f32 %v213, %v946
  %v948 = vpop.f32.mrf.mxu0
  %949 = vmatprep.mubr.f32.mxu0 0.0
  %950 = vmatmul.mubr.f32.gmra.mxu0 %v784
  %v951 = vpop.f32.mrf.mxu0
  %v952 = vadd.f32 %v214, %v951
  %v953 = vpop.f32.mrf.mxu0
  %954 = vmatprep.mubr.f32.mxu0 0.0
  %955 = vmatmul.mubr.f32.gmra.mxu0 %v787
  %v956 = vpop.f32.mrf.mxu0
  %v957 = vadd.f32 %v215, %v956
  %v958 = vpop.f32.mrf.mxu0
  %959 = vmatprep.mubr.f32.mxu0 0.0
  %960 = vmatmul.mubr.f32.gmra.mxu0 %v790
  %v961 = vpop.f32.mrf.mxu0
  %v962 = vadd.f32 %v216, %v961
  %v963 = vpop.f32.mrf.mxu0
  %964 = vmatprep.mubr.f32.mxu0 0.0
  %965 = vmatmul.mubr.f32.gmra.mxu0 %v793
  %v966 = vpop.f32.mrf.mxu0
  %v967 = vadd.f32 %v217, %v966
  %v968 = vpop.f32.mrf.mxu0
  %969 = vmatprep.mubr.f32.mxu0 0.0
  %970 = vmatmul.mubr.f32.gmra.mxu0 %v796
  %v971 = vpop.f32.mrf.mxu0
  %v972 = vadd.f32 %v218, %v971
  %v973 = vpop.f32.mrf.mxu0
  %974 = vmatprep.mubr.f32.mxu0 0.0
  %975 = vmatmul.mubr.f32.gmra.mxu0 %v799
  %v976 = vpop.f32.mrf.mxu0
  %v977 = vadd.f32 %v219, %v976
  %v978 = vpop.f32.mrf.mxu0
  %979 = vmatprep.mubr.f32.mxu0 0.0
  %980 = vmatmul.mubr.f32.gmra.mxu0 %v802
  %v981 = vpop.f32.mrf.mxu0
  %v982 = vadd.f32 %v220, %v981
  %v983 = vpop.f32.mrf.mxu0
  %984 = vmatprep.mubr.f32.mxu0 0.0
  %985 = vmatmul.mubr.f32.gmra.mxu0 %v805
  %v986 = vpop.f32.mrf.mxu0
  %v987 = vadd.f32 %v221, %v986
  %v988 = vpop.f32.mrf.mxu0
  %989 = vmatprep.mubr.f32.mxu0 0.0
  %990 = vmatmul.mubr.f32.gmra.mxu0 %v808
  %v991 = vpop.f32.mrf.mxu0
  %v992 = vadd.f32 %v222, %v991
  %v993 = vpop.f32.mrf.mxu0
  %994 = vmatprep.mubr.f32.mxu0 0.0
  %995 = vmatmul.mubr.f32.gmra.mxu0 %v811
  %v996 = vpop.f32.mrf.mxu0
  %v997 = vadd.f32 %v223, %v996
  %v998 = vpop.f32.mrf.mxu0
  %999 = vmatprep.mubr.f32.mxu0 0.0
  %1000 = vmatmul.mubr.f32.gmra.mxu0 %v814
  %v1001 = vpop.f32.mrf.mxu0
  %v1002 = vadd.f32 %v224, %v1001
  %v1003 = vpop.f32.mrf.mxu0
  %1004 = vmatprep.mubr.f32.mxu0 0.0
  %1005 = vmatmul.mubr.f32.gmra.mxu0 %v817
  %v1006 = vpop.f32.mrf.mxu0
  %v1007 = vadd.f32 %v225, %v1006
  %v1008 = vpop.f32.mrf.mxu0
  %1009 = vmatprep.mubr.f32.mxu0 0.0
  %1010 = vmatmul.mubr.f32.gmra.mxu0 %v820
  %v1011 = vpop.f32.mrf.mxu0
  %v1012 = vadd.f32 %v226, %v1011
  %v1013 = vpop.f32.mrf.mxu0
  %1014 = vdwg.mxu0
  %v1016 = vsel %vm291, %v275, 0
  %v1019 = vsel %vm291, %v276, 0
  %v1022 = vsel %vm291, %v277, 0
  %v1025 = vsel %vm291, %v278, 0
  %v1028 = vsel %vm291, %v279, 0
  %v1031 = vsel %vm291, %v280, 0
  %v1034 = vsel %vm291, %v281, 0
  %v1037 = vsel %vm291, %v282, 0
  %v1040 = vsel %vm291, %v283, 0
  %v1043 = vsel %vm291, %v284, 0
  %v1046 = vsel %vm291, %v285, 0
  %v1049 = vsel %vm291, %v286, 0
  %v1052 = vsel %vm291, %v287, 0
  %v1055 = vsel %vm291, %v288, 0
  %v1058 = vsel %vm291, %v289, 0
  %v1061 = vsel %vm291, %v290, 0
  %v1064 = vsel %vm291, %v131, 0
  %v1067 = vsel %vm291, %v132, 0
  %v1070 = vsel %vm291, %v133, 0
  %v1073 = vsel %vm291, %v134, 0
  %v1076 = vsel %vm291, %v135, 0
  %v1079 = vsel %vm291, %v136, 0
  %v1082 = vsel %vm291, %v137, 0
  %v1085 = vsel %vm291, %v138, 0
  %v1088 = vsel %vm291, %v139, 0
  %v1091 = vsel %vm291, %v140, 0
  %v1094 = vsel %vm291, %v141, 0
  %v1097 = vsel %vm291, %v142, 0
  %v1100 = vsel %vm291, %v143, 0
  %v1103 = vsel %vm291, %v144, 0
  %v1106 = vsel %vm291, %v145, 0
  %v1109 = vsel %vm291, %v146, 0
  %1111 = vmatprep.subr.mxu0 0.0
  %1112 = vmatpush1.xpose.msra.mxu0 %v1109
  %1113 = vmatprep.subr.mxu0 0.0
  %1114 = vmatpush1.xpose.msra.mxu0 %v1106
  %1115 = vmatprep.subr.mxu0 0.0
  %1116 = vmatpush1.xpose.msra.mxu0 %v1103
  %1117 = vmatprep.subr.mxu0 0.0
  %1118 = vmatpush1.xpose.msra.mxu0 %v1100
  %1119 = vmatprep.subr.mxu0 0.0
  %1120 = vmatpush1.xpose.msra.mxu0 %v1097
  %1121 = vmatprep.subr.mxu0 0.0
  %1122 = vmatpush1.xpose.msra.mxu0 %v1094
  %1123 = vmatprep.subr.mxu0 0.0
  %1124 = vmatpush1.xpose.msra.mxu0 %v1091
  %1125 = vmatprep.subr.mxu0 0.0
  %1126 = vmatpush1.xpose.msra.mxu0 %v1088
  %1127 = vmatprep.subr.mxu0 0.0
  %1128 = vmatpush1.xpose.msra.mxu0 %v1085
  %1129 = vmatprep.subr.mxu0 0.0
  %1130 = vmatpush1.xpose.msra.mxu0 %v1082
  %1131 = vmatprep.subr.mxu0 0.0
  %1132 = vmatpush1.xpose.msra.mxu0 %v1079
  %1133 = vmatprep.subr.mxu0 0.0
  %1134 = vmatpush1.xpose.msra.mxu0 %v1076
  %1135 = vmatprep.subr.mxu0 0.0
  %1136 = vmatpush1.xpose.msra.mxu0 %v1073
  %1137 = vmatprep.subr.mxu0 0.0
  %1138 = vmatpush1.xpose.msra.mxu0 %v1070
  %1139 = vmatprep.subr.mxu0 0.0
  %1140 = vmatpush1.xpose.msra.mxu0 %v1067
  %1141 = vmatprep.subr.mxu0 0.0
  %1142 = vmatpush1.xpose.msra.mxu0 %v1064
  %1143 = vmatprep.subr.mxu0 0.0
  %1144 = vmatpush2.xpose.msra.mxu0 0.0
  %1145 = vmatprep.subr.mxu0 0.0
  %1146 = vmatpush2.xpose.msra.mxu0 0.0
  %1147 = vmatprep.subr.mxu0 0.0
  %1148 = vmatpush2.xpose.msra.mxu0 0.0
  %1149 = vmatprep.subr.mxu0 0.0
  %1150 = vmatpush2.xpose.msra.mxu0 0.0
  %1151 = vmatprep.subr.mxu0 0.0
  %1152 = vmatpush2.xpose.msra.mxu0 0.0
  %1153 = vmatprep.subr.mxu0 0.0
  %1154 = vmatpush2.xpose.msra.mxu0 0.0
  %1155 = vmatprep.subr.mxu0 0.0
  %1156 = vmatpush2.xpose.msra.mxu0 0.0
  %1157 = vmatprep.subr.mxu0 0.0
  %1158 = vmatpush2.xpose.msra.mxu0 0.0
  %1159 = vmatprep.subr.mxu0 0.0
  %1160 = vmatpush2.xpose.msra.mxu0 0.0
  %1161 = vmatprep.subr.mxu0 0.0
  %1162 = vmatpush2.xpose.msra.mxu0 0.0
  %1163 = vmatprep.subr.mxu0 0.0
  %1164 = vmatpush2.xpose.msra.mxu0 0.0
  %1165 = vmatprep.subr.mxu0 0.0
  %1166 = vmatpush2.xpose.msra.mxu0 0.0
  %1167 = vmatprep.subr.mxu0 0.0
  %1168 = vmatpush2.xpose.msra.mxu0 0.0
  %1169 = vmatprep.subr.mxu0 0.0
  %1170 = vmatpush2.xpose.msra.mxu0 0.0
  %1171 = vmatprep.subr.mxu0 0.0
  %1172 = vmatpush2.xpose.msra.mxu0 0.0
  %1173 = vmatprep.subr.mxu0 0.0
  %1174 = vmatpush2.xpose.msra.mxu0 0.0
  %1175 = vmatprep.mubr.f32.mxu0 0.0
  %1176 = vmatmul.mubr.f32.gmra.mxu0 %v1016
  %v1177 = vpop.f32.mrf.mxu0
  %v1178 = vadd.f32 %v211, %v1177
  %v1179 = vpop.f32.mrf.mxu0
  %1180 = vmatprep.mubr.f32.mxu0 0.0
  %1181 = vmatmul.mubr.f32.gmra.mxu0 %v1019
  %v1182 = vpop.f32.mrf.mxu0
  %v1183 = vadd.f32 %v212, %v1182
  %v1184 = vpop.f32.mrf.mxu0
  %1185 = vmatprep.mubr.f32.mxu0 0.0
  %1186 = vmatmul.mubr.f32.gmra.mxu0 %v1022
  %v1187 = vpop.f32.mrf.mxu0
  %v1188 = vadd.f32 %v213, %v1187
  %v1189 = vpop.f32.mrf.mxu0
  %1190 = vmatprep.mubr.f32.mxu0 0.0
  %1191 = vmatmul.mubr.f32.gmra.mxu0 %v1025
  %v1192 = vpop.f32.mrf.mxu0
  %v1193 = vadd.f32 %v214, %v1192
  %v1194 = vpop.f32.mrf.mxu0
  %1195 = vmatprep.mubr.f32.mxu0 0.0
  %1196 = vmatmul.mubr.f32.gmra.mxu0 %v1028
  %v1197 = vpop.f32.mrf.mxu0
  %v1198 = vadd.f32 %v215, %v1197
  %v1199 = vpop.f32.mrf.mxu0
  %1200 = vmatprep.mubr.f32.mxu0 0.0
  %1201 = vmatmul.mubr.f32.gmra.mxu0 %v1031
  %v1202 = vpop.f32.mrf.mxu0
  %v1203 = vadd.f32 %v216, %v1202
  %v1204 = vpop.f32.mrf.mxu0
  %1205 = vmatprep.mubr.f32.mxu0 0.0
  %1206 = vmatmul.mubr.f32.gmra.mxu0 %v1034
  %v1207 = vpop.f32.mrf.mxu0
  %v1208 = vadd.f32 %v217, %v1207
  %v1209 = vpop.f32.mrf.mxu0
  %1210 = vmatprep.mubr.f32.mxu0 0.0
  %1211 = vmatmul.mubr.f32.gmra.mxu0 %v1037
  %v1212 = vpop.f32.mrf.mxu0
  %v1213 = vadd.f32 %v218, %v1212
  %v1214 = vpop.f32.mrf.mxu0
  %1215 = vmatprep.mubr.f32.mxu0 0.0
  %1216 = vmatmul.mubr.f32.gmra.mxu0 %v1040
  %v1217 = vpop.f32.mrf.mxu0
  %v1218 = vadd.f32 %v219, %v1217
  %v1219 = vpop.f32.mrf.mxu0
  %1220 = vmatprep.mubr.f32.mxu0 0.0
  %1221 = vmatmul.mubr.f32.gmra.mxu0 %v1043
  %v1222 = vpop.f32.mrf.mxu0
  %v1223 = vadd.f32 %v220, %v1222
  %v1224 = vpop.f32.mrf.mxu0
  %1225 = vmatprep.mubr.f32.mxu0 0.0
  %1226 = vmatmul.mubr.f32.gmra.mxu0 %v1046
  %v1227 = vpop.f32.mrf.mxu0
  %v1228 = vadd.f32 %v221, %v1227
  %v1229 = vpop.f32.mrf.mxu0
  %1230 = vmatprep.mubr.f32.mxu0 0.0
  %1231 = vmatmul.mubr.f32.gmra.mxu0 %v1049
  %v1232 = vpop.f32.mrf.mxu0
  %v1233 = vadd.f32 %v222, %v1232
  %v1234 = vpop.f32.mrf.mxu0
  %1235 = vmatprep.mubr.f32.mxu0 0.0
  %1236 = vmatmul.mubr.f32.gmra.mxu0 %v1052
  %v1237 = vpop.f32.mrf.mxu0
  %v1238 = vadd.f32 %v223, %v1237
  %v1239 = vpop.f32.mrf.mxu0
  %1240 = vmatprep.mubr.f32.mxu0 0.0
  %1241 = vmatmul.mubr.f32.gmra.mxu0 %v1055
  %v1242 = vpop.f32.mrf.mxu0
  %v1243 = vadd.f32 %v224, %v1242
  %v1244 = vpop.f32.mrf.mxu0
  %1245 = vmatprep.mubr.f32.mxu0 0.0
  %1246 = vmatmul.mubr.f32.gmra.mxu0 %v1058
  %v1247 = vpop.f32.mrf.mxu0
  %v1248 = vadd.f32 %v225, %v1247
  %v1249 = vpop.f32.mrf.mxu0
  %1250 = vmatprep.mubr.f32.mxu0 0.0
  %1251 = vmatmul.mubr.f32.gmra.mxu0 %v1061
  %v1252 = vpop.f32.mrf.mxu0
  %v1253 = vadd.f32 %v226, %v1252
  %v1254 = vpop.f32.mrf.mxu0
  %1255 = vdwg.mxu0
  %1256 = vmax.xlane.f32.xlu0 %v455
  %v1257 = vpop.xlane.xlu0 %1256
  %1258 = vmax.xlane.f32.xlu0 %v460
  %v1259 = vpop.xlane.xlu0 %1258
  %1260 = vmax.xlane.f32.xlu0 %v465
  %v1261 = vpop.xlane.xlu0 %1260
  %1262 = vmax.xlane.f32.xlu0 %v470
  %v1263 = vpop.xlane.xlu0 %1262
  %1264 = vmax.xlane.f32.xlu0 %v475
  %v1265 = vpop.xlane.xlu0 %1264
  %1266 = vmax.xlane.f32.xlu0 %v480
  %v1267 = vpop.xlane.xlu0 %1266
  %1268 = vmax.xlane.f32.xlu0 %v485
  %v1269 = vpop.xlane.xlu0 %1268
  %1270 = vmax.xlane.f32.xlu0 %v490
  %v1271 = vpop.xlane.xlu0 %1270
  %1272 = vmax.xlane.f32.xlu0 %v495
  %v1273 = vpop.xlane.xlu0 %1272
  %1274 = vmax.xlane.f32.xlu0 %v500
  %v1275 = vpop.xlane.xlu0 %1274
  %1276 = vmax.xlane.f32.xlu0 %v505
  %v1277 = vpop.xlane.xlu0 %1276
  %1278 = vmax.xlane.f32.xlu0 %v510
  %v1279 = vpop.xlane.xlu0 %1278
  %1280 = vmax.xlane.f32.xlu0 %v515
  %v1281 = vpop.xlane.xlu0 %1280
  %1282 = vmax.xlane.f32.xlu0 %v520
  %v1283 = vpop.xlane.xlu0 %1282
  %1284 = vmax.xlane.f32.xlu0 %v525
  %v1285 = vpop.xlane.xlu0 %1284
  %1286 = vmax.xlane.f32.xlu0 %v530
  %v1287 = vpop.xlane.xlu0 %1286
  %1288 = vmax.xlane.f32.xlu0 %v696
  %v1289 = vpop.xlane.xlu0 %1288
  %1290 = vmax.xlane.f32.xlu0 %v701
  %v1291 = vpop.xlane.xlu0 %1290
  %1292 = vmax.xlane.f32.xlu0 %v706
  %v1293 = vpop.xlane.xlu0 %1292
  %1294 = vmax.xlane.f32.xlu0 %v711
  %v1295 = vpop.xlane.xlu0 %1294
  %1296 = vmax.xlane.f32.xlu0 %v716
  %v1297 = vpop.xlane.xlu0 %1296
  %1298 = vmax.xlane.f32.xlu0 %v721
  %v1299 = vpop.xlane.xlu0 %1298
  %1300 = vmax.xlane.f32.xlu0 %v726
  %v1301 = vpop.xlane.xlu0 %1300
  %1302 = vmax.xlane.f32.xlu0 %v731
  %v1303 = vpop.xlane.xlu0 %1302
  %1304 = vmax.xlane.f32.xlu0 %v736
  %v1305 = vpop.xlane.xlu0 %1304
  %1306 = vmax.xlane.f32.xlu0 %v741
  %v1307 = vpop.xlane.xlu0 %1306
  %1308 = vmax.xlane.f32.xlu0 %v746
  %v1309 = vpop.xlane.xlu0 %1308
  %1310 = vmax.xlane.f32.xlu0 %v751
  %v1311 = vpop.xlane.xlu0 %1310
  %1312 = vmax.xlane.f32.xlu0 %v756
  %v1313 = vpop.xlane.xlu0 %1312
  %1314 = vmax.xlane.f32.xlu0 %v761
  %v1315 = vpop.xlane.xlu0 %1314
  %1316 = vmax.xlane.f32.xlu0 %v766
  %v1317 = vpop.xlane.xlu0 %1316
  %1318 = vmax.xlane.f32.xlu0 %v771
  %v1319 = vpop.xlane.xlu0 %1318
  %1320 = vmax.xlane.f32.xlu0 %v937
  %v1321 = vpop.xlane.xlu0 %1320
  %1322 = vmax.xlane.f32.xlu0 %v942
  %v1323 = vpop.xlane.xlu0 %1322
  %1324 = vmax.xlane.f32.xlu0 %v947
  %v1325 = vpop.xlane.xlu0 %1324
  %1326 = vmax.xlane.f32.xlu0 %v952
  %v1327 = vpop.xlane.xlu0 %1326
  %1328 = vmax.xlane.f32.xlu0 %v957
  %v1329 = vpop.xlane.xlu0 %1328
  %1330 = vmax.xlane.f32.xlu0 %v962
  %v1331 = vpop.xlane.xlu0 %1330
  %1332 = vmax.xlane.f32.xlu0 %v967
  %v1333 = vpop.xlane.xlu0 %1332
  %1334 = vmax.xlane.f32.xlu0 %v972
  %v1335 = vpop.xlane.xlu0 %1334
  %1336 = vmax.xlane.f32.xlu0 %v977
  %v1337 = vpop.xlane.xlu0 %1336
  %1338 = vmax.xlane.f32.xlu0 %v982
  %v1339 = vpop.xlane.xlu0 %1338
  %1340 = vmax.xlane.f32.xlu0 %v987
  %v1341 = vpop.xlane.xlu0 %1340
  %1342 = vmax.xlane.f32.xlu0 %v992
  %v1343 = vpop.xlane.xlu0 %1342
  %1344 = vmax.xlane.f32.xlu0 %v997
  %v1345 = vpop.xlane.xlu0 %1344
  %1346 = vmax.xlane.f32.xlu0 %v1002
  %v1347 = vpop.xlane.xlu0 %1346
  %1348 = vmax.xlane.f32.xlu0 %v1007
  %v1349 = vpop.xlane.xlu0 %1348
  %1350 = vmax.xlane.f32.xlu0 %v1012
  %v1351 = vpop.xlane.xlu0 %1350
  %1352 = vmax.xlane.f32.xlu0 %v1178
  %v1353 = vpop.xlane.xlu0 %1352
  %1354 = vmax.xlane.f32.xlu0 %v1183
  %v1355 = vpop.xlane.xlu0 %1354
  %1356 = vmax.xlane.f32.xlu0 %v1188
  %v1357 = vpop.xlane.xlu0 %1356
  %1358 = vmax.xlane.f32.xlu0 %v1193
  %v1359 = vpop.xlane.xlu0 %1358
  %1360 = vmax.xlane.f32.xlu0 %v1198
  %v1361 = vpop.xlane.xlu0 %1360
  %1362 = vmax.xlane.f32.xlu0 %v1203
  %v1363 = vpop.xlane.xlu0 %1362
  %1364 = vmax.xlane.f32.xlu0 %v1208
  %v1365 = vpop.xlane.xlu0 %1364
  %1366 = vmax.xlane.f32.xlu0 %v1213
  %v1367 = vpop.xlane.xlu0 %1366
  %1368 = vmax.xlane.f32.xlu0 %v1218
  %v1369 = vpop.xlane.xlu0 %1368
  %1370 = vmax.xlane.f32.xlu0 %v1223
  %v1371 = vpop.xlane.xlu0 %1370
  %1372 = vmax.xlane.f32.xlu0 %v1228
  %v1373 = vpop.xlane.xlu0 %1372
  %1374 = vmax.xlane.f32.xlu0 %v1233
  %v1375 = vpop.xlane.xlu0 %1374
  %1376 = vmax.xlane.f32.xlu0 %v1238
  %v1377 = vpop.xlane.xlu0 %1376
  %1378 = vmax.xlane.f32.xlu0 %v1243
  %v1379 = vpop.xlane.xlu0 %1378
  %1380 = vmax.xlane.f32.xlu0 %v1248
  %v1381 = vpop.xlane.xlu0 %1380
  %1382 = vmax.xlane.f32.xlu0 %v1253
  %v1383 = vpop.xlane.xlu0 %1382
  %v1384 = vsub.f32 %v455, %v1257
  %v1385 = vsub.f32 %v460, %v1259
  %v1386 = vsub.f32 %v465, %v1261
  %v1387 = vsub.f32 %v470, %v1263
  %v1388 = vsub.f32 %v475, %v1265
  %v1389 = vsub.f32 %v480, %v1267
  %v1390 = vsub.f32 %v485, %v1269
  %v1391 = vsub.f32 %v490, %v1271
  %v1392 = vsub.f32 %v495, %v1273
  %v1393 = vsub.f32 %v500, %v1275
  %v1394 = vsub.f32 %v505, %v1277
  %v1395 = vsub.f32 %v510, %v1279
  %v1396 = vsub.f32 %v515, %v1281
  %v1397 = vsub.f32 %v520, %v1283
  %v1398 = vsub.f32 %v525, %v1285
  %v1399 = vsub.f32 %v530, %v1287
  %v1400 = vsub.f32 %v696, %v1289
  %v1401 = vsub.f32 %v701, %v1291
  %v1402 = vsub.f32 %v706, %v1293
  %v1403 = vsub.f32 %v711, %v1295
  %v1404 = vsub.f32 %v716, %v1297
  %v1405 = vsub.f32 %v721, %v1299
  %v1406 = vsub.f32 %v726, %v1301
  %v1407 = vsub.f32 %v731, %v1303
  %v1408 = vsub.f32 %v736, %v1305
  %v1409 = vsub.f32 %v741, %v1307
  %v1410 = vsub.f32 %v746, %v1309
  %v1411 = vsub.f32 %v751, %v1311
  %v1412 = vsub.f32 %v756, %v1313
  %v1413 = vsub.f32 %v761, %v1315
  %v1414 = vsub.f32 %v766, %v1317
  %v1415 = vsub.f32 %v771, %v1319
  %v1416 = vsub.f32 %v937, %v1321
  %v1417 = vsub.f32 %v942, %v1323
  %v1418 = vsub.f32 %v947, %v1325
  %v1419 = vsub.f32 %v952, %v1327
  %v1420 = vsub.f32 %v957, %v1329
  %v1421 = vsub.f32 %v962, %v1331
  %v1422 = vsub.f32 %v967, %v1333
  %v1423 = vsub.f32 %v972, %v1335
  %v1424 = vsub.f32 %v977, %v1337
  %v1425 = vsub.f32 %v982, %v1339
  %v1426 = vsub.f32 %v987, %v1341
  %v1427 = vsub.f32 %v992, %v1343
  %v1428 = vsub.f32 %v997, %v1345
  %v1429 = vsub.f32 %v1002, %v1347
  %v1430 = vsub.f32 %v1007, %v1349
  %v1431 = vsub.f32 %v1012, %v1351
  %v1432 = vsub.f32 %v1178, %v1353
  %v1433 = vsub.f32 %v1183, %v1355
  %v1434 = vsub.f32 %v1188, %v1357
  %v1435 = vsub.f32 %v1193, %v1359
  %v1436 = vsub.f32 %v1198, %v1361
  %v1437 = vsub.f32 %v1203, %v1363
  %v1438 = vsub.f32 %v1208, %v1365
  %v1439 = vsub.f32 %v1213, %v1367
  %v1440 = vsub.f32 %v1218, %v1369
  %v1441 = vsub.f32 %v1223, %v1371
  %v1442 = vsub.f32 %v1228, %v1373
  %v1443 = vsub.f32 %v1233, %v1375
  %v1444 = vsub.f32 %v1238, %v1377
  %v1445 = vsub.f32 %v1243, %v1379
  %v1446 = vsub.f32 %v1248, %v1381
  %v1447 = vsub.f32 %v1253, %v1383
  %v1448 = vmul.f32 %v1384, 1.442695
  %v1449 = vpow.pop %v1448
  %v1450 = vmul.f32 %v1385, 1.442695
  %v1451 = vpow.pop %v1450
  %v1452 = vmul.f32 %v1386, 1.442695
  %v1453 = vpow.pop %v1452
  %v1454 = vmul.f32 %v1387, 1.442695
  %v1455 = vpow.pop %v1454
  %v1456 = vmul.f32 %v1388, 1.442695
  %v1457 = vpow.pop %v1456
  %v1458 = vmul.f32 %v1389, 1.442695
  %v1459 = vpow.pop %v1458
  %v1460 = vmul.f32 %v1390, 1.442695
  %v1461 = vpow.pop %v1460
  %v1462 = vmul.f32 %v1391, 1.442695
  %v1463 = vpow.pop %v1462
  %v1464 = vmul.f32 %v1392, 1.442695
  %v1465 = vpow.pop %v1464
  %v1466 = vmul.f32 %v1393, 1.442695
  %v1467 = vpow.pop %v1466
  %v1468 = vmul.f32 %v1394, 1.442695
  %v1469 = vpow.pop %v1468
  %v1470 = vmul.f32 %v1395, 1.442695
  %v1471 = vpow.pop %v1470
  %v1472 = vmul.f32 %v1396, 1.442695
  %v1473 = vpow.pop %v1472
  %v1474 = vmul.f32 %v1397, 1.442695
  %v1475 = vpow.pop %v1474
  %v1476 = vmul.f32 %v1398, 1.442695
  %v1477 = vpow.pop %v1476
  %v1478 = vmul.f32 %v1399, 1.442695
  %v1479 = vpow.pop %v1478
  %v1480 = vmul.f32 %v1400, 1.442695
  %v1481 = vpow.pop %v1480
  %v1482 = vmul.f32 %v1401, 1.442695
  %v1483 = vpow.pop %v1482
  %v1484 = vmul.f32 %v1402, 1.442695
  %v1485 = vpow.pop %v1484
  %v1486 = vmul.f32 %v1403, 1.442695
  %v1487 = vpow.pop %v1486
  %v1488 = vmul.f32 %v1404, 1.442695
  %v1489 = vpow.pop %v1488
  %v1490 = vmul.f32 %v1405, 1.442695
  %v1491 = vpow.pop %v1490
  %v1492 = vmul.f32 %v1406, 1.442695
  %v1493 = vpow.pop %v1492
  %v1494 = vmul.f32 %v1407, 1.442695
  %v1495 = vpow.pop %v1494
  %v1496 = vmul.f32 %v1408, 1.442695
  %v1497 = vpow.pop %v1496
  %v1498 = vmul.f32 %v1409, 1.442695
  %v1499 = vpow.pop %v1498
  %v1500 = vmul.f32 %v1410, 1.442695
  %v1501 = vpow.pop %v1500
  %v1502 = vmul.f32 %v1411, 1.442695
  %v1503 = vpow.pop %v1502
  %v1504 = vmul.f32 %v1412, 1.442695
  %v1505 = vpow.pop %v1504
  %v1506 = vmul.f32 %v1413, 1.442695
  %v1507 = vpow.pop %v1506
  %v1508 = vmul.f32 %v1414, 1.442695
  %v1509 = vpow.pop %v1508
  %v1510 = vmul.f32 %v1415, 1.442695
  %v1511 = vpow.pop %v1510
  %v1512 = vmul.f32 %v1416, 1.442695
  %v1513 = vpow.pop %v1512
  %v1514 = vmul.f32 %v1417, 1.442695
  %v1515 = vpow.pop %v1514
  %v1516 = vmul.f32 %v1418, 1.442695
  %v1517 = vpow.pop %v1516
  %v1518 = vmul.f32 %v1419, 1.442695
  %v1519 = vpow.pop %v1518
  %v1520 = vmul.f32 %v1420, 1.442695
  %v1521 = vpow.pop %v1520
  %v1522 = vmul.f32 %v1421, 1.442695
  %v1523 = vpow.pop %v1522
  %v1524 = vmul.f32 %v1422, 1.442695
  %v1525 = vpow.pop %v1524
  %v1526 = vmul.f32 %v1423, 1.442695
  %v1527 = vpow.pop %v1526
  %v1528 = vmul.f32 %v1424, 1.442695
  %v1529 = vpow.pop %v1528
  %v1530 = vmul.f32 %v1425, 1.442695
  %v1531 = vpow.pop %v1530
  %v1532 = vmul.f32 %v1426, 1.442695
  %v1533 = vpow.pop %v1532
  %v1534 = vmul.f32 %v1427, 1.442695
  %v1535 = vpow.pop %v1534
  %v1536 = vmul.f32 %v1428, 1.442695
  %v1537 = vpow.pop %v1536
  %v1538 = vmul.f32 %v1429, 1.442695
  %v1539 = vpow.pop %v1538
  %v1540 = vmul.f32 %v1430, 1.442695
  %v1541 = vpow.pop %v1540
  %v1542 = vmul.f32 %v1431, 1.442695
  %v1543 = vpow.pop %v1542
  %v1544 = vmul.f32 %v1432, 1.442695
  %v1545 = vpow.pop %v1544
  %v1546 = vmul.f32 %v1433, 1.442695
  %v1547 = vpow.pop %v1546
  %v1548 = vmul.f32 %v1434, 1.442695
  %v1549 = vpow.pop %v1548
  %v1550 = vmul.f32 %v1435, 1.442695
  %v1551 = vpow.pop %v1550
  %v1552 = vmul.f32 %v1436, 1.442695
  %v1553 = vpow.pop %v1552
  %v1554 = vmul.f32 %v1437, 1.442695
  %v1555 = vpow.pop %v1554
  %v1556 = vmul.f32 %v1438, 1.442695
  %v1557 = vpow.pop %v1556
  %v1558 = vmul.f32 %v1439, 1.442695
  %v1559 = vpow.pop %v1558
  %v1560 = vmul.f32 %v1440, 1.442695
  %v1561 = vpow.pop %v1560
  %v1562 = vmul.f32 %v1441, 1.442695
  %v1563 = vpow.pop %v1562
  %v1564 = vmul.f32 %v1442, 1.442695
  %v1565 = vpow.pop %v1564
  %v1566 = vmul.f32 %v1443, 1.442695
  %v1567 = vpow.pop %v1566
  %v1568 = vmul.f32 %v1444, 1.442695
  %v1569 = vpow.pop %v1568
  %v1570 = vmul.f32 %v1445, 1.442695
  %v1571 = vpow.pop %v1570
  %v1572 = vmul.f32 %v1446, 1.442695
  %v1573 = vpow.pop %v1572
  %v1574 = vmul.f32 %v1447, 1.442695
  %v1575 = vpow.pop %v1574
  %1576 = vadd.xlane.f32.xlu0 %v1449
  %v1577 = vpop.xlane.xlu0 %1576
  %1578 = vadd.xlane.f32.xlu0 %v1451
  %v1579 = vpop.xlane.xlu0 %1578
  %1580 = vadd.xlane.f32.xlu0 %v1453
  %v1581 = vpop.xlane.xlu0 %1580
  %1582 = vadd.xlane.f32.xlu0 %v1455
  %v1583 = vpop.xlane.xlu0 %1582
  %1584 = vadd.xlane.f32.xlu0 %v1457
  %v1585 = vpop.xlane.xlu0 %1584
  %1586 = vadd.xlane.f32.xlu0 %v1459
  %v1587 = vpop.xlane.xlu0 %1586
  %1588 = vadd.xlane.f32.xlu0 %v1461
  %v1589 = vpop.xlane.xlu0 %1588
  %1590 = vadd.xlane.f32.xlu0 %v1463
  %v1591 = vpop.xlane.xlu0 %1590
  %1592 = vadd.xlane.f32.xlu0 %v1465
  %v1593 = vpop.xlane.xlu0 %1592
  %1594 = vadd.xlane.f32.xlu0 %v1467
  %v1595 = vpop.xlane.xlu0 %1594
  %1596 = vadd.xlane.f32.xlu0 %v1469
  %v1597 = vpop.xlane.xlu0 %1596
  %1598 = vadd.xlane.f32.xlu0 %v1471
  %v1599 = vpop.xlane.xlu0 %1598
  %1600 = vadd.xlane.f32.xlu0 %v1473
  %v1601 = vpop.xlane.xlu0 %1600
  %1602 = vadd.xlane.f32.xlu0 %v1475
  %v1603 = vpop.xlane.xlu0 %1602
  %1604 = vadd.xlane.f32.xlu0 %v1477
  %v1605 = vpop.xlane.xlu0 %1604
  %1606 = vadd.xlane.f32.xlu0 %v1479
  %v1607 = vpop.xlane.xlu0 %1606
  %1608 = vadd.xlane.f32.xlu0 %v1481
  %v1609 = vpop.xlane.xlu0 %1608
  %1610 = vadd.xlane.f32.xlu0 %v1483
  %v1611 = vpop.xlane.xlu0 %1610
  %1612 = vadd.xlane.f32.xlu0 %v1485
  %v1613 = vpop.xlane.xlu0 %1612
  %1614 = vadd.xlane.f32.xlu0 %v1487
  %v1615 = vpop.xlane.xlu0 %1614
  %1616 = vadd.xlane.f32.xlu0 %v1489
  %v1617 = vpop.xlane.xlu0 %1616
  %1618 = vadd.xlane.f32.xlu0 %v1491
  %v1619 = vpop.xlane.xlu0 %1618
  %1620 = vadd.xlane.f32.xlu0 %v1493
  %v1621 = vpop.xlane.xlu0 %1620
  %1622 = vadd.xlane.f32.xlu0 %v1495
  %v1623 = vpop.xlane.xlu0 %1622
  %1624 = vadd.xlane.f32.xlu0 %v1497
  %v1625 = vpop.xlane.xlu0 %1624
  %1626 = vadd.xlane.f32.xlu0 %v1499
  %v1627 = vpop.xlane.xlu0 %1626
  %1628 = vadd.xlane.f32.xlu0 %v1501
  %v1629 = vpop.xlane.xlu0 %1628
  %1630 = vadd.xlane.f32.xlu0 %v1503
  %v1631 = vpop.xlane.xlu0 %1630
  %1632 = vadd.xlane.f32.xlu0 %v1505
  %v1633 = vpop.xlane.xlu0 %1632
  %1634 = vadd.xlane.f32.xlu0 %v1507
  %v1635 = vpop.xlane.xlu0 %1634
  %1636 = vadd.xlane.f32.xlu0 %v1509
  %v1637 = vpop.xlane.xlu0 %1636
  %1638 = vadd.xlane.f32.xlu0 %v1511
  %v1639 = vpop.xlane.xlu0 %1638
  %1640 = vadd.xlane.f32.xlu0 %v1513
  %v1641 = vpop.xlane.xlu0 %1640
  %1642 = vadd.xlane.f32.xlu0 %v1515
  %v1643 = vpop.xlane.xlu0 %1642
  %1644 = vadd.xlane.f32.xlu0 %v1517
  %v1645 = vpop.xlane.xlu0 %1644
  %1646 = vadd.xlane.f32.xlu0 %v1519
  %v1647 = vpop.xlane.xlu0 %1646
  %1648 = vadd.xlane.f32.xlu0 %v1521
  %v1649 = vpop.xlane.xlu0 %1648
  %1650 = vadd.xlane.f32.xlu0 %v1523
  %v1651 = vpop.xlane.xlu0 %1650
  %1652 = vadd.xlane.f32.xlu0 %v1525
  %v1653 = vpop.xlane.xlu0 %1652
  %1654 = vadd.xlane.f32.xlu0 %v1527
  %v1655 = vpop.xlane.xlu0 %1654
  %1656 = vadd.xlane.f32.xlu0 %v1529
  %v1657 = vpop.xlane.xlu0 %1656
  %1658 = vadd.xlane.f32.xlu0 %v1531
  %v1659 = vpop.xlane.xlu0 %1658
  %1660 = vadd.xlane.f32.xlu0 %v1533
  %v1661 = vpop.xlane.xlu0 %1660
  %1662 = vadd.xlane.f32.xlu0 %v1535
  %v1663 = vpop.xlane.xlu0 %1662
  %1664 = vadd.xlane.f32.xlu0 %v1537
  %v1665 = vpop.xlane.xlu0 %1664
  %1666 = vadd.xlane.f32.xlu0 %v1539
  %v1667 = vpop.xlane.xlu0 %1666
  %1668 = vadd.xlane.f32.xlu0 %v1541
  %v1669 = vpop.xlane.xlu0 %1668
  %1670 = vadd.xlane.f32.xlu0 %v1543
  %v1671 = vpop.xlane.xlu0 %1670
  %1672 = vadd.xlane.f32.xlu0 %v1545
  %v1673 = vpop.xlane.xlu0 %1672
  %1674 = vadd.xlane.f32.xlu0 %v1547
  %v1675 = vpop.xlane.xlu0 %1674
  %1676 = vadd.xlane.f32.xlu0 %v1549
  %v1677 = vpop.xlane.xlu0 %1676
  %1678 = vadd.xlane.f32.xlu0 %v1551
  %v1679 = vpop.xlane.xlu0 %1678
  %1680 = vadd.xlane.f32.xlu0 %v1553
  %v1681 = vpop.xlane.xlu0 %1680
  %1682 = vadd.xlane.f32.xlu0 %v1555
  %v1683 = vpop.xlane.xlu0 %1682
  %1684 = vadd.xlane.f32.xlu0 %v1557
  %v1685 = vpop.xlane.xlu0 %1684
  %1686 = vadd.xlane.f32.xlu0 %v1559
  %v1687 = vpop.xlane.xlu0 %1686
  %1688 = vadd.xlane.f32.xlu0 %v1561
  %v1689 = vpop.xlane.xlu0 %1688
  %1690 = vadd.xlane.f32.xlu0 %v1563
  %v1691 = vpop.xlane.xlu0 %1690
  %1692 = vadd.xlane.f32.xlu0 %v1565
  %v1693 = vpop.xlane.xlu0 %1692
  %1694 = vadd.xlane.f32.xlu0 %v1567
  %v1695 = vpop.xlane.xlu0 %1694
  %1696 = vadd.xlane.f32.xlu0 %v1569
  %v1697 = vpop.xlane.xlu0 %1696
  %1698 = vadd.xlane.f32.xlu0 %v1571
  %v1699 = vpop.xlane.xlu0 %1698
  %1700 = vadd.xlane.f32.xlu0 %v1573
  %v1701 = vpop.xlane.xlu0 %1700
  %1702 = vadd.xlane.f32.xlu0 %v1575
  %v1703 = vpop.xlane.xlu0 %1702
  %v1704 = vlaneseq
  %v1705 = vshrl.u32 %v1704, 7
  %v1706 = vadd.s32 %v1705, 8
  %v1707 = vadd.s32 %v1705, 16
  %v1708 = vadd.s32 %v1705, 24
  %v1709 = vadd.s32 %v1705, 32
  %v1710 = vadd.s32 %v1705, 40
  %v1711 = vadd.s32 %v1705, 48
  %v1712 = vadd.s32 %v1705, 56
  %v1713 = vadd.s32 %v1705, 64
  %v1714 = vadd.s32 %v1705, 72
  %v1715 = vadd.s32 %v1705, 80
  %v1716 = vadd.s32 %v1705, 88
  %v1717 = vadd.s32 %v1705, 96
  %v1718 = vadd.s32 %v1705, 104
  %v1719 = vadd.s32 %v1705, 112
  %v1720 = vadd.s32 %v1705, 120
  %v1721 = vlaneseq
  %v1722 = vand.u32 %v1721, 127
  %s1723 = smul.u32 0, 4
  %v1724 = vstv %s1723
  %v1725 = vadd.s32 %v1724, 1
  %v1726 = vadd.s32 %v1724, 2
  %v1727 = vadd.s32 %v1724, 3
  %v1728 = vmul.u32 %v1724, 128
  %v1729 = vmul.u32 %v1725, 128
  %v1730 = vmul.u32 %v1726, 128
  %v1731 = vmul.u32 %v1727, 128
  %v1732 = vadd.s32 %v1728, %v1705
  %v1733 = vadd.s32 %v1728, %v1706
  %v1734 = vadd.s32 %v1728, %v1707
  %v1735 = vadd.s32 %v1728, %v1708
  %v1736 = vadd.s32 %v1728, %v1709
  %v1737 = vadd.s32 %v1728, %v1710
  %v1738 = vadd.s32 %v1728, %v1711
  %v1739 = vadd.s32 %v1728, %v1712
  %v1740 = vadd.s32 %v1728, %v1713
  %v1741 = vadd.s32 %v1728, %v1714
  %v1742 = vadd.s32 %v1728, %v1715
  %v1743 = vadd.s32 %v1728, %v1716
  %v1744 = vadd.s32 %v1728, %v1717
  %v1745 = vadd.s32 %v1728, %v1718
  %v1746 = vadd.s32 %v1728, %v1719
  %v1747 = vadd.s32 %v1728, %v1720
  %v1748 = vadd.s32 %v1729, %v1705
  %v1749 = vadd.s32 %v1729, %v1706
  %v1750 = vadd.s32 %v1729, %v1707
  %v1751 = vadd.s32 %v1729, %v1708
  %v1752 = vadd.s32 %v1729, %v1709
  %v1753 = vadd.s32 %v1729, %v1710
  %v1754 = vadd.s32 %v1729, %v1711
  %v1755 = vadd.s32 %v1729, %v1712
  %v1756 = vadd.s32 %v1729, %v1713
  %v1757 = vadd.s32 %v1729, %v1714
  %v1758 = vadd.s32 %v1729, %v1715
  %v1759 = vadd.s32 %v1729, %v1716
  %v1760 = vadd.s32 %v1729, %v1717
  %v1761 = vadd.s32 %v1729, %v1718
  %v1762 = vadd.s32 %v1729, %v1719
  %v1763 = vadd.s32 %v1729, %v1720
  %v1764 = vadd.s32 %v1730, %v1705
  %v1765 = vadd.s32 %v1730, %v1706
  %v1766 = vadd.s32 %v1730, %v1707
  %v1767 = vadd.s32 %v1730, %v1708
  %v1768 = vadd.s32 %v1730, %v1709
  %v1769 = vadd.s32 %v1730, %v1710
  %v1770 = vadd.s32 %v1730, %v1711
  %v1771 = vadd.s32 %v1730, %v1712
  %v1772 = vadd.s32 %v1730, %v1713
  %v1773 = vadd.s32 %v1730, %v1714
  %v1774 = vadd.s32 %v1730, %v1715
  %v1775 = vadd.s32 %v1730, %v1716
  %v1776 = vadd.s32 %v1730, %v1717
  %v1777 = vadd.s32 %v1730, %v1718
  %v1778 = vadd.s32 %v1730, %v1719
  %v1779 = vadd.s32 %v1730, %v1720
  %v1780 = vadd.s32 %v1731, %v1705
  %v1781 = vadd.s32 %v1731, %v1706
  %v1782 = vadd.s32 %v1731, %v1707
  %v1783 = vadd.s32 %v1731, %v1708
  %v1784 = vadd.s32 %v1731, %v1709
  %v1785 = vadd.s32 %v1731, %v1710
  %v1786 = vadd.s32 %v1731, %v1711
  %v1787 = vadd.s32 %v1731, %v1712
  %v1788 = vadd.s32 %v1731, %v1713
  %v1789 = vadd.s32 %v1731, %v1714
  %v1790 = vadd.s32 %v1731, %v1715
  %v1791 = vadd.s32 %v1731, %v1716
  %v1792 = vadd.s32 %v1731, %v1717
  %v1793 = vadd.s32 %v1731, %v1718
  %v1794 = vadd.s32 %v1731, %v1719
  %v1795 = vadd.s32 %v1731, %v1720
  %v1796 = vmul.u32 %v1732, 128
  %v1797 = vmul.u32 %v1733, 128
  %v1798 = vmul.u32 %v1734, 128
  %v1799 = vmul.u32 %v1735, 128
  %v1800 = vmul.u32 %v1736, 128
  %v1801 = vmul.u32 %v1737, 128
  %v1802 = vmul.u32 %v1738, 128
  %v1803 = vmul.u32 %v1739, 128
  %v1804 = vmul.u32 %v1740, 128
  %v1805 = vmul.u32 %v1741, 128
  %v1806 = vmul.u32 %v1742, 128
  %v1807 = vmul.u32 %v1743, 128
  %v1808 = vmul.u32 %v1744, 128
  %v1809 = vmul.u32 %v1745, 128
  %v1810 = vmul.u32 %v1746, 128
  %v1811 = vmul.u32 %v1747, 128
  %v1812 = vmul.u32 %v1748, 128
  %v1813 = vmul.u32 %v1749, 128
  %v1814 = vmul.u32 %v1750, 128
  %v1815 = vmul.u32 %v1751, 128
  %v1816 = vmul.u32 %v1752, 128
  %v1817 = vmul.u32 %v1753, 128
  %v1818 = vmul.u32 %v1754, 128
  %v1819 = vmul.u32 %v1755, 128
  %v1820 = vmul.u32 %v1756, 128
  %v1821 = vmul.u32 %v1757, 128
  %v1822 = vmul.u32 %v1758, 128
  %v1823 = vmul.u32 %v1759, 128
  %v1824 = vmul.u32 %v1760, 128
  %v1825 = vmul.u32 %v1761, 128
  %v1826 = vmul.u32 %v1762, 128
  %v1827 = vmul.u32 %v1763, 128
  %v1828 = vmul.u32 %v1764, 128
  %v1829 = vmul.u32 %v1765, 128
  %v1830 = vmul.u32 %v1766, 128
  %v1831 = vmul.u32 %v1767, 128
  %v1832 = vmul.u32 %v1768, 128
  %v1833 = vmul.u32 %v1769, 128
  %v1834 = vmul.u32 %v1770, 128
  %v1835 = vmul.u32 %v1771, 128
  %v1836 = vmul.u32 %v1772, 128
  %v1837 = vmul.u32 %v1773, 128
  %v1838 = vmul.u32 %v1774, 128
  %v1839 = vmul.u32 %v1775, 128
  %v1840 = vmul.u32 %v1776, 128
  %v1841 = vmul.u32 %v1777, 128
  %v1842 = vmul.u32 %v1778, 128
  %v1843 = vmul.u32 %v1779, 128
  %v1844 = vmul.u32 %v1780, 128
  %v1845 = vmul.u32 %v1781, 128
  %v1846 = vmul.u32 %v1782, 128
  %v1847 = vmul.u32 %v1783, 128
  %v1848 = vmul.u32 %v1784, 128
  %v1849 = vmul.u32 %v1785, 128
  %v1850 = vmul.u32 %v1786, 128
  %v1851 = vmul.u32 %v1787, 128
  %v1852 = vmul.u32 %v1788, 128
  %v1853 = vmul.u32 %v1789, 128
  %v1854 = vmul.u32 %v1790, 128
  %v1855 = vmul.u32 %v1791, 128
  %v1856 = vmul.u32 %v1792, 128
  %v1857 = vmul.u32 %v1793, 128
  %v1858 = vmul.u32 %v1794, 128
  %v1859 = vmul.u32 %v1795, 128
  %v1860 = vadd.s32 %v1796, %v1722
  %v1861 = vadd.s32 %v1797, %v1722
  %v1862 = vadd.s32 %v1798, %v1722
  %v1863 = vadd.s32 %v1799, %v1722
  %v1864 = vadd.s32 %v1800, %v1722
  %v1865 = vadd.s32 %v1801, %v1722
  %v1866 = vadd.s32 %v1802, %v1722
  %v1867 = vadd.s32 %v1803, %v1722
  %v1868 = vadd.s32 %v1804, %v1722
  %v1869 = vadd.s32 %v1805, %v1722
  %v1870 = vadd.s32 %v1806, %v1722
  %v1871 = vadd.s32 %v1807, %v1722
  %v1872 = vadd.s32 %v1808, %v1722
  %v1873 = vadd.s32 %v1809, %v1722
  %v1874 = vadd.s32 %v1810, %v1722
  %v1875 = vadd.s32 %v1811, %v1722
  %v1876 = vadd.s32 %v1812, %v1722
  %v1877 = vadd.s32 %v1813, %v1722
  %v1878 = vadd.s32 %v1814, %v1722
  %v1879 = vadd.s32 %v1815, %v1722
  %v1880 = vadd.s32 %v1816, %v1722
  %v1881 = vadd.s32 %v1817, %v1722
  %v1882 = vadd.s32 %v1818, %v1722
  %v1883 = vadd.s32 %v1819, %v1722
  %v1884 = vadd.s32 %v1820, %v1722
  %v1885 = vadd.s32 %v1821, %v1722
  %v1886 = vadd.s32 %v1822, %v1722
  %v1887 = vadd.s32 %v1823, %v1722
  %v1888 = vadd.s32 %v1824, %v1722
  %v1889 = vadd.s32 %v1825, %v1722
  %v1890 = vadd.s32 %v1826, %v1722
  %v1891 = vadd.s32 %v1827, %v1722
  %v1892 = vadd.s32 %v1828, %v1722
  %v1893 = vadd.s32 %v1829, %v1722
  %v1894 = vadd.s32 %v1830, %v1722
  %v1895 = vadd.s32 %v1831, %v1722
  %v1896 = vadd.s32 %v1832, %v1722
  %v1897 = vadd.s32 %v1833, %v1722
  %v1898 = vadd.s32 %v1834, %v1722
  %v1899 = vadd.s32 %v1835, %v1722
  %v1900 = vadd.s32 %v1836, %v1722
  %v1901 = vadd.s32 %v1837, %v1722
  %v1902 = vadd.s32 %v1838, %v1722
  %v1903 = vadd.s32 %v1839, %v1722
  %v1904 = vadd.s32 %v1840, %v1722
  %v1905 = vadd.s32 %v1841, %v1722
  %v1906 = vadd.s32 %v1842, %v1722
  %v1907 = vadd.s32 %v1843, %v1722
  %v1908 = vadd.s32 %v1844, %v1722
  %v1909 = vadd.s32 %v1845, %v1722
  %v1910 = vadd.s32 %v1846, %v1722
  %v1911 = vadd.s32 %v1847, %v1722
  %v1912 = vadd.s32 %v1848, %v1722
  %v1913 = vadd.s32 %v1849, %v1722
  %v1914 = vadd.s32 %v1850, %v1722
  %v1915 = vadd.s32 %v1851, %v1722
  %v1916 = vadd.s32 %v1852, %v1722
  %v1917 = vadd.s32 %v1853, %v1722
  %v1918 = vadd.s32 %v1854, %v1722
  %v1919 = vadd.s32 %v1855, %v1722
  %v1920 = vadd.s32 %v1856, %v1722
  %v1921 = vadd.s32 %v1857, %v1722
  %v1922 = vadd.s32 %v1858, %v1722
  %v1923 = vadd.s32 %v1859, %v1722
  %s1924 = sld [smem:[#allocation3]]
  %v1925 = vstv %s1924
  %v1926 = vadd.s32 %v1860, %v1925
  %v1927 = vadd.s32 %v1861, %v1925
  %v1928 = vadd.s32 %v1862, %v1925
  %v1929 = vadd.s32 %v1863, %v1925
  %v1930 = vadd.s32 %v1864, %v1925
  %v1931 = vadd.s32 %v1865, %v1925
  %v1932 = vadd.s32 %v1866, %v1925
  %v1933 = vadd.s32 %v1867, %v1925
  %v1934 = vadd.s32 %v1868, %v1925
  %v1935 = vadd.s32 %v1869, %v1925
  %v1936 = vadd.s32 %v1870, %v1925
  %v1937 = vadd.s32 %v1871, %v1925
  %v1938 = vadd.s32 %v1872, %v1925
  %v1939 = vadd.s32 %v1873, %v1925
  %v1940 = vadd.s32 %v1874, %v1925
  %v1941 = vadd.s32 %v1875, %v1925
  %v1942 = vadd.s32 %v1876, %v1925
  %v1943 = vadd.s32 %v1877, %v1925
  %v1944 = vadd.s32 %v1878, %v1925
  %v1945 = vadd.s32 %v1879, %v1925
  %v1946 = vadd.s32 %v1880, %v1925
  %v1947 = vadd.s32 %v1881, %v1925
  %v1948 = vadd.s32 %v1882, %v1925
  %v1949 = vadd.s32 %v1883, %v1925
  %v1950 = vadd.s32 %v1884, %v1925
  %v1951 = vadd.s32 %v1885, %v1925
  %v1952 = vadd.s32 %v1886, %v1925
  %v1953 = vadd.s32 %v1887, %v1925
  %v1954 = vadd.s32 %v1888, %v1925
  %v1955 = vadd.s32 %v1889, %v1925
  %v1956 = vadd.s32 %v1890, %v1925
  %v1957 = vadd.s32 %v1891, %v1925
  %v1958 = vadd.s32 %v1892, %v1925
  %v1959 = vadd.s32 %v1893, %v1925
  %v1960 = vadd.s32 %v1894, %v1925
  %v1961 = vadd.s32 %v1895, %v1925
  %v1962 = vadd.s32 %v1896, %v1925
  %v1963 = vadd.s32 %v1897, %v1925
  %v1964 = vadd.s32 %v1898, %v1925
  %v1965 = vadd.s32 %v1899, %v1925
  %v1966 = vadd.s32 %v1900, %v1925
  %v1967 = vadd.s32 %v1901, %v1925
  %v1968 = vadd.s32 %v1902, %v1925
  %v1969 = vadd.s32 %v1903, %v1925
  %v1970 = vadd.s32 %v1904, %v1925
  %v1971 = vadd.s32 %v1905, %v1925
  %v1972 = vadd.s32 %v1906, %v1925
  %v1973 = vadd.s32 %v1907, %v1925
  %v1974 = vadd.s32 %v1908, %v1925
  %v1975 = vadd.s32 %v1909, %v1925
  %v1976 = vadd.s32 %v1910, %v1925
  %v1977 = vadd.s32 %v1911, %v1925
  %v1978 = vadd.s32 %v1912, %v1925
  %v1979 = vadd.s32 %v1913, %v1925
  %v1980 = vadd.s32 %v1914, %v1925
  %v1981 = vadd.s32 %v1915, %v1925
  %v1982 = vadd.s32 %v1916, %v1925
  %v1983 = vadd.s32 %v1917, %v1925
  %v1984 = vadd.s32 %v1918, %v1925
  %v1985 = vadd.s32 %v1919, %v1925
  %v1986 = vadd.s32 %v1920, %v1925
  %v1987 = vadd.s32 %v1921, %v1925
  %v1988 = vadd.s32 %v1922, %v1925
  %v1989 = vadd.s32 %v1923, %v1925
  %v1990 = vshra.s32 %v1926, 16
  %v1991 = vshra.s32 %v1927, 16
  %v1992 = vshra.s32 %v1928, 16
  %v1993 = vshra.s32 %v1929, 16
  %v1994 = vshra.s32 %v1930, 16
  %v1995 = vshra.s32 %v1931, 16
  %v1996 = vshra.s32 %v1932, 16
  %v1997 = vshra.s32 %v1933, 16
  %v1998 = vshra.s32 %v1934, 16
  %v1999 = vshra.s32 %v1935, 16
  %v2000 = vshra.s32 %v1936, 16
  %v2001 = vshra.s32 %v1937, 16
  %v2002 = vshra.s32 %v1938, 16
  %v2003 = vshra.s32 %v1939, 16
  %v2004 = vshra.s32 %v1940, 16
  %v2005 = vshra.s32 %v1941, 16
  %v2006 = vshra.s32 %v1942, 16
  %v2007 = vshra.s32 %v1943, 16
  %v2008 = vshra.s32 %v1944, 16
  %v2009 = vshra.s32 %v1945, 16
  %v2010 = vshra.s32 %v1946, 16
  %v2011 = vshra.s32 %v1947, 16
  %v2012 = vshra.s32 %v1948, 16
  %v2013 = vshra.s32 %v1949, 16
  %v2014 = vshra.s32 %v1950, 16
  %v2015 = vshra.s32 %v1951, 16
  %v2016 = vshra.s32 %v1952, 16
  %v2017 = vshra.s32 %v1953, 16
  %v2018 = vshra.s32 %v1954, 16
  %v2019 = vshra.s32 %v1955, 16
  %v2020 = vshra.s32 %v1956, 16
  %v2021 = vshra.s32 %v1957, 16
  %v2022 = vshra.s32 %v1958, 16
  %v2023 = vshra.s32 %v1959, 16
  %v2024 = vshra.s32 %v1960, 16
  %v2025 = vshra.s32 %v1961, 16
  %v2026 = vshra.s32 %v1962, 16
  %v2027 = vshra.s32 %v1963, 16
  %v2028 = vshra.s32 %v1964, 16
  %v2029 = vshra.s32 %v1965, 16
  %v2030 = vshra.s32 %v1966, 16
  %v2031 = vshra.s32 %v1967, 16
  %v2032 = vshra.s32 %v1968, 16
  %v2033 = vshra.s32 %v1969, 16
  %v2034 = vshra.s32 %v1970, 16
  %v2035 = vshra.s32 %v1971, 16
  %v2036 = vshra.s32 %v1972, 16
  %v2037 = vshra.s32 %v1973, 16
  %v2038 = vshra.s32 %v1974, 16
  %v2039 = vshra.s32 %v1975, 16
  %v2040 = vshra.s32 %v1976, 16
  %v2041 = vshra.s32 %v1977, 16
  %v2042 = vshra.s32 %v1978, 16
  %v2043 = vshra.s32 %v1979, 16
  %v2044 = vshra.s32 %v1980, 16
  %v2045 = vshra.s32 %v1981, 16
  %v2046 = vshra.s32 %v1982, 16
  %v2047 = vshra.s32 %v1983, 16
  %v2048 = vshra.s32 %v1984, 16
  %v2049 = vshra.s32 %v1985, 16
  %v2050 = vshra.s32 %v1986, 16
  %v2051 = vshra.s32 %v1987, 16
  %v2052 = vshra.s32 %v1988, 16
  %v2053 = vshra.s32 %v1989, 16
  %v2054 = vand.u32 %v1990, 65535
  %v2055 = vand.u32 %v1991, 65535
  %v2056 = vand.u32 %v1992, 65535
  %v2057 = vand.u32 %v1993, 65535
  %v2058 = vand.u32 %v1994, 65535
  %v2059 = vand.u32 %v1995, 65535
  %v2060 = vand.u32 %v1996, 65535
  %v2061 = vand.u32 %v1997, 65535
  %v2062 = vand.u32 %v1998, 65535
  %v2063 = vand.u32 %v1999, 65535
  %v2064 = vand.u32 %v2000, 65535
  %v2065 = vand.u32 %v2001, 65535
  %v2066 = vand.u32 %v2002, 65535
  %v2067 = vand.u32 %v2003, 65535
  %v2068 = vand.u32 %v2004, 65535
  %v2069 = vand.u32 %v2005, 65535
  %v2070 = vand.u32 %v2006, 65535
  %v2071 = vand.u32 %v2007, 65535
  %v2072 = vand.u32 %v2008, 65535
  %v2073 = vand.u32 %v2009, 65535
  %v2074 = vand.u32 %v2010, 65535
  %v2075 = vand.u32 %v2011, 65535
  %v2076 = vand.u32 %v2012, 65535
  %v2077 = vand.u32 %v2013, 65535
  %v2078 = vand.u32 %v2014, 65535
  %v2079 = vand.u32 %v2015, 65535
  %v2080 = vand.u32 %v2016, 65535
  %v2081 = vand.u32 %v2017, 65535
  %v2082 = vand.u32 %v2018, 65535
  %v2083 = vand.u32 %v2019, 65535
  %v2084 = vand.u32 %v2020, 65535
  %v2085 = vand.u32 %v2021, 65535
  %v2086 = vand.u32 %v2022, 65535
  %v2087 = vand.u32 %v2023, 65535
  %v2088 = vand.u32 %v2024, 65535
  %v2089 = vand.u32 %v2025, 65535
  %v2090 = vand.u32 %v2026, 65535
  %v2091 = vand.u32 %v2027, 65535
  %v2092 = vand.u32 %v2028, 65535
  %v2093 = vand.u32 %v2029, 65535
  %v2094 = vand.u32 %v2030, 65535
  %v2095 = vand.u32 %v2031, 65535
  %v2096 = vand.u32 %v2032, 65535
  %v2097 = vand.u32 %v2033, 65535
  %v2098 = vand.u32 %v2034, 65535
  %v2099 = vand.u32 %v2035, 65535
  %v2100 = vand.u32 %v2036, 65535
  %v2101 = vand.u32 %v2037, 65535
  %v2102 = vand.u32 %v2038, 65535
  %v2103 = vand.u32 %v2039, 65535
  %v2104 = vand.u32 %v2040, 65535
  %v2105 = vand.u32 %v2041, 65535
  %v2106 = vand.u32 %v2042, 65535
  %v2107 = vand.u32 %v2043, 65535
  %v2108 = vand.u32 %v2044, 65535
  %v2109 = vand.u32 %v2045, 65535
  %v2110 = vand.u32 %v2046, 65535
  %v2111 = vand.u32 %v2047, 65535
  %v2112 = vand.u32 %v2048, 65535
  %v2113 = vand.u32 %v2049, 65535
  %v2114 = vand.u32 %v2050, 65535
  %v2115 = vand.u32 %v2051, 65535
  %v2116 = vand.u32 %v2052, 65535
  %v2117 = vand.u32 %v2053, 65535
  %v2118 = vxor.u32 %v1926, %v2054
  %v2119 = vxor.u32 %v1927, %v2055
  %v2120 = vxor.u32 %v1928, %v2056
  %v2121 = vxor.u32 %v1929, %v2057
  %v2122 = vxor.u32 %v1930, %v2058
  %v2123 = vxor.u32 %v1931, %v2059
  %v2124 = vxor.u32 %v1932, %v2060
  %v2125 = vxor.u32 %v1933, %v2061
  %v2126 = vxor.u32 %v1934, %v2062
  %v2127 = vxor.u32 %v1935, %v2063
  %v2128 = vxor.u32 %v1936, %v2064
  %v2129 = vxor.u32 %v1937, %v2065
  %v2130 = vxor.u32 %v1938, %v2066
  %v2131 = vxor.u32 %v1939, %v2067
  %v2132 = vxor.u32 %v1940, %v2068
  %v2133 = vxor.u32 %v1941, %v2069
  %v2134 = vxor.u32 %v1942, %v2070
  %v2135 = vxor.u32 %v1943, %v2071
  %v2136 = vxor.u32 %v1944, %v2072
  %v2137 = vxor.u32 %v1945, %v2073
  %v2138 = vxor.u32 %v1946, %v2074
  %v2139 = vxor.u32 %v1947, %v2075
  %v2140 = vxor.u32 %v1948, %v2076
  %v2141 = vxor.u32 %v1949, %v2077
  %v2142 = vxor.u32 %v1950, %v2078
  %v2143 = vxor.u32 %v1951, %v2079
  %v2144 = vxor.u32 %v1952, %v2080
  %v2145 = vxor.u32 %v1953, %v2081
  %v2146 = vxor.u32 %v1954, %v2082
  %v2147 = vxor.u32 %v1955, %v2083
  %v2148 = vxor.u32 %v1956, %v2084
  %v2149 = vxor.u32 %v1957, %v2085
  %v2150 = vxor.u32 %v1958, %v2086
  %v2151 = vxor.u32 %v1959, %v2087
  %v2152 = vxor.u32 %v1960, %v2088
  %v2153 = vxor.u32 %v1961, %v2089
  %v2154 = vxor.u32 %v1962, %v2090
  %v2155 = vxor.u32 %v1963, %v2091
  %v2156 = vxor.u32 %v1964, %v2092
  %v2157 = vxor.u32 %v1965, %v2093
  %v2158 = vxor.u32 %v1966, %v2094
  %v2159 = vxor.u32 %v1967, %v2095
  %v2160 = vxor.u32 %v1968, %v2096
  %v2161 = vxor.u32 %v1969, %v2097
  %v2162 = vxor.u32 %v1970, %v2098
  %v2163 = vxor.u32 %v1971, %v2099
  %v2164 = vxor.u32 %v1972, %v2100
  %v2165 = vxor.u32 %v1973, %v2101
  %v2166 = vxor.u32 %v1974, %v2102
  %v2167 = vxor.u32 %v1975, %v2103
  %v2168 = vxor.u32 %v1976, %v2104
  %v2169 = vxor.u32 %v1977, %v2105
  %v2170 = vxor.u32 %v1978, %v2106
  %v2171 = vxor.u32 %v1979, %v2107
  %v2172 = vxor.u32 %v1980, %v2108
  %v2173 = vxor.u32 %v1981, %v2109
  %v2174 = vxor.u32 %v1982, %v2110
  %v2175 = vxor.u32 %v1983, %v2111
  %v2176 = vxor.u32 %v1984, %v2112
  %v2177 = vxor.u32 %v1985, %v2113
  %v2178 = vxor.u32 %v1986, %v2114
  %v2179 = vxor.u32 %v1987, %v2115
  %v2180 = vxor.u32 %v1988, %v2116
  %v2181 = vxor.u32 %v1989, %v2117
  %v2182 = vmul.u32 %v2118, 2146121005
  %v2183 = vmul.u32 %v2119, 2146121005
  %v2184 = vmul.u32 %v2120, 2146121005
  %v2185 = vmul.u32 %v2121, 2146121005
  %v2186 = vmul.u32 %v2122, 2146121005
  %v2187 = vmul.u32 %v2123, 2146121005
  %v2188 = vmul.u32 %v2124, 2146121005
  %v2189 = vmul.u32 %v2125, 2146121005
  %v2190 = vmul.u32 %v2126, 2146121005
  %v2191 = vmul.u32 %v2127, 2146121005
  %v2192 = vmul.u32 %v2128, 2146121005
  %v2193 = vmul.u32 %v2129, 2146121005
  %v2194 = vmul.u32 %v2130, 2146121005
  %v2195 = vmul.u32 %v2131, 2146121005
  %v2196 = vmul.u32 %v2132, 2146121005
  %v2197 = vmul.u32 %v2133, 2146121005
  %v2198 = vmul.u32 %v2134, 2146121005
  %v2199 = vmul.u32 %v2135, 2146121005
  %v2200 = vmul.u32 %v2136, 2146121005
  %v2201 = vmul.u32 %v2137, 2146121005
  %v2202 = vmul.u32 %v2138, 2146121005
  %v2203 = vmul.u32 %v2139, 2146121005
  %v2204 = vmul.u32 %v2140, 2146121005
  %v2205 = vmul.u32 %v2141, 2146121005
  %v2206 = vmul.u32 %v2142, 2146121005
  %v2207 = vmul.u32 %v2143, 2146121005
  %v2208 = vmul.u32 %v2144, 2146121005
  %v2209 = vmul.u32 %v2145, 2146121005
  %v2210 = vmul.u32 %v2146, 2146121005
  %v2211 = vmul.u32 %v2147, 2146121005
  %v2212 = vmul.u32 %v2148, 2146121005
  %v2213 = vmul.u32 %v2149, 2146121005
  %v2214 = vmul.u32 %v2150, 2146121005
  %v2215 = vmul.u32 %v2151, 2146121005
  %v2216 = vmul.u32 %v2152, 2146121005
  %v2217 = vmul.u32 %v2153, 2146121005
  %v2218 = vmul.u32 %v2154, 2146121005
  %v2219 = vmul.u32 %v2155, 2146121005
  %v2220 = vmul.u32 %v2156, 2146121005
  %v2221 = vmul.u32 %v2157, 2146121005
  %v2222 = vmul.u32 %v2158, 2146121005
  %v2223 = vmul.u32 %v2159, 2146121005
  %v2224 = vmul.u32 %v2160, 2146121005
  %v2225 = vmul.u32 %v2161, 2146121005
  %v2226 = vmul.u32 %v2162, 2146121005
  %v2227 = vmul.u32 %v2163, 2146121005
  %v2228 = vmul.u32 %v2164, 2146121005
  %v2229 = vmul.u32 %v2165, 2146121005
  %v2230 = vmul.u32 %v2166, 2146121005
  %v2231 = vmul.u32 %v2167, 2146121005
  %v2232 = vmul.u32 %v2168, 2146121005
  %v2233 = vmul.u32 %v2169, 2146121005
  %v2234 = vmul.u32 %v2170, 2146121005
  %v2235 = vmul.u32 %v2171, 2146121005
  %v2236 = vmul.u32 %v2172, 2146121005
  %v2237 = vmul.u32 %v2173, 2146121005
  %v2238 = vmul.u32 %v2174, 2146121005
  %v2239 = vmul.u32 %v2175, 2146121005
  %v2240 = vmul.u32 %v2176, 2146121005
  %v2241 = vmul.u32 %v2177, 2146121005
  %v2242 = vmul.u32 %v2178, 2146121005
  %v2243 = vmul.u32 %v2179, 2146121005
  %v2244 = vmul.u32 %v2180, 2146121005
  %v2245 = vmul.u32 %v2181, 2146121005
  %v2246 = vshra.s32 %v2182, 15
  %v2247 = vshra.s32 %v2183, 15
  %v2248 = vshra.s32 %v2184, 15
  %v2249 = vshra.s32 %v2185, 15
  %v2250 = vshra.s32 %v2186, 15
  %v2251 = vshra.s32 %v2187, 15
  %v2252 = vshra.s32 %v2188, 15
  %v2253 = vshra.s32 %v2189, 15
  %v2254 = vshra.s32 %v2190, 15
  %v2255 = vshra.s32 %v2191, 15
  %v2256 = vshra.s32 %v2192, 15
  %v2257 = vshra.s32 %v2193, 15
  %v2258 = vshra.s32 %v2194, 15
  %v2259 = vshra.s32 %v2195, 15
  %v2260 = vshra.s32 %v2196, 15
  %v2261 = vshra.s32 %v2197, 15
  %v2262 = vshra.s32 %v2198, 15
  %v2263 = vshra.s32 %v2199, 15
  %v2264 = vshra.s32 %v2200, 15
  %v2265 = vshra.s32 %v2201, 15
  %v2266 = vshra.s32 %v2202, 15
  %v2267 = vshra.s32 %v2203, 15
  %v2268 = vshra.s32 %v2204, 15
  %v2269 = vshra.s32 %v2205, 15
  %v2270 = vshra.s32 %v2206, 15
  %v2271 = vshra.s32 %v2207, 15
  %v2272 = vshra.s32 %v2208, 15
  %v2273 = vshra.s32 %v2209, 15
  %v2274 = vshra.s32 %v2210, 15
  %v2275 = vshra.s32 %v2211, 15
  %v2276 = vshra.s32 %v2212, 15
  %v2277 = vshra.s32 %v2213, 15
  %v2278 = vshra.s32 %v2214, 15
  %v2279 = vshra.s32 %v2215, 15
  %v2280 = vshra.s32 %v2216, 15
  %v2281 = vshra.s32 %v2217, 15
  %v2282 = vshra.s32 %v2218, 15
  %v2283 = vshra.s32 %v2219, 15
  %v2284 = vshra.s32 %v2220, 15
  %v2285 = vshra.s32 %v2221, 15
  %v2286 = vshra.s32 %v2222, 15
  %v2287 = vshra.s32 %v2223, 15
  %v2288 = vshra.s32 %v2224, 15
  %v2289 = vshra.s32 %v2225, 15
  %v2290 = vshra.s32 %v2226, 15
  %v2291 = vshra.s32 %v2227, 15
  %v2292 = vshra.s32 %v2228, 15
  %v2293 = vshra.s32 %v2229, 15
  %v2294 = vshra.s32 %v2230, 15
  %v2295 = vshra.s32 %v2231, 15
  %v2296 = vshra.s32 %v2232, 15
  %v2297 = vshra.s32 %v2233, 15
  %v2298 = vshra.s32 %v2234, 15
  %v2299 = vshra.s32 %v2235, 15
  %v2300 = vshra.s32 %v2236, 15
  %v2301 = vshra.s32 %v2237, 15
  %v2302 = vshra.s32 %v2238, 15
  %v2303 = vshra.s32 %v2239, 15
  %v2304 = vshra.s32 %v2240, 15
  %v2305 = vshra.s32 %v2241, 15
  %v2306 = vshra.s32 %v2242, 15
  %v2307 = vshra.s32 %v2243, 15
  %v2308 = vshra.s32 %v2244, 15
  %v2309 = vshra.s32 %v2245, 15
  %v2310 = vand.u32 %v2246, 131071
  %v2311 = vand.u32 %v2247, 131071
  %v2312 = vand.u32 %v2248, 131071
  %v2313 = vand.u32 %v2249, 131071
  %v2314 = vand.u32 %v2250, 131071
  %v2315 = vand.u32 %v2251, 131071
  %v2316 = vand.u32 %v2252, 131071
  %v2317 = vand.u32 %v2253, 131071
  %v2318 = vand.u32 %v2254, 131071
  %v2319 = vand.u32 %v2255, 131071
  %v2320 = vand.u32 %v2256, 131071
  %v2321 = vand.u32 %v2257, 131071
  %v2322 = vand.u32 %v2258, 131071
  %v2323 = vand.u32 %v2259, 131071
  %v2324 = vand.u32 %v2260, 131071
  %v2325 = vand.u32 %v2261, 131071
  %v2326 = vand.u32 %v2262, 131071
  %v2327 = vand.u32 %v2263, 131071
  %v2328 = vand.u32 %v2264, 131071
  %v2329 = vand.u32 %v2265, 131071
  %v2330 = vand.u32 %v2266, 131071
  %v2331 = vand.u32 %v2267, 131071
  %v2332 = vand.u32 %v2268, 131071
  %v2333 = vand.u32 %v2269, 131071
  %v2334 = vand.u32 %v2270, 131071
  %v2335 = vand.u32 %v2271, 131071
  %v2336 = vand.u32 %v2272, 131071
  %v2337 = vand.u32 %v2273, 131071
  %v2338 = vand.u32 %v2274, 131071
  %v2339 = vand.u32 %v2275, 131071
  %v2340 = vand.u32 %v2276, 131071
  %v2341 = vand.u32 %v2277, 131071
  %v2342 = vand.u32 %v2278, 131071
  %v2343 = vand.u32 %v2279, 131071
  %v2344 = vand.u32 %v2280, 131071
  %v2345 = vand.u32 %v2281, 131071
  %v2346 = vand.u32 %v2282, 131071
  %v2347 = vand.u32 %v2283, 131071
  %v2348 = vand.u32 %v2284, 131071
  %v2349 = vand.u32 %v2285, 131071
  %v2350 = vand.u32 %v2286, 131071
  %v2351 = vand.u32 %v2287, 131071
  %v2352 = vand.u32 %v2288, 131071
  %v2353 = vand.u32 %v2289, 131071
  %v2354 = vand.u32 %v2290, 131071
  %v2355 = vand.u32 %v2291, 131071
  %v2356 = vand.u32 %v2292, 131071
  %v2357 = vand.u32 %v2293, 131071
  %v2358 = vand.u32 %v2294, 131071
  %v2359 = vand.u32 %v2295, 131071
  %v2360 = vand.u32 %v2296, 131071
  %v2361 = vand.u32 %v2297, 131071
  %v2362 = vand.u32 %v2298, 131071
  %v2363 = vand.u32 %v2299, 131071
  %v2364 = vand.u32 %v2300, 131071
  %v2365 = vand.u32 %v2301, 131071
  %v2366 = vand.u32 %v2302, 131071
  %v2367 = vand.u32 %v2303, 131071
  %v2368 = vand.u32 %v2304, 131071
  %v2369 = vand.u32 %v2305, 131071
  %v2370 = vand.u32 %v2306, 131071
  %v2371 = vand.u32 %v2307, 131071
  %v2372 = vand.u32 %v2308, 131071
  %v2373 = vand.u32 %v2309, 131071
  %v2374 = vxor.u32 %v2182, %v2310
  %v2375 = vxor.u32 %v2183, %v2311
  %v2376 = vxor.u32 %v2184, %v2312
  %v2377 = vxor.u32 %v2185, %v2313
  %v2378 = vxor.u32 %v2186, %v2314
  %v2379 = vxor.u32 %v2187, %v2315
  %v2380 = vxor.u32 %v2188, %v2316
  %v2381 = vxor.u32 %v2189, %v2317
  %v2382 = vxor.u32 %v2190, %v2318
  %v2383 = vxor.u32 %v2191, %v2319
  %v2384 = vxor.u32 %v2192, %v2320
  %v2385 = vxor.u32 %v2193, %v2321
  %v2386 = vxor.u32 %v2194, %v2322
  %v2387 = vxor.u32 %v2195, %v2323
  %v2388 = vxor.u32 %v2196, %v2324
  %v2389 = vxor.u32 %v2197, %v2325
  %v2390 = vxor.u32 %v2198, %v2326
  %v2391 = vxor.u32 %v2199, %v2327
  %v2392 = vxor.u32 %v2200, %v2328
  %v2393 = vxor.u32 %v2201, %v2329
  %v2394 = vxor.u32 %v2202, %v2330
  %v2395 = vxor.u32 %v2203, %v2331
  %v2396 = vxor.u32 %v2204, %v2332
  %v2397 = vxor.u32 %v2205, %v2333
  %v2398 = vxor.u32 %v2206, %v2334
  %v2399 = vxor.u32 %v2207, %v2335
  %v2400 = vxor.u32 %v2208, %v2336
  %v2401 = vxor.u32 %v2209, %v2337
  %v2402 = vxor.u32 %v2210, %v2338
  %v2403 = vxor.u32 %v2211, %v2339
  %v2404 = vxor.u32 %v2212, %v2340
  %v2405 = vxor.u32 %v2213, %v2341
  %v2406 = vxor.u32 %v2214, %v2342
  %v2407 = vxor.u32 %v2215, %v2343
  %v2408 = vxor.u32 %v2216, %v2344
  %v2409 = vxor.u32 %v2217, %v2345
  %v2410 = vxor.u32 %v2218, %v2346
  %v2411 = vxor.u32 %v2219, %v2347
  %v2412 = vxor.u32 %v2220, %v2348
  %v2413 = vxor.u32 %v2221, %v2349
  %v2414 = vxor.u32 %v2222, %v2350
  %v2415 = vxor.u32 %v2223, %v2351
  %v2416 = vxor.u32 %v2224, %v2352
  %v2417 = vxor.u32 %v2225, %v2353
  %v2418 = vxor.u32 %v2226, %v2354
  %v2419 = vxor.u32 %v2227, %v2355
  %v2420 = vxor.u32 %v2228, %v2356
  %v2421 = vxor.u32 %v2229, %v2357
  %v2422 = vxor.u32 %v2230, %v2358
  %v2423 = vxor.u32 %v2231, %v2359
  %v2424 = vxor.u32 %v2232, %v2360
  %v2425 = vxor.u32 %v2233, %v2361
  %v2426 = vxor.u32 %v2234, %v2362
  %v2427 = vxor.u32 %v2235, %v2363
  %v2428 = vxor.u32 %v2236, %v2364
  %v2429 = vxor.u32 %v2237, %v2365
  %v2430 = vxor.u32 %v2238, %v2366
  %v2431 = vxor.u32 %v2239, %v2367
  %v2432 = vxor.u32 %v2240, %v2368
  %v2433 = vxor.u32 %v2241, %v2369
  %v2434 = vxor.u32 %v2242, %v2370
  %v2435 = vxor.u32 %v2243, %v2371
  %v2436 = vxor.u32 %v2244, %v2372
  %v2437 = vxor.u32 %v2245, %v2373
  %v2438 = vmul.u32 %v2374, 2221713035
  %v2439 = vmul.u32 %v2375, 2221713035
  %v2440 = vmul.u32 %v2376, 2221713035
  %v2441 = vmul.u32 %v2377, 2221713035
  %v2442 = vmul.u32 %v2378, 2221713035
  %v2443 = vmul.u32 %v2379, 2221713035
  %v2444 = vmul.u32 %v2380, 2221713035
  %v2445 = vmul.u32 %v2381, 2221713035
  %v2446 = vmul.u32 %v2382, 2221713035
  %v2447 = vmul.u32 %v2383, 2221713035
  %v2448 = vmul.u32 %v2384, 2221713035
  %v2449 = vmul.u32 %v2385, 2221713035
  %v2450 = vmul.u32 %v2386, 2221713035
  %v2451 = vmul.u32 %v2387, 2221713035
  %v2452 = vmul.u32 %v2388, 2221713035
  %v2453 = vmul.u32 %v2389, 2221713035
  %v2454 = vmul.u32 %v2390, 2221713035
  %v2455 = vmul.u32 %v2391, 2221713035
  %v2456 = vmul.u32 %v2392, 2221713035
  %v2457 = vmul.u32 %v2393, 2221713035
  %v2458 = vmul.u32 %v2394, 2221713035
  %v2459 = vmul.u32 %v2395, 2221713035
  %v2460 = vmul.u32 %v2396, 2221713035
  %v2461 = vmul.u32 %v2397, 2221713035
  %v2462 = vmul.u32 %v2398, 2221713035
  %v2463 = vmul.u32 %v2399, 2221713035
  %v2464 = vmul.u32 %v2400, 2221713035
  %v2465 = vmul.u32 %v2401, 2221713035
  %v2466 = vmul.u32 %v2402, 2221713035
  %v2467 = vmul.u32 %v2403, 2221713035
  %v2468 = vmul.u32 %v2404, 2221713035
  %v2469 = vmul.u32 %v2405, 2221713035
  %v2470 = vmul.u32 %v2406, 2221713035
  %v2471 = vmul.u32 %v2407, 2221713035
  %v2472 = vmul.u32 %v2408, 2221713035
  %v2473 = vmul.u32 %v2409, 2221713035
  %v2474 = vmul.u32 %v2410, 2221713035
  %v2475 = vmul.u32 %v2411, 2221713035
  %v2476 = vmul.u32 %v2412, 2221713035
  %v2477 = vmul.u32 %v2413, 2221713035
  %v2478 = vmul.u32 %v2414, 2221713035
  %v2479 = vmul.u32 %v2415, 2221713035
  %v2480 = vmul.u32 %v2416, 2221713035
  %v2481 = vmul.u32 %v2417, 2221713035
  %v2482 = vmul.u32 %v2418, 2221713035
  %v2483 = vmul.u32 %v2419, 2221713035
  %v2484 = vmul.u32 %v2420, 2221713035
  %v2485 = vmul.u32 %v2421, 2221713035
  %v2486 = vmul.u32 %v2422, 2221713035
  %v2487 = vmul.u32 %v2423, 2221713035
  %v2488 = vmul.u32 %v2424, 2221713035
  %v2489 = vmul.u32 %v2425, 2221713035
  %v2490 = vmul.u32 %v2426, 2221713035
  %v2491 = vmul.u32 %v2427, 2221713035
  %v2492 = vmul.u32 %v2428, 2221713035
  %v2493 = vmul.u32 %v2429, 2221713035
  %v2494 = vmul.u32 %v2430, 2221713035
  %v2495 = vmul.u32 %v2431, 2221713035
  %v2496 = vmul.u32 %v2432, 2221713035
  %v2497 = vmul.u32 %v2433, 2221713035
  %v2498 = vmul.u32 %v2434, 2221713035
  %v2499 = vmul.u32 %v2435, 2221713035
  %v2500 = vmul.u32 %v2436, 2221713035
  %v2501 = vmul.u32 %v2437, 2221713035
  %v2502 = vshra.s32 %v2438, 16
  %v2503 = vshra.s32 %v2439, 16
  %v2504 = vshra.s32 %v2440, 16
  %v2505 = vshra.s32 %v2441, 16
  %v2506 = vshra.s32 %v2442, 16
  %v2507 = vshra.s32 %v2443, 16
  %v2508 = vshra.s32 %v2444, 16
  %v2509 = vshra.s32 %v2445, 16
  %v2510 = vshra.s32 %v2446, 16
  %v2511 = vshra.s32 %v2447, 16
  %v2512 = vshra.s32 %v2448, 16
  %v2513 = vshra.s32 %v2449, 16
  %v2514 = vshra.s32 %v2450, 16
  %v2515 = vshra.s32 %v2451, 16
  %v2516 = vshra.s32 %v2452, 16
  %v2517 = vshra.s32 %v2453, 16
  %v2518 = vshra.s32 %v2454, 16
  %v2519 = vshra.s32 %v2455, 16
  %v2520 = vshra.s32 %v2456, 16
  %v2521 = vshra.s32 %v2457, 16
  %v2522 = vshra.s32 %v2458, 16
  %v2523 = vshra.s32 %v2459, 16
  %v2524 = vshra.s32 %v2460, 16
  %v2525 = vshra.s32 %v2461, 16
  %v2526 = vshra.s32 %v2462, 16
  %v2527 = vshra.s32 %v2463, 16
  %v2528 = vshra.s32 %v2464, 16
  %v2529 = vshra.s32 %v2465, 16
  %v2530 = vshra.s32 %v2466, 16
  %v2531 = vshra.s32 %v2467, 16
  %v2532 = vshra.s32 %v2468, 16
  %v2533 = vshra.s32 %v2469, 16
  %v2534 = vshra.s32 %v2470, 16
  %v2535 = vshra.s32 %v2471, 16
  %v2536 = vshra.s32 %v2472, 16
  %v2537 = vshra.s32 %v2473, 16
  %v2538 = vshra.s32 %v2474, 16
  %v2539 = vshra.s32 %v2475, 16
  %v2540 = vshra.s32 %v2476, 16
  %v2541 = vshra.s32 %v2477, 16
  %v2542 = vshra.s32 %v2478, 16
  %v2543 = vshra.s32 %v2479, 16
  %v2544 = vshra.s32 %v2480, 16
  %v2545 = vshra.s32 %v2481, 16
  %v2546 = vshra.s32 %v2482, 16
  %v2547 = vshra.s32 %v2483, 16
  %v2548 = vshra.s32 %v2484, 16
  %v2549 = vshra.s32 %v2485, 16
  %v2550 = vshra.s32 %v2486, 16
  %v2551 = vshra.s32 %v2487, 16
  %v2552 = vshra.s32 %v2488, 16
  %v2553 = vshra.s32 %v2489, 16
  %v2554 = vshra.s32 %v2490, 16
  %v2555 = vshra.s32 %v2491, 16
  %v2556 = vshra.s32 %v2492, 16
  %v2557 = vshra.s32 %v2493, 16
  %v2558 = vshra.s32 %v2494, 16
  %v2559 = vshra.s32 %v2495, 16
  %v2560 = vshra.s32 %v2496, 16
  %v2561 = vshra.s32 %v2497, 16
  %v2562 = vshra.s32 %v2498, 16
  %v2563 = vshra.s32 %v2499, 16
  %v2564 = vshra.s32 %v2500, 16
  %v2565 = vshra.s32 %v2501, 16
  %v2566 = vand.u32 %v2502, 65535
  %v2567 = vand.u32 %v2503, 65535
  %v2568 = vand.u32 %v2504, 65535
  %v2569 = vand.u32 %v2505, 65535
  %v2570 = vand.u32 %v2506, 65535
  %v2571 = vand.u32 %v2507, 65535
  %v2572 = vand.u32 %v2508, 65535
  %v2573 = vand.u32 %v2509, 65535
  %v2574 = vand.u32 %v2510, 65535
  %v2575 = vand.u32 %v2511, 65535
  %v2576 = vand.u32 %v2512, 65535
  %v2577 = vand.u32 %v2513, 65535
  %v2578 = vand.u32 %v2514, 65535
  %v2579 = vand.u32 %v2515, 65535
  %v2580 = vand.u32 %v2516, 65535
  %v2581 = vand.u32 %v2517, 65535
  %v2582 = vand.u32 %v2518, 65535
  %v2583 = vand.u32 %v2519, 65535
  %v2584 = vand.u32 %v2520, 65535
  %v2585 = vand.u32 %v2521, 65535
  %v2586 = vand.u32 %v2522, 65535
  %v2587 = vand.u32 %v2523, 65535
  %v2588 = vand.u32 %v2524, 65535
  %v2589 = vand.u32 %v2525, 65535
  %v2590 = vand.u32 %v2526, 65535
  %v2591 = vand.u32 %v2527, 65535
  %v2592 = vand.u32 %v2528, 65535
  %v2593 = vand.u32 %v2529, 65535
  %v2594 = vand.u32 %v2530, 65535
  %v2595 = vand.u32 %v2531, 65535
  %v2596 = vand.u32 %v2532, 65535
  %v2597 = vand.u32 %v2533, 65535
  %v2598 = vand.u32 %v2534, 65535
  %v2599 = vand.u32 %v2535, 65535
  %v2600 = vand.u32 %v2536, 65535
  %v2601 = vand.u32 %v2537, 65535
  %v2602 = vand.u32 %v2538, 65535
  %v2603 = vand.u32 %v2539, 65535
  %v2604 = vand.u32 %v2540, 65535
  %v2605 = vand.u32 %v2541, 65535
  %v2606 = vand.u32 %v2542, 65535
  %v2607 = vand.u32 %v2543, 65535
  %v2608 = vand.u32 %v2544, 65535
  %v2609 = vand.u32 %v2545, 65535
  %v2610 = vand.u32 %v2546, 65535
  %v2611 = vand.u32 %v2547, 65535
  %v2612 = vand.u32 %v2548, 65535
  %v2613 = vand.u32 %v2549, 65535
  %v2614 = vand.u32 %v2550, 65535
  %v2615 = vand.u32 %v2551, 65535
  %v2616 = vand.u32 %v2552, 65535
  %v2617 = vand.u32 %v2553, 65535
  %v2618 = vand.u32 %v2554, 65535
  %v2619 = vand.u32 %v2555, 65535
  %v2620 = vand.u32 %v2556, 65535
  %v2621 = vand.u32 %v2557, 65535
  %v2622 = vand.u32 %v2558, 65535
  %v2623 = vand.u32 %v2559, 65535
  %v2624 = vand.u32 %v2560, 65535
  %v2625 = vand.u32 %v2561, 65535
  %v2626 = vand.u32 %v2562, 65535
  %v2627 = vand.u32 %v2563, 65535
  %v2628 = vand.u32 %v2564, 65535
  %v2629 = vand.u32 %v2565, 65535
  %v2630 = vxor.u32 %v2438, %v2566
  %v2631 = vxor.u32 %v2439, %v2567
  %v2632 = vxor.u32 %v2440, %v2568
  %v2633 = vxor.u32 %v2441, %v2569
  %v2634 = vxor.u32 %v2442, %v2570
  %v2635 = vxor.u32 %v2443, %v2571
  %v2636 = vxor.u32 %v2444, %v2572
  %v2637 = vxor.u32 %v2445, %v2573
  %v2638 = vxor.u32 %v2446, %v2574
  %v2639 = vxor.u32 %v2447, %v2575
  %v2640 = vxor.u32 %v2448, %v2576
  %v2641 = vxor.u32 %v2449, %v2577
  %v2642 = vxor.u32 %v2450, %v2578
  %v2643 = vxor.u32 %v2451, %v2579
  %v2644 = vxor.u32 %v2452, %v2580
  %v2645 = vxor.u32 %v2453, %v2581
  %v2646 = vxor.u32 %v2454, %v2582
  %v2647 = vxor.u32 %v2455, %v2583
  %v2648 = vxor.u32 %v2456, %v2584
  %v2649 = vxor.u32 %v2457, %v2585
  %v2650 = vxor.u32 %v2458, %v2586
  %v2651 = vxor.u32 %v2459, %v2587
  %v2652 = vxor.u32 %v2460, %v2588
  %v2653 = vxor.u32 %v2461, %v2589
  %v2654 = vxor.u32 %v2462, %v2590
  %v2655 = vxor.u32 %v2463, %v2591
  %v2656 = vxor.u32 %v2464, %v2592
  %v2657 = vxor.u32 %v2465, %v2593
  %v2658 = vxor.u32 %v2466, %v2594
  %v2659 = vxor.u32 %v2467, %v2595
  %v2660 = vxor.u32 %v2468, %v2596
  %v2661 = vxor.u32 %v2469, %v2597
  %v2662 = vxor.u32 %v2470, %v2598
  %v2663 = vxor.u32 %v2471, %v2599
  %v2664 = vxor.u32 %v2472, %v2600
  %v2665 = vxor.u32 %v2473, %v2601
  %v2666 = vxor.u32 %v2474, %v2602
  %v2667 = vxor.u32 %v2475, %v2603
  %v2668 = vxor.u32 %v2476, %v2604
  %v2669 = vxor.u32 %v2477, %v2605
  %v2670 = vxor.u32 %v2478, %v2606
  %v2671 = vxor.u32 %v2479, %v2607
  %v2672 = vxor.u32 %v2480, %v2608
  %v2673 = vxor.u32 %v2481, %v2609
  %v2674 = vxor.u32 %v2482, %v2610
  %v2675 = vxor.u32 %v2483, %v2611
  %v2676 = vxor.u32 %v2484, %v2612
  %v2677 = vxor.u32 %v2485, %v2613
  %v2678 = vxor.u32 %v2486, %v2614
  %v2679 = vxor.u32 %v2487, %v2615
  %v2680 = vxor.u32 %v2488, %v2616
  %v2681 = vxor.u32 %v2489, %v2617
  %v2682 = vxor.u32 %v2490, %v2618
  %v2683 = vxor.u32 %v2491, %v2619
  %v2684 = vxor.u32 %v2492, %v2620
  %v2685 = vxor.u32 %v2493, %v2621
  %v2686 = vxor.u32 %v2494, %v2622
  %v2687 = vxor.u32 %v2495, %v2623
  %v2688 = vxor.u32 %v2496, %v2624
  %v2689 = vxor.u32 %v2497, %v2625
  %v2690 = vxor.u32 %v2498, %v2626
  %v2691 = vxor.u32 %v2499, %v2627
  %v2692 = vxor.u32 %v2500, %v2628
  %v2693 = vxor.u32 %v2501, %v2629
  %v2694 = vshra.s32 %v2630, 8
  %v2695 = vshra.s32 %v2631, 8
  %v2696 = vshra.s32 %v2632, 8
  %v2697 = vshra.s32 %v2633, 8
  %v2698 = vshra.s32 %v2634, 8
  %v2699 = vshra.s32 %v2635, 8
  %v2700 = vshra.s32 %v2636, 8
  %v2701 = vshra.s32 %v2637, 8
  %v2702 = vshra.s32 %v2638, 8
  %v2703 = vshra.s32 %v2639, 8
  %v2704 = vshra.s32 %v2640, 8
  %v2705 = vshra.s32 %v2641, 8
  %v2706 = vshra.s32 %v2642, 8
  %v2707 = vshra.s32 %v2643, 8
  %v2708 = vshra.s32 %v2644, 8
  %v2709 = vshra.s32 %v2645, 8
  %v2710 = vshra.s32 %v2646, 8
  %v2711 = vshra.s32 %v2647, 8
  %v2712 = vshra.s32 %v2648, 8
  %v2713 = vshra.s32 %v2649, 8
  %v2714 = vshra.s32 %v2650, 8
  %v2715 = vshra.s32 %v2651, 8
  %v2716 = vshra.s32 %v2652, 8
  %v2717 = vshra.s32 %v2653, 8
  %v2718 = vshra.s32 %v2654, 8
  %v2719 = vshra.s32 %v2655, 8
  %v2720 = vshra.s32 %v2656, 8
  %v2721 = vshra.s32 %v2657, 8
  %v2722 = vshra.s32 %v2658, 8
  %v2723 = vshra.s32 %v2659, 8
  %v2724 = vshra.s32 %v2660, 8
  %v2725 = vshra.s32 %v2661, 8
  %v2726 = vshra.s32 %v2662, 8
  %v2727 = vshra.s32 %v2663, 8
  %v2728 = vshra.s32 %v2664, 8
  %v2729 = vshra.s32 %v2665, 8
  %v2730 = vshra.s32 %v2666, 8
  %v2731 = vshra.s32 %v2667, 8
  %v2732 = vshra.s32 %v2668, 8
  %v2733 = vshra.s32 %v2669, 8
  %v2734 = vshra.s32 %v2670, 8
  %v2735 = vshra.s32 %v2671, 8
  %v2736 = vshra.s32 %v2672, 8
  %v2737 = vshra.s32 %v2673, 8
  %v2738 = vshra.s32 %v2674, 8
  %v2739 = vshra.s32 %v2675, 8
  %v2740 = vshra.s32 %v2676, 8
  %v2741 = vshra.s32 %v2677, 8
  %v2742 = vshra.s32 %v2678, 8
  %v2743 = vshra.s32 %v2679, 8
  %v2744 = vshra.s32 %v2680, 8
  %v2745 = vshra.s32 %v2681, 8
  %v2746 = vshra.s32 %v2682, 8
  %v2747 = vshra.s32 %v2683, 8
  %v2748 = vshra.s32 %v2684, 8
  %v2749 = vshra.s32 %v2685, 8
  %v2750 = vshra.s32 %v2686, 8
  %v2751 = vshra.s32 %v2687, 8
  %v2752 = vshra.s32 %v2688, 8
  %v2753 = vshra.s32 %v2689, 8
  %v2754 = vshra.s32 %v2690, 8
  %v2755 = vshra.s32 %v2691, 8
  %v2756 = vshra.s32 %v2692, 8
  %v2757 = vshra.s32 %v2693, 8
  %v2758 = vand.u32 %v2694, 16777215
  %v2759 = vand.u32 %v2695, 16777215
  %v2760 = vand.u32 %v2696, 16777215
  %v2761 = vand.u32 %v2697, 16777215
  %v2762 = vand.u32 %v2698, 16777215
  %v2763 = vand.u32 %v2699, 16777215
  %v2764 = vand.u32 %v2700, 16777215
  %v2765 = vand.u32 %v2701, 16777215
  %v2766 = vand.u32 %v2702, 16777215
  %v2767 = vand.u32 %v2703, 16777215
  %v2768 = vand.u32 %v2704, 16777215
  %v2769 = vand.u32 %v2705, 16777215
  %v2770 = vand.u32 %v2706, 16777215
  %v2771 = vand.u32 %v2707, 16777215
  %v2772 = vand.u32 %v2708, 16777215
  %v2773 = vand.u32 %v2709, 16777215
  %v2774 = vand.u32 %v2710, 16777215
  %v2775 = vand.u32 %v2711, 16777215
  %v2776 = vand.u32 %v2712, 16777215
  %v2777 = vand.u32 %v2713, 16777215
  %v2778 = vand.u32 %v2714, 16777215
  %v2779 = vand.u32 %v2715, 16777215
  %v2780 = vand.u32 %v2716, 16777215
  %v2781 = vand.u32 %v2717, 16777215
  %v2782 = vand.u32 %v2718, 16777215
  %v2783 = vand.u32 %v2719, 16777215
  %v2784 = vand.u32 %v2720, 16777215
  %v2785 = vand.u32 %v2721, 16777215
  %v2786 = vand.u32 %v2722, 16777215
  %v2787 = vand.u32 %v2723, 16777215
  %v2788 = vand.u32 %v2724, 16777215
  %v2789 = vand.u32 %v2725, 16777215
  %v2790 = vand.u32 %v2726, 16777215
  %v2791 = vand.u32 %v2727, 16777215
  %v2792 = vand.u32 %v2728, 16777215
  %v2793 = vand.u32 %v2729, 16777215
  %v2794 = vand.u32 %v2730, 16777215
  %v2795 = vand.u32 %v2731, 16777215
  %v2796 = vand.u32 %v2732, 16777215
  %v2797 = vand.u32 %v2733, 16777215
  %v2798 = vand.u32 %v2734, 16777215
  %v2799 = vand.u32 %v2735, 16777215
  %v2800 = vand.u32 %v2736, 16777215
  %v2801 = vand.u32 %v2737, 16777215
  %v2802 = vand.u32 %v2738, 16777215
  %v2803 = vand.u32 %v2739, 16777215
  %v2804 = vand.u32 %v2740, 16777215
  %v2805 = vand.u32 %v2741, 16777215
  %v2806 = vand.u32 %v2742, 16777215
  %v2807 = vand.u32 %v2743, 16777215
  %v2808 = vand.u32 %v2744, 16777215
  %v2809 = vand.u32 %v2745, 16777215
  %v2810 = vand.u32 %v2746, 16777215
  %v2811 = vand.u32 %v2747, 16777215
  %v2812 = vand.u32 %v2748, 16777215
  %v2813 = vand.u32 %v2749, 16777215
  %v2814 = vand.u32 %v2750, 16777215
  %v2815 = vand.u32 %v2751, 16777215
  %v2816 = vand.u32 %v2752, 16777215
  %v2817 = vand.u32 %v2753, 16777215
  %v2818 = vand.u32 %v2754, 16777215
  %v2819 = vand.u32 %v2755, 16777215
  %v2820 = vand.u32 %v2756, 16777215
  %v2821 = vand.u32 %v2757, 16777215
  %vm2822 = vcmp.ge.s32.totalorder %v2758, 1677721
  %vm2823 = vcmp.ge.s32.totalorder %v2759, 1677721
  %vm2824 = vcmp.ge.s32.totalorder %v2760, 1677721
  %vm2825 = vcmp.ge.s32.totalorder %v2761, 1677721
  %vm2826 = vcmp.ge.s32.totalorder %v2762, 1677721
  %vm2827 = vcmp.ge.s32.totalorder %v2763, 1677721
  %vm2828 = vcmp.ge.s32.totalorder %v2764, 1677721
  %vm2829 = vcmp.ge.s32.totalorder %v2765, 1677721
  %vm2830 = vcmp.ge.s32.totalorder %v2766, 1677721
  %vm2831 = vcmp.ge.s32.totalorder %v2767, 1677721
  %vm2832 = vcmp.ge.s32.totalorder %v2768, 1677721
  %vm2833 = vcmp.ge.s32.totalorder %v2769, 1677721
  %vm2834 = vcmp.ge.s32.totalorder %v2770, 1677721
  %vm2835 = vcmp.ge.s32.totalorder %v2771, 1677721
  %vm2836 = vcmp.ge.s32.totalorder %v2772, 1677721
  %vm2837 = vcmp.ge.s32.totalorder %v2773, 1677721
  %vm2838 = vcmp.ge.s32.totalorder %v2774, 1677721
  %vm2839 = vcmp.ge.s32.totalorder %v2775, 1677721
  %vm2840 = vcmp.ge.s32.totalorder %v2776, 1677721
  %vm2841 = vcmp.ge.s32.totalorder %v2777, 1677721
  %vm2842 = vcmp.ge.s32.totalorder %v2778, 1677721
  %vm2843 = vcmp.ge.s32.totalorder %v2779, 1677721
  %vm2844 = vcmp.ge.s32.totalorder %v2780, 1677721
  %vm2845 = vcmp.ge.s32.totalorder %v2781, 1677721
  %vm2846 = vcmp.ge.s32.totalorder %v2782, 1677721
  %vm2847 = vcmp.ge.s32.totalorder %v2783, 1677721
  %vm2848 = vcmp.ge.s32.totalorder %v2784, 1677721
  %vm2849 = vcmp.ge.s32.totalorder %v2785, 1677721
  %vm2850 = vcmp.ge.s32.totalorder %v2786, 1677721
  %vm2851 = vcmp.ge.s32.totalorder %v2787, 1677721
  %vm2852 = vcmp.ge.s32.totalorder %v2788, 1677721
  %vm2853 = vcmp.ge.s32.totalorder %v2789, 1677721
  %vm2854 = vcmp.ge.s32.totalorder %v2790, 1677721
  %vm2855 = vcmp.ge.s32.totalorder %v2791, 1677721
  %vm2856 = vcmp.ge.s32.totalorder %v2792, 1677721
  %vm2857 = vcmp.ge.s32.totalorder %v2793, 1677721
  %vm2858 = vcmp.ge.s32.totalorder %v2794, 1677721
  %vm2859 = vcmp.ge.s32.totalorder %v2795, 1677721
  %vm2860 = vcmp.ge.s32.totalorder %v2796, 1677721
  %vm2861 = vcmp.ge.s32.totalorder %v2797, 1677721
  %vm2862 = vcmp.ge.s32.totalorder %v2798, 1677721
  %vm2863 = vcmp.ge.s32.totalorder %v2799, 1677721
  %vm2864 = vcmp.ge.s32.totalorder %v2800, 1677721
  %vm2865 = vcmp.ge.s32.totalorder %v2801, 1677721
  %vm2866 = vcmp.ge.s32.totalorder %v2802, 1677721
  %vm2867 = vcmp.ge.s32.totalorder %v2803, 1677721
  %vm2868 = vcmp.ge.s32.totalorder %v2804, 1677721
  %vm2869 = vcmp.ge.s32.totalorder %v2805, 1677721
  %vm2870 = vcmp.ge.s32.totalorder %v2806, 1677721
  %vm2871 = vcmp.ge.s32.totalorder %v2807, 1677721
  %vm2872 = vcmp.ge.s32.totalorder %v2808, 1677721
  %vm2873 = vcmp.ge.s32.totalorder %v2809, 1677721
  %vm2874 = vcmp.ge.s32.totalorder %v2810, 1677721
  %vm2875 = vcmp.ge.s32.totalorder %v2811, 1677721
  %vm2876 = vcmp.ge.s32.totalorder %v2812, 1677721
  %vm2877 = vcmp.ge.s32.totalorder %v2813, 1677721
  %vm2878 = vcmp.ge.s32.totalorder %v2814, 1677721
  %vm2879 = vcmp.ge.s32.totalorder %v2815, 1677721
  %vm2880 = vcmp.ge.s32.totalorder %v2816, 1677721
  %vm2881 = vcmp.ge.s32.totalorder %v2817, 1677721
  %vm2882 = vcmp.ge.s32.totalorder %v2818, 1677721
  %vm2883 = vcmp.ge.s32.totalorder %v2819, 1677721
  %vm2884 = vcmp.ge.s32.totalorder %v2820, 1677721
  %vm2885 = vcmp.ge.s32.totalorder %v2821, 1677721
  %v2886 = vsel %vm2822, %v1449, 0.0
  %v2887 = vsel %vm2823, %v1451, 0.0
  %v2888 = vsel %vm2824, %v1453, 0.0
  %v2889 = vsel %vm2825, %v1455, 0.0
  %v2890 = vsel %vm2826, %v1457, 0.0
  %v2891 = vsel %vm2827, %v1459, 0.0
  %v2892 = vsel %vm2828, %v1461, 0.0
  %v2893 = vsel %vm2829, %v1463, 0.0
  %v2894 = vsel %vm2830, %v1465, 0.0
  %v2895 = vsel %vm2831, %v1467, 0.0
  %v2896 = vsel %vm2832, %v1469, 0.0
  %v2897 = vsel %vm2833, %v1471, 0.0
  %v2898 = vsel %vm2834, %v1473, 0.0
  %v2899 = vsel %vm2835, %v1475, 0.0
  %v2900 = vsel %vm2836, %v1477, 0.0
  %v2901 = vsel %vm2837, %v1479, 0.0
  %v2902 = vsel %vm2838, %v1481, 0.0
  %v2903 = vsel %vm2839, %v1483, 0.0
  %v2904 = vsel %vm2840, %v1485, 0.0
  %v2905 = vsel %vm2841, %v1487, 0.0
  %v2906 = vsel %vm2842, %v1489, 0.0
  %v2907 = vsel %vm2843, %v1491, 0.0
  %v2908 = vsel %vm2844, %v1493, 0.0
  %v2909 = vsel %vm2845, %v1495, 0.0
  %v2910 = vsel %vm2846, %v1497, 0.0
  %v2911 = vsel %vm2847, %v1499, 0.0
  %v2912 = vsel %vm2848, %v1501, 0.0
  %v2913 = vsel %vm2849, %v1503, 0.0
  %v2914 = vsel %vm2850, %v1505, 0.0
  %v2915 = vsel %vm2851, %v1507, 0.0
  %v2916 = vsel %vm2852, %v1509, 0.0
  %v2917 = vsel %vm2853, %v1511, 0.0
  %v2918 = vsel %vm2854, %v1513, 0.0
  %v2919 = vsel %vm2855, %v1515, 0.0
  %v2920 = vsel %vm2856, %v1517, 0.0
  %v2921 = vsel %vm2857, %v1519, 0.0
  %v2922 = vsel %vm2858, %v1521, 0.0
  %v2923 = vsel %vm2859, %v1523, 0.0
  %v2924 = vsel %vm2860, %v1525, 0.0
  %v2925 = vsel %vm2861, %v1527, 0.0
  %v2926 = vsel %vm2862, %v1529, 0.0
  %v2927 = vsel %vm2863, %v1531, 0.0
  %v2928 = vsel %vm2864, %v1533, 0.0
  %v2929 = vsel %vm2865, %v1535, 0.0
  %v2930 = vsel %vm2866, %v1537, 0.0
  %v2931 = vsel %vm2867, %v1539, 0.0
  %v2932 = vsel %vm2868, %v1541, 0.0
  %v2933 = vsel %vm2869, %v1543, 0.0
  %v2934 = vsel %vm2870, %v1545, 0.0
  %v2935 = vsel %vm2871, %v1547, 0.0
  %v2936 = vsel %vm2872, %v1549, 0.0
  %v2937 = vsel %vm2873, %v1551, 0.0
  %v2938 = vsel %vm2874, %v1553, 0.0
  %v2939 = vsel %vm2875, %v1555, 0.0
  %v2940 = vsel %vm2876, %v1557, 0.0
  %v2941 = vsel %vm2877, %v1559, 0.0
  %v2942 = vsel %vm2878, %v1561, 0.0
  %v2943 = vsel %vm2879, %v1563, 0.0
  %v2944 = vsel %vm2880, %v1565, 0.0
  %v2945 = vsel %vm2881, %v1567, 0.0
  %v2946 = vsel %vm2882, %v1569, 0.0
  %v2947 = vsel %vm2883, %v1571, 0.0
  %v2948 = vsel %vm2884, %v1573, 0.0
  %v2949 = vsel %vm2885, %v1575, 0.0
  %2950 = vmatprep.subr.mxu0 0.0
  %2951 = vmatpush1.msra.mxu0 %v162
  %2952 = vmatprep.subr.mxu0 0.0
  %2953 = vmatpush1.msra.mxu0 %v161
  %2954 = vmatprep.subr.mxu0 0.0
  %2955 = vmatpush1.msra.mxu0 %v160
  %2956 = vmatprep.subr.mxu0 0.0
  %2957 = vmatpush1.msra.mxu0 %v159
  %2958 = vmatprep.subr.mxu0 0.0
  %2959 = vmatpush1.msra.mxu0 %v158
  %2960 = vmatprep.subr.mxu0 0.0
  %2961 = vmatpush1.msra.mxu0 %v157
  %2962 = vmatprep.subr.mxu0 0.0
  %2963 = vmatpush1.msra.mxu0 %v156
  %2964 = vmatprep.subr.mxu0 0.0
  %2965 = vmatpush1.msra.mxu0 %v155
  %2966 = vmatprep.subr.mxu0 0.0
  %2967 = vmatpush1.msra.mxu0 %v154
  %2968 = vmatprep.subr.mxu0 0.0
  %2969 = vmatpush1.msra.mxu0 %v153
  %2970 = vmatprep.subr.mxu0 0.0
  %2971 = vmatpush1.msra.mxu0 %v152
  %2972 = vmatprep.subr.mxu0 0.0
  %2973 = vmatpush1.msra.mxu0 %v151
  %2974 = vmatprep.subr.mxu0 0.0
  %2975 = vmatpush1.msra.mxu0 %v150
  %2976 = vmatprep.subr.mxu0 0.0
  %2977 = vmatpush1.msra.mxu0 %v149
  %2978 = vmatprep.subr.mxu0 0.0
  %2979 = vmatpush1.msra.mxu0 %v148
  %2980 = vmatprep.subr.mxu0 0.0
  %2981 = vmatpush1.msra.mxu0 %v147
  %2982 = vmatprep.subr.mxu0 0.0
  %2983 = vmatpush2.msra.mxu0 0.0
  %2984 = vmatprep.subr.mxu0 0.0
  %2985 = vmatpush2.msra.mxu0 0.0
  %2986 = vmatprep.subr.mxu0 0.0
  %2987 = vmatpush2.msra.mxu0 0.0
  %2988 = vmatprep.subr.mxu0 0.0
  %2989 = vmatpush2.msra.mxu0 0.0
  %2990 = vmatprep.subr.mxu0 0.0
  %2991 = vmatpush2.msra.mxu0 0.0
  %2992 = vmatprep.subr.mxu0 0.0
  %2993 = vmatpush2.msra.mxu0 0.0
  %2994 = vmatprep.subr.mxu0 0.0
  %2995 = vmatpush2.msra.mxu0 0.0
  %2996 = vmatprep.subr.mxu0 0.0
  %2997 = vmatpush2.msra.mxu0 0.0
  %2998 = vmatprep.subr.mxu0 0.0
  %2999 = vmatpush2.msra.mxu0 0.0
  %3000 = vmatprep.subr.mxu0 0.0
  %3001 = vmatpush2.msra.mxu0 0.0
  %3002 = vmatprep.subr.mxu0 0.0
  %3003 = vmatpush2.msra.mxu0 0.0
  %3004 = vmatprep.subr.mxu0 0.0
  %3005 = vmatpush2.msra.mxu0 0.0
  %3006 = vmatprep.subr.mxu0 0.0
  %3007 = vmatpush2.msra.mxu0 0.0
  %3008 = vmatprep.subr.mxu0 0.0
  %3009 = vmatpush2.msra.mxu0 0.0
  %3010 = vmatprep.subr.mxu0 0.0
  %3011 = vmatpush2.msra.mxu0 0.0
  %3012 = vmatprep.subr.mxu0 0.0
  %3013 = vmatpush2.msra.mxu0 0.0
  %3014 = vmatprep.mubr.f32.mxu0 0.0
  %3015 = vmatmul.mubr.f32.gmra.mxu0 %v2886
  %v3016 = vpop.f32.mrf.mxu0
  %v3017 = vadd.f32 0.0, %v3016
  %v3018 = vpop.f32.mrf.mxu0
  %3019 = vmatprep.mubr.f32.mxu0 0.0
  %3020 = vmatmul.mubr.f32.gmra.mxu0 %v2887
  %v3021 = vpop.f32.mrf.mxu0
  %v3022 = vadd.f32 0.0, %v3021
  %v3023 = vpop.f32.mrf.mxu0
  %3024 = vmatprep.mubr.f32.mxu0 0.0
  %3025 = vmatmul.mubr.f32.gmra.mxu0 %v2888
  %v3026 = vpop.f32.mrf.mxu0
  %v3027 = vadd.f32 0.0, %v3026
  %v3028 = vpop.f32.mrf.mxu0
  %3029 = vmatprep.mubr.f32.mxu0 0.0
  %3030 = vmatmul.mubr.f32.gmra.mxu0 %v2889
  %v3031 = vpop.f32.mrf.mxu0
  %v3032 = vadd.f32 0.0, %v3031
  %v3033 = vpop.f32.mrf.mxu0
  %3034 = vmatprep.mubr.f32.mxu0 0.0
  %3035 = vmatmul.mubr.f32.gmra.mxu0 %v2890
  %v3036 = vpop.f32.mrf.mxu0
  %v3037 = vadd.f32 0.0, %v3036
  %v3038 = vpop.f32.mrf.mxu0
  %3039 = vmatprep.mubr.f32.mxu0 0.0
  %3040 = vmatmul.mubr.f32.gmra.mxu0 %v2891
  %v3041 = vpop.f32.mrf.mxu0
  %v3042 = vadd.f32 0.0, %v3041
  %v3043 = vpop.f32.mrf.mxu0
  %3044 = vmatprep.mubr.f32.mxu0 0.0
  %3045 = vmatmul.mubr.f32.gmra.mxu0 %v2892
  %v3046 = vpop.f32.mrf.mxu0
  %v3047 = vadd.f32 0.0, %v3046
  %v3048 = vpop.f32.mrf.mxu0
  %3049 = vmatprep.mubr.f32.mxu0 0.0
  %3050 = vmatmul.mubr.f32.gmra.mxu0 %v2893
  %v3051 = vpop.f32.mrf.mxu0
  %v3052 = vadd.f32 0.0, %v3051
  %v3053 = vpop.f32.mrf.mxu0
  %3054 = vmatprep.mubr.f32.mxu0 0.0
  %3055 = vmatmul.mubr.f32.gmra.mxu0 %v2894
  %v3056 = vpop.f32.mrf.mxu0
  %v3057 = vadd.f32 0.0, %v3056
  %v3058 = vpop.f32.mrf.mxu0
  %3059 = vmatprep.mubr.f32.mxu0 0.0
  %3060 = vmatmul.mubr.f32.gmra.mxu0 %v2895
  %v3061 = vpop.f32.mrf.mxu0
  %v3062 = vadd.f32 0.0, %v3061
  %v3063 = vpop.f32.mrf.mxu0
  %3064 = vmatprep.mubr.f32.mxu0 0.0
  %3065 = vmatmul.mubr.f32.gmra.mxu0 %v2896
  %v3066 = vpop.f32.mrf.mxu0
  %v3067 = vadd.f32 0.0, %v3066
  %v3068 = vpop.f32.mrf.mxu0
  %3069 = vmatprep.mubr.f32.mxu0 0.0
  %3070 = vmatmul.mubr.f32.gmra.mxu0 %v2897
  %v3071 = vpop.f32.mrf.mxu0
  %v3072 = vadd.f32 0.0, %v3071
  %v3073 = vpop.f32.mrf.mxu0
  %3074 = vmatprep.mubr.f32.mxu0 0.0
  %3075 = vmatmul.mubr.f32.gmra.mxu0 %v2898
  %v3076 = vpop.f32.mrf.mxu0
  %v3077 = vadd.f32 0.0, %v3076
  %v3078 = vpop.f32.mrf.mxu0
  %3079 = vmatprep.mubr.f32.mxu0 0.0
  %3080 = vmatmul.mubr.f32.gmra.mxu0 %v2899
  %v3081 = vpop.f32.mrf.mxu0
  %v3082 = vadd.f32 0.0, %v3081
  %v3083 = vpop.f32.mrf.mxu0
  %3084 = vmatprep.mubr.f32.mxu0 0.0
  %3085 = vmatmul.mubr.f32.gmra.mxu0 %v2900
  %v3086 = vpop.f32.mrf.mxu0
  %v3087 = vadd.f32 0.0, %v3086
  %v3088 = vpop.f32.mrf.mxu0
  %3089 = vmatprep.mubr.f32.mxu0 0.0
  %3090 = vmatmul.mubr.f32.gmra.mxu0 %v2901
  %v3091 = vpop.f32.mrf.mxu0
  %v3092 = vadd.f32 0.0, %v3091
  %v3093 = vpop.f32.mrf.mxu0
  %3094 = vdwg.mxu0
  %3095 = vmatprep.subr.mxu0 0.0
  %3096 = vmatpush1.msra.mxu0 %v178
  %3097 = vmatprep.subr.mxu0 0.0
  %3098 = vmatpush1.msra.mxu0 %v177
  %3099 = vmatprep.subr.mxu0 0.0
  %3100 = vmatpush1.msra.mxu0 %v176
  %3101 = vmatprep.subr.mxu0 0.0
  %3102 = vmatpush1.msra.mxu0 %v175
  %3103 = vmatprep.subr.mxu0 0.0
  %3104 = vmatpush1.msra.mxu0 %v174
  %3105 = vmatprep.subr.mxu0 0.0
  %3106 = vmatpush1.msra.mxu0 %v173
  %3107 = vmatprep.subr.mxu0 0.0
  %3108 = vmatpush1.msra.mxu0 %v172
  %3109 = vmatprep.subr.mxu0 0.0
  %3110 = vmatpush1.msra.mxu0 %v171
  %3111 = vmatprep.subr.mxu0 0.0
  %3112 = vmatpush1.msra.mxu0 %v170
  %3113 = vmatprep.subr.mxu0 0.0
  %3114 = vmatpush1.msra.mxu0 %v169
  %3115 = vmatprep.subr.mxu0 0.0
  %3116 = vmatpush1.msra.mxu0 %v168
  %3117 = vmatprep.subr.mxu0 0.0
  %3118 = vmatpush1.msra.mxu0 %v167
  %3119 = vmatprep.subr.mxu0 0.0
  %3120 = vmatpush1.msra.mxu0 %v166
  %3121 = vmatprep.subr.mxu0 0.0
  %3122 = vmatpush1.msra.mxu0 %v165
  %3123 = vmatprep.subr.mxu0 0.0
  %3124 = vmatpush1.msra.mxu0 %v164
  %3125 = vmatprep.subr.mxu0 0.0
  %3126 = vmatpush1.msra.mxu0 %v163
  %3127 = vmatprep.subr.mxu0 0.0
  %3128 = vmatpush2.msra.mxu0 0.0
  %3129 = vmatprep.subr.mxu0 0.0
  %3130 = vmatpush2.msra.mxu0 0.0
  %3131 = vmatprep.subr.mxu0 0.0
  %3132 = vmatpush2.msra.mxu0 0.0
  %3133 = vmatprep.subr.mxu0 0.0
  %3134 = vmatpush2.msra.mxu0 0.0
  %3135 = vmatprep.subr.mxu0 0.0
  %3136 = vmatpush2.msra.mxu0 0.0
  %3137 = vmatprep.subr.mxu0 0.0
  %3138 = vmatpush2.msra.mxu0 0.0
  %3139 = vmatprep.subr.mxu0 0.0
  %3140 = vmatpush2.msra.mxu0 0.0
  %3141 = vmatprep.subr.mxu0 0.0
  %3142 = vmatpush2.msra.mxu0 0.0
  %3143 = vmatprep.subr.mxu0 0.0
  %3144 = vmatpush2.msra.mxu0 0.0
  %3145 = vmatprep.subr.mxu0 0.0
  %3146 = vmatpush2.msra.mxu0 0.0
  %3147 = vmatprep.subr.mxu0 0.0
  %3148 = vmatpush2.msra.mxu0 0.0
  %3149 = vmatprep.subr.mxu0 0.0
  %3150 = vmatpush2.msra.mxu0 0.0
  %3151 = vmatprep.subr.mxu0 0.0
  %3152 = vmatpush2.msra.mxu0 0.0
  %3153 = vmatprep.subr.mxu0 0.0
  %3154 = vmatpush2.msra.mxu0 0.0
  %3155 = vmatprep.subr.mxu0 0.0
  %3156 = vmatpush2.msra.mxu0 0.0
  %3157 = vmatprep.subr.mxu0 0.0
  %3158 = vmatpush2.msra.mxu0 0.0
  %3159 = vmatprep.mubr.f32.mxu0 0.0
  %3160 = vmatmul.mubr.f32.gmra.mxu0 %v2902
  %v3161 = vpop.f32.mrf.mxu0
  %v3162 = vadd.f32 0.0, %v3161
  %v3163 = vpop.f32.mrf.mxu0
  %3164 = vmatprep.mubr.f32.mxu0 0.0
  %3165 = vmatmul.mubr.f32.gmra.mxu0 %v2903
  %v3166 = vpop.f32.mrf.mxu0
  %v3167 = vadd.f32 0.0, %v3166
  %v3168 = vpop.f32.mrf.mxu0
  %3169 = vmatprep.mubr.f32.mxu0 0.0
  %3170 = vmatmul.mubr.f32.gmra.mxu0 %v2904
  %v3171 = vpop.f32.mrf.mxu0
  %v3172 = vadd.f32 0.0, %v3171
  %v3173 = vpop.f32.mrf.mxu0
  %3174 = vmatprep.mubr.f32.mxu0 0.0
  %3175 = vmatmul.mubr.f32.gmra.mxu0 %v2905
  %v3176 = vpop.f32.mrf.mxu0
  %v3177 = vadd.f32 0.0, %v3176
  %v3178 = vpop.f32.mrf.mxu0
  %3179 = vmatprep.mubr.f32.mxu0 0.0
  %3180 = vmatmul.mubr.f32.gmra.mxu0 %v2906
  %v3181 = vpop.f32.mrf.mxu0
  %v3182 = vadd.f32 0.0, %v3181
  %v3183 = vpop.f32.mrf.mxu0
  %3184 = vmatprep.mubr.f32.mxu0 0.0
  %3185 = vmatmul.mubr.f32.gmra.mxu0 %v2907
  %v3186 = vpop.f32.mrf.mxu0
  %v3187 = vadd.f32 0.0, %v3186
  %v3188 = vpop.f32.mrf.mxu0
  %3189 = vmatprep.mubr.f32.mxu0 0.0
  %3190 = vmatmul.mubr.f32.gmra.mxu0 %v2908
  %v3191 = vpop.f32.mrf.mxu0
  %v3192 = vadd.f32 0.0, %v3191
  %v3193 = vpop.f32.mrf.mxu0
  %3194 = vmatprep.mubr.f32.mxu0 0.0
  %3195 = vmatmul.mubr.f32.gmra.mxu0 %v2909
  %v3196 = vpop.f32.mrf.mxu0
  %v3197 = vadd.f32 0.0, %v3196
  %v3198 = vpop.f32.mrf.mxu0
  %3199 = vmatprep.mubr.f32.mxu0 0.0
  %3200 = vmatmul.mubr.f32.gmra.mxu0 %v2910
  %v3201 = vpop.f32.mrf.mxu0
  %v3202 = vadd.f32 0.0, %v3201
  %v3203 = vpop.f32.mrf.mxu0
  %3204 = vmatprep.mubr.f32.mxu0 0.0
  %3205 = vmatmul.mubr.f32.gmra.mxu0 %v2911
  %v3206 = vpop.f32.mrf.mxu0
  %v3207 = vadd.f32 0.0, %v3206
  %v3208 = vpop.f32.mrf.mxu0
  %3209 = vmatprep.mubr.f32.mxu0 0.0
  %3210 = vmatmul.mubr.f32.gmra.mxu0 %v2912
  %v3211 = vpop.f32.mrf.mxu0
  %v3212 = vadd.f32 0.0, %v3211
  %v3213 = vpop.f32.mrf.mxu0
  %3214 = vmatprep.mubr.f32.mxu0 0.0
  %3215 = vmatmul.mubr.f32.gmra.mxu0 %v2913
  %v3216 = vpop.f32.mrf.mxu0
  %v3217 = vadd.f32 0.0, %v3216
  %v3218 = vpop.f32.mrf.mxu0
  %3219 = vmatprep.mubr.f32.mxu0 0.0
  %3220 = vmatmul.mubr.f32.gmra.mxu0 %v2914
  %v3221 = vpop.f32.mrf.mxu0
  %v3222 = vadd.f32 0.0, %v3221
  %v3223 = vpop.f32.mrf.mxu0
  %3224 = vmatprep.mubr.f32.mxu0 0.0
  %3225 = vmatmul.mubr.f32.gmra.mxu0 %v2915
  %v3226 = vpop.f32.mrf.mxu0
  %v3227 = vadd.f32 0.0, %v3226
  %v3228 = vpop.f32.mrf.mxu0
  %3229 = vmatprep.mubr.f32.mxu0 0.0
  %3230 = vmatmul.mubr.f32.gmra.mxu0 %v2916
  %v3231 = vpop.f32.mrf.mxu0
  %v3232 = vadd.f32 0.0, %v3231
  %v3233 = vpop.f32.mrf.mxu0
  %3234 = vmatprep.mubr.f32.mxu0 0.0
  %3235 = vmatmul.mubr.f32.gmra.mxu0 %v2917
  %v3236 = vpop.f32.mrf.mxu0
  %v3237 = vadd.f32 0.0, %v3236
  %v3238 = vpop.f32.mrf.mxu0
  %3239 = vdwg.mxu0
  %3240 = vmatprep.subr.mxu0 0.0
  %3241 = vmatpush1.msra.mxu0 %v194
  %3242 = vmatprep.subr.mxu0 0.0
  %3243 = vmatpush1.msra.mxu0 %v193
  %3244 = vmatprep.subr.mxu0 0.0
  %3245 = vmatpush1.msra.mxu0 %v192
  %3246 = vmatprep.subr.mxu0 0.0
  %3247 = vmatpush1.msra.mxu0 %v191
  %3248 = vmatprep.subr.mxu0 0.0
  %3249 = vmatpush1.msra.mxu0 %v190
  %3250 = vmatprep.subr.mxu0 0.0
  %3251 = vmatpush1.msra.mxu0 %v189
  %3252 = vmatprep.subr.mxu0 0.0
  %3253 = vmatpush1.msra.mxu0 %v188
  %3254 = vmatprep.subr.mxu0 0.0
  %3255 = vmatpush1.msra.mxu0 %v187
  %3256 = vmatprep.subr.mxu0 0.0
  %3257 = vmatpush1.msra.mxu0 %v186
  %3258 = vmatprep.subr.mxu0 0.0
  %3259 = vmatpush1.msra.mxu0 %v185
  %3260 = vmatprep.subr.mxu0 0.0
  %3261 = vmatpush1.msra.mxu0 %v184
  %3262 = vmatprep.subr.mxu0 0.0
  %3263 = vmatpush1.msra.mxu0 %v183
  %3264 = vmatprep.subr.mxu0 0.0
  %3265 = vmatpush1.msra.mxu0 %v182
  %3266 = vmatprep.subr.mxu0 0.0
  %3267 = vmatpush1.msra.mxu0 %v181
  %3268 = vmatprep.subr.mxu0 0.0
  %3269 = vmatpush1.msra.mxu0 %v180
  %3270 = vmatprep.subr.mxu0 0.0
  %3271 = vmatpush1.msra.mxu0 %v179
  %3272 = vmatprep.subr.mxu0 0.0
  %3273 = vmatpush2.msra.mxu0 0.0
  %3274 = vmatprep.subr.mxu0 0.0
  %3275 = vmatpush2.msra.mxu0 0.0
  %3276 = vmatprep.subr.mxu0 0.0
  %3277 = vmatpush2.msra.mxu0 0.0
  %3278 = vmatprep.subr.mxu0 0.0
  %3279 = vmatpush2.msra.mxu0 0.0
  %3280 = vmatprep.subr.mxu0 0.0
  %3281 = vmatpush2.msra.mxu0 0.0
  %3282 = vmatprep.subr.mxu0 0.0
  %3283 = vmatpush2.msra.mxu0 0.0
  %3284 = vmatprep.subr.mxu0 0.0
  %3285 = vmatpush2.msra.mxu0 0.0
  %3286 = vmatprep.subr.mxu0 0.0
  %3287 = vmatpush2.msra.mxu0 0.0
  %3288 = vmatprep.subr.mxu0 0.0
  %3289 = vmatpush2.msra.mxu0 0.0
  %3290 = vmatprep.subr.mxu0 0.0
  %3291 = vmatpush2.msra.mxu0 0.0
  %3292 = vmatprep.subr.mxu0 0.0
  %3293 = vmatpush2.msra.mxu0 0.0
  %3294 = vmatprep.subr.mxu0 0.0
  %3295 = vmatpush2.msra.mxu0 0.0
  %3296 = vmatprep.subr.mxu0 0.0
  %3297 = vmatpush2.msra.mxu0 0.0
  %3298 = vmatprep.subr.mxu0 0.0
  %3299 = vmatpush2.msra.mxu0 0.0
  %3300 = vmatprep.subr.mxu0 0.0
  %3301 = vmatpush2.msra.mxu0 0.0
  %3302 = vmatprep.subr.mxu0 0.0
  %3303 = vmatpush2.msra.mxu0 0.0
  %3304 = vmatprep.mubr.f32.mxu0 0.0
  %3305 = vmatmul.mubr.f32.gmra.mxu0 %v2918
  %v3306 = vpop.f32.mrf.mxu0
  %v3307 = vadd.f32 0.0, %v3306
  %v3308 = vpop.f32.mrf.mxu0
  %3309 = vmatprep.mubr.f32.mxu0 0.0
  %3310 = vmatmul.mubr.f32.gmra.mxu0 %v2919
  %v3311 = vpop.f32.mrf.mxu0
  %v3312 = vadd.f32 0.0, %v3311
  %v3313 = vpop.f32.mrf.mxu0
  %3314 = vmatprep.mubr.f32.mxu0 0.0
  %3315 = vmatmul.mubr.f32.gmra.mxu0 %v2920
  %v3316 = vpop.f32.mrf.mxu0
  %v3317 = vadd.f32 0.0, %v3316
  %v3318 = vpop.f32.mrf.mxu0
  %3319 = vmatprep.mubr.f32.mxu0 0.0
  %3320 = vmatmul.mubr.f32.gmra.mxu0 %v2921
  %v3321 = vpop.f32.mrf.mxu0
  %v3322 = vadd.f32 0.0, %v3321
  %v3323 = vpop.f32.mrf.mxu0
  %3324 = vmatprep.mubr.f32.mxu0 0.0
  %3325 = vmatmul.mubr.f32.gmra.mxu0 %v2922
  %v3326 = vpop.f32.mrf.mxu0
  %v3327 = vadd.f32 0.0, %v3326
  %v3328 = vpop.f32.mrf.mxu0
  %3329 = vmatprep.mubr.f32.mxu0 0.0
  %3330 = vmatmul.mubr.f32.gmra.mxu0 %v2923
  %v3331 = vpop.f32.mrf.mxu0
  %v3332 = vadd.f32 0.0, %v3331
  %v3333 = vpop.f32.mrf.mxu0
  %3334 = vmatprep.mubr.f32.mxu0 0.0
  %3335 = vmatmul.mubr.f32.gmra.mxu0 %v2924
  %v3336 = vpop.f32.mrf.mxu0
  %v3337 = vadd.f32 0.0, %v3336
  %v3338 = vpop.f32.mrf.mxu0
  %3339 = vmatprep.mubr.f32.mxu0 0.0
  %3340 = vmatmul.mubr.f32.gmra.mxu0 %v2925
  %v3341 = vpop.f32.mrf.mxu0
  %v3342 = vadd.f32 0.0, %v3341
  %v3343 = vpop.f32.mrf.mxu0
  %3344 = vmatprep.mubr.f32.mxu0 0.0
  %3345 = vmatmul.mubr.f32.gmra.mxu0 %v2926
  %v3346 = vpop.f32.mrf.mxu0
  %v3347 = vadd.f32 0.0, %v3346
  %v3348 = vpop.f32.mrf.mxu0
  %3349 = vmatprep.mubr.f32.mxu0 0.0
  %3350 = vmatmul.mubr.f32.gmra.mxu0 %v2927
  %v3351 = vpop.f32.mrf.mxu0
  %v3352 = vadd.f32 0.0, %v3351
  %v3353 = vpop.f32.mrf.mxu0
  %3354 = vmatprep.mubr.f32.mxu0 0.0
  %3355 = vmatmul.mubr.f32.gmra.mxu0 %v2928
  %v3356 = vpop.f32.mrf.mxu0
  %v3357 = vadd.f32 0.0, %v3356
  %v3358 = vpop.f32.mrf.mxu0
  %3359 = vmatprep.mubr.f32.mxu0 0.0
  %3360 = vmatmul.mubr.f32.gmra.mxu0 %v2929
  %v3361 = vpop.f32.mrf.mxu0
  %v3362 = vadd.f32 0.0, %v3361
  %v3363 = vpop.f32.mrf.mxu0
  %3364 = vmatprep.mubr.f32.mxu0 0.0
  %3365 = vmatmul.mubr.f32.gmra.mxu0 %v2930
  %v3366 = vpop.f32.mrf.mxu0
  %v3367 = vadd.f32 0.0, %v3366
  %v3368 = vpop.f32.mrf.mxu0
  %3369 = vmatprep.mubr.f32.mxu0 0.0
  %3370 = vmatmul.mubr.f32.gmra.mxu0 %v2931
  %v3371 = vpop.f32.mrf.mxu0
  %v3372 = vadd.f32 0.0, %v3371
  %v3373 = vpop.f32.mrf.mxu0
  %3374 = vmatprep.mubr.f32.mxu0 0.0
  %3375 = vmatmul.mubr.f32.gmra.mxu0 %v2932
  %v3376 = vpop.f32.mrf.mxu0
  %v3377 = vadd.f32 0.0, %v3376
  %v3378 = vpop.f32.mrf.mxu0
  %3379 = vmatprep.mubr.f32.mxu0 0.0
  %3380 = vmatmul.mubr.f32.gmra.mxu0 %v2933
  %v3381 = vpop.f32.mrf.mxu0
  %v3382 = vadd.f32 0.0, %v3381
  %v3383 = vpop.f32.mrf.mxu0
  %3384 = vdwg.mxu0
  %3385 = vmatprep.subr.mxu0 0.0
  %3386 = vmatpush1.msra.mxu0 %v210
  %3387 = vmatprep.subr.mxu0 0.0
  %3388 = vmatpush1.msra.mxu0 %v209
  %3389 = vmatprep.subr.mxu0 0.0
  %3390 = vmatpush1.msra.mxu0 %v208
  %3391 = vmatprep.subr.mxu0 0.0
  %3392 = vmatpush1.msra.mxu0 %v207
  %3393 = vmatprep.subr.mxu0 0.0
  %3394 = vmatpush1.msra.mxu0 %v206
  %3395 = vmatprep.subr.mxu0 0.0
  %3396 = vmatpush1.msra.mxu0 %v205
  %3397 = vmatprep.subr.mxu0 0.0
  %3398 = vmatpush1.msra.mxu0 %v204
  %3399 = vmatprep.subr.mxu0 0.0
  %3400 = vmatpush1.msra.mxu0 %v203
  %3401 = vmatprep.subr.mxu0 0.0
  %3402 = vmatpush1.msra.mxu0 %v202
  %3403 = vmatprep.subr.mxu0 0.0
  %3404 = vmatpush1.msra.mxu0 %v201
  %3405 = vmatprep.subr.mxu0 0.0
  %3406 = vmatpush1.msra.mxu0 %v200
  %3407 = vmatprep.subr.mxu0 0.0
  %3408 = vmatpush1.msra.mxu0 %v199
  %3409 = vmatprep.subr.mxu0 0.0
  %3410 = vmatpush1.msra.mxu0 %v198
  %3411 = vmatprep.subr.mxu0 0.0
  %3412 = vmatpush1.msra.mxu0 %v197
  %3413 = vmatprep.subr.mxu0 0.0
  %3414 = vmatpush1.msra.mxu0 %v196
  %3415 = vmatprep.subr.mxu0 0.0
  %3416 = vmatpush1.msra.mxu0 %v195
  %3417 = vmatprep.subr.mxu0 0.0
  %3418 = vmatpush2.msra.mxu0 0.0
  %3419 = vmatprep.subr.mxu0 0.0
  %3420 = vmatpush2.msra.mxu0 0.0
  %3421 = vmatprep.subr.mxu0 0.0
  %3422 = vmatpush2.msra.mxu0 0.0
  %3423 = vmatprep.subr.mxu0 0.0
  %3424 = vmatpush2.msra.mxu0 0.0
  %3425 = vmatprep.subr.mxu0 0.0
  %3426 = vmatpush2.msra.mxu0 0.0
  %3427 = vmatprep.subr.mxu0 0.0
  %3428 = vmatpush2.msra.mxu0 0.0
  %3429 = vmatprep.subr.mxu0 0.0
  %3430 = vmatpush2.msra.mxu0 0.0
  %3431 = vmatprep.subr.mxu0 0.0
  %3432 = vmatpush2.msra.mxu0 0.0
  %3433 = vmatprep.subr.mxu0 0.0
  %3434 = vmatpush2.msra.mxu0 0.0
  %3435 = vmatprep.subr.mxu0 0.0
  %3436 = vmatpush2.msra.mxu0 0.0
  %3437 = vmatprep.subr.mxu0 0.0
  %3438 = vmatpush2.msra.mxu0 0.0
  %3439 = vmatprep.subr.mxu0 0.0
  %3440 = vmatpush2.msra.mxu0 0.0
  %3441 = vmatprep.subr.mxu0 0.0
  %3442 = vmatpush2.msra.mxu0 0.0
  %3443 = vmatprep.subr.mxu0 0.0
  %3444 = vmatpush2.msra.mxu0 0.0
  %3445 = vmatprep.subr.mxu0 0.0
  %3446 = vmatpush2.msra.mxu0 0.0
  %3447 = vmatprep.subr.mxu0 0.0
  %3448 = vmatpush2.msra.mxu0 0.0
  %3449 = vmatprep.mubr.f32.mxu0 0.0
  %3450 = vmatmul.mubr.f32.gmra.mxu0 %v2934
  %v3451 = vpop.f32.mrf.mxu0
  %v3452 = vadd.f32 0.0, %v3451
  %v3453 = vpop.f32.mrf.mxu0
  %3454 = vmatprep.mubr.f32.mxu0 0.0
  %3455 = vmatmul.mubr.f32.gmra.mxu0 %v2935
  %v3456 = vpop.f32.mrf.mxu0
  %v3457 = vadd.f32 0.0, %v3456
  %v3458 = vpop.f32.mrf.mxu0
  %3459 = vmatprep.mubr.f32.mxu0 0.0
  %3460 = vmatmul.mubr.f32.gmra.mxu0 %v2936
  %v3461 = vpop.f32.mrf.mxu0
  %v3462 = vadd.f32 0.0, %v3461
  %v3463 = vpop.f32.mrf.mxu0
  %3464 = vmatprep.mubr.f32.mxu0 0.0
  %3465 = vmatmul.mubr.f32.gmra.mxu0 %v2937
  %v3466 = vpop.f32.mrf.mxu0
  %v3467 = vadd.f32 0.0, %v3466
  %v3468 = vpop.f32.mrf.mxu0
  %3469 = vmatprep.mubr.f32.mxu0 0.0
  %3470 = vmatmul.mubr.f32.gmra.mxu0 %v2938
  %v3471 = vpop.f32.mrf.mxu0
  %v3472 = vadd.f32 0.0, %v3471
  %v3473 = vpop.f32.mrf.mxu0
  %3474 = vmatprep.mubr.f32.mxu0 0.0
  %3475 = vmatmul.mubr.f32.gmra.mxu0 %v2939
  %v3476 = vpop.f32.mrf.mxu0
  %v3477 = vadd.f32 0.0, %v3476
  %v3478 = vpop.f32.mrf.mxu0
  %3479 = vmatprep.mubr.f32.mxu0 0.0
  %3480 = vmatmul.mubr.f32.gmra.mxu0 %v2940
  %v3481 = vpop.f32.mrf.mxu0
  %v3482 = vadd.f32 0.0, %v3481
  %v3483 = vpop.f32.mrf.mxu0
  %3484 = vmatprep.mubr.f32.mxu0 0.0
  %3485 = vmatmul.mubr.f32.gmra.mxu0 %v2941
  %v3486 = vpop.f32.mrf.mxu0
  %v3487 = vadd.f32 0.0, %v3486
  %v3488 = vpop.f32.mrf.mxu0
  %3489 = vmatprep.mubr.f32.mxu0 0.0
  %3490 = vmatmul.mubr.f32.gmra.mxu0 %v2942
  %v3491 = vpop.f32.mrf.mxu0
  %v3492 = vadd.f32 0.0, %v3491
  %v3493 = vpop.f32.mrf.mxu0
  %3494 = vmatprep.mubr.f32.mxu0 0.0
  %3495 = vmatmul.mubr.f32.gmra.mxu0 %v2943
  %v3496 = vpop.f32.mrf.mxu0
  %v3497 = vadd.f32 0.0, %v3496
  %v3498 = vpop.f32.mrf.mxu0
  %3499 = vmatprep.mubr.f32.mxu0 0.0
  %3500 = vmatmul.mubr.f32.gmra.mxu0 %v2944
  %v3501 = vpop.f32.mrf.mxu0
  %v3502 = vadd.f32 0.0, %v3501
  %v3503 = vpop.f32.mrf.mxu0
  %3504 = vmatprep.mubr.f32.mxu0 0.0
  %3505 = vmatmul.mubr.f32.gmra.mxu0 %v2945
  %v3506 = vpop.f32.mrf.mxu0
  %v3507 = vadd.f32 0.0, %v3506
  %v3508 = vpop.f32.mrf.mxu0
  %3509 = vmatprep.mubr.f32.mxu0 0.0
  %3510 = vmatmul.mubr.f32.gmra.mxu0 %v2946
  %v3511 = vpop.f32.mrf.mxu0
  %v3512 = vadd.f32 0.0, %v3511
  %v3513 = vpop.f32.mrf.mxu0
  %3514 = vmatprep.mubr.f32.mxu0 0.0
  %3515 = vmatmul.mubr.f32.gmra.mxu0 %v2947
  %v3516 = vpop.f32.mrf.mxu0
  %v3517 = vadd.f32 0.0, %v3516
  %v3518 = vpop.f32.mrf.mxu0
  %3519 = vmatprep.mubr.f32.mxu0 0.0
  %3520 = vmatmul.mubr.f32.gmra.mxu0 %v2948
  %v3521 = vpop.f32.mrf.mxu0
  %v3522 = vadd.f32 0.0, %v3521
  %v3523 = vpop.f32.mrf.mxu0
  %3524 = vmatprep.mubr.f32.mxu0 0.0
  %3525 = vmatmul.mubr.f32.gmra.mxu0 %v2949
  %v3526 = vpop.f32.mrf.mxu0
  %v3527 = vadd.f32 0.0, %v3526
  %v3528 = vpop.f32.mrf.mxu0
  %3529 = vdwg.mxu0
  %v3530 = vrcp.pop %v1577
  %v3531 = vmul.f32 1.1111112, %v3530
  %v3532 = vrcp.pop %v1579
  %v3533 = vmul.f32 1.1111112, %v3532
  %v3534 = vrcp.pop %v1581
  %v3535 = vmul.f32 1.1111112, %v3534
  %v3536 = vrcp.pop %v1583
  %v3537 = vmul.f32 1.1111112, %v3536
  %v3538 = vrcp.pop %v1585
  %v3539 = vmul.f32 1.1111112, %v3538
  %v3540 = vrcp.pop %v1587
  %v3541 = vmul.f32 1.1111112, %v3540
  %v3542 = vrcp.pop %v1589
  %v3543 = vmul.f32 1.1111112, %v3542
  %v3544 = vrcp.pop %v1591
  %v3545 = vmul.f32 1.1111112, %v3544
  %v3546 = vrcp.pop %v1593
  %v3547 = vmul.f32 1.1111112, %v3546
  %v3548 = vrcp.pop %v1595
  %v3549 = vmul.f32 1.1111112, %v3548
  %v3550 = vrcp.pop %v1597
  %v3551 = vmul.f32 1.1111112, %v3550
  %v3552 = vrcp.pop %v1599
  %v3553 = vmul.f32 1.1111112, %v3552
  %v3554 = vrcp.pop %v1601
  %v3555 = vmul.f32 1.1111112, %v3554
  %v3556 = vrcp.pop %v1603
  %v3557 = vmul.f32 1.1111112, %v3556
  %v3558 = vrcp.pop %v1605
  %v3559 = vmul.f32 1.1111112, %v3558
  %v3560 = vrcp.pop %v1607
  %v3561 = vmul.f32 1.1111112, %v3560
  %v3562 = vrcp.pop %v1609
  %v3563 = vmul.f32 1.1111112, %v3562
  %v3564 = vrcp.pop %v1611
  %v3565 = vmul.f32 1.1111112, %v3564
  %v3566 = vrcp.pop %v1613
  %v3567 = vmul.f32 1.1111112, %v3566
  %v3568 = vrcp.pop %v1615
  %v3569 = vmul.f32 1.1111112, %v3568
  %v3570 = vrcp.pop %v1617
  %v3571 = vmul.f32 1.1111112, %v3570
  %v3572 = vrcp.pop %v1619
  %v3573 = vmul.f32 1.1111112, %v3572
  %v3574 = vrcp.pop %v1621
  %v3575 = vmul.f32 1.1111112, %v3574
  %v3576 = vrcp.pop %v1623
  %v3577 = vmul.f32 1.1111112, %v3576
  %v3578 = vrcp.pop %v1625
  %v3579 = vmul.f32 1.1111112, %v3578
  %v3580 = vrcp.pop %v1627
  %v3581 = vmul.f32 1.1111112, %v3580
  %v3582 = vrcp.pop %v1629
  %v3583 = vmul.f32 1.1111112, %v3582
  %v3584 = vrcp.pop %v1631
  %v3585 = vmul.f32 1.1111112, %v3584
  %v3586 = vrcp.pop %v1633
  %v3587 = vmul.f32 1.1111112, %v3586
  %v3588 = vrcp.pop %v1635
  %v3589 = vmul.f32 1.1111112, %v3588
  %v3590 = vrcp.pop %v1637
  %v3591 = vmul.f32 1.1111112, %v3590
  %v3592 = vrcp.pop %v1639
  %v3593 = vmul.f32 1.1111112, %v3592
  %v3594 = vrcp.pop %v1641
  %v3595 = vmul.f32 1.1111112, %v3594
  %v3596 = vrcp.pop %v1643
  %v3597 = vmul.f32 1.1111112, %v3596
  %v3598 = vrcp.pop %v1645
  %v3599 = vmul.f32 1.1111112, %v3598
  %v3600 = vrcp.pop %v1647
  %v3601 = vmul.f32 1.1111112, %v3600
  %v3602 = vrcp.pop %v1649
  %v3603 = vmul.f32 1.1111112, %v3602
  %v3604 = vrcp.pop %v1651
  %v3605 = vmul.f32 1.1111112, %v3604
  %v3606 = vrcp.pop %v1653
  %v3607 = vmul.f32 1.1111112, %v3606
  %v3608 = vrcp.pop %v1655
  %v3609 = vmul.f32 1.1111112, %v3608
  %v3610 = vrcp.pop %v1657
  %v3611 = vmul.f32 1.1111112, %v3610
  %v3612 = vrcp.pop %v1659
  %v3613 = vmul.f32 1.1111112, %v3612
  %v3614 = vrcp.pop %v1661
  %v3615 = vmul.f32 1.1111112, %v3614
  %v3616 = vrcp.pop %v1663
  %v3617 = vmul.f32 1.1111112, %v3616
  %v3618 = vrcp.pop %v1665
  %v3619 = vmul.f32 1.1111112, %v3618
  %v3620 = vrcp.pop %v1667
  %v3621 = vmul.f32 1.1111112, %v3620
  %v3622 = vrcp.pop %v1669
  %v3623 = vmul.f32 1.1111112, %v3622
  %v3624 = vrcp.pop %v1671
  %v3625 = vmul.f32 1.1111112, %v3624
  %v3626 = vrcp.pop %v1673
  %v3627 = vmul.f32 1.1111112, %v3626
  %v3628 = vrcp.pop %v1675
  %v3629 = vmul.f32 1.1111112, %v3628
  %v3630 = vrcp.pop %v1677
  %v3631 = vmul.f32 1.1111112, %v3630
  %v3632 = vrcp.pop %v1679
  %v3633 = vmul.f32 1.1111112, %v3632
  %v3634 = vrcp.pop %v1681
  %v3635 = vmul.f32 1.1111112, %v3634
  %v3636 = vrcp.pop %v1683
  %v3637 = vmul.f32 1.1111112, %v3636
  %v3638 = vrcp.pop %v1685
  %v3639 = vmul.f32 1.1111112, %v3638
  %v3640 = vrcp.pop %v1687
  %v3641 = vmul.f32 1.1111112, %v3640
  %v3642 = vrcp.pop %v1689
  %v3643 = vmul.f32 1.1111112, %v3642
  %v3644 = vrcp.pop %v1691
  %v3645 = vmul.f32 1.1111112, %v3644
  %v3646 = vrcp.pop %v1693
  %v3647 = vmul.f32 1.1111112, %v3646
  %v3648 = vrcp.pop %v1695
  %v3649 = vmul.f32 1.1111112, %v3648
  %v3650 = vrcp.pop %v1697
  %v3651 = vmul.f32 1.1111112, %v3650
  %v3652 = vrcp.pop %v1699
  %v3653 = vmul.f32 1.1111112, %v3652
  %v3654 = vrcp.pop %v1701
  %v3655 = vmul.f32 1.1111112, %v3654
  %v3656 = vrcp.pop %v1703
  %v3657 = vmul.f32 1.1111112, %v3656
  %v3658 = vmul.f32 %v3017, %v3531
  %v3659 = vmul.f32 %v3022, %v3533
  %v3660 = vmul.f32 %v3027, %v3535
  %v3661 = vmul.f32 %v3032, %v3537
  %v3662 = vmul.f32 %v3037, %v3539
  %v3663 = vmul.f32 %v3042, %v3541
  %v3664 = vmul.f32 %v3047, %v3543
  %v3665 = vmul.f32 %v3052, %v3545
  %v3666 = vmul.f32 %v3057, %v3547
  %v3667 = vmul.f32 %v3062, %v3549
  %v3668 = vmul.f32 %v3067, %v3551
  %v3669 = vmul.f32 %v3072, %v3553
  %v3670 = vmul.f32 %v3077, %v3555
  %v3671 = vmul.f32 %v3082, %v3557
  %v3672 = vmul.f32 %v3087, %v3559
  %v3673 = vmul.f32 %v3092, %v3561
  %v3674 = vmul.f32 %v3162, %v3563
  %v3675 = vmul.f32 %v3167, %v3565
  %v3676 = vmul.f32 %v3172, %v3567
  %v3677 = vmul.f32 %v3177, %v3569
  %v3678 = vmul.f32 %v3182, %v3571
  %v3679 = vmul.f32 %v3187, %v3573
  %v3680 = vmul.f32 %v3192, %v3575
  %v3681 = vmul.f32 %v3197, %v3577
  %v3682 = vmul.f32 %v3202, %v3579
  %v3683 = vmul.f32 %v3207, %v3581
  %v3684 = vmul.f32 %v3212, %v3583
  %v3685 = vmul.f32 %v3217, %v3585
  %v3686 = vmul.f32 %v3222, %v3587
  %v3687 = vmul.f32 %v3227, %v3589
  %v3688 = vmul.f32 %v3232, %v3591
  %v3689 = vmul.f32 %v3237, %v3593
  %v3690 = vmul.f32 %v3307, %v3595
  %v3691 = vmul.f32 %v3312, %v3597
  %v3692 = vmul.f32 %v3317, %v3599
  %v3693 = vmul.f32 %v3322, %v3601
  %v3694 = vmul.f32 %v3327, %v3603
  %v3695 = vmul.f32 %v3332, %v3605
  %v3696 = vmul.f32 %v3337, %v3607
  %v3697 = vmul.f32 %v3342, %v3609
  %v3698 = vmul.f32 %v3347, %v3611
  %v3699 = vmul.f32 %v3352, %v3613
  %v3700 = vmul.f32 %v3357, %v3615
  %v3701 = vmul.f32 %v3362, %v3617
  %v3702 = vmul.f32 %v3367, %v3619
  %v3703 = vmul.f32 %v3372, %v3621
  %v3704 = vmul.f32 %v3377, %v3623
  %v3705 = vmul.f32 %v3382, %v3625
  %v3706 = vmul.f32 %v3452, %v3627
  %v3707 = vmul.f32 %v3457, %v3629
  %v3708 = vmul.f32 %v3462, %v3631
  %v3709 = vmul.f32 %v3467, %v3633
  %v3710 = vmul.f32 %v3472, %v3635
  %v3711 = vmul.f32 %v3477, %v3637
  %v3712 = vmul.f32 %v3482, %v3639
  %v3713 = vmul.f32 %v3487, %v3641
  %v3714 = vmul.f32 %v3492, %v3643
  %v3715 = vmul.f32 %v3497, %v3645
  %v3716 = vmul.f32 %v3502, %v3647
  %v3717 = vmul.f32 %v3507, %v3649
  %v3718 = vmul.f32 %v3512, %v3651
  %v3719 = vmul.f32 %v3517, %v3653
  %v3720 = vmul.f32 %v3522, %v3655
  %v3721 = vmul.f32 %v3527, %v3657
  %3722 = vst.msk [vmem:[%s5] sm:$0xff] %vm291, %v3658
  %3723 = vst.msk [vmem:[%s5 + $0x8] sm:$0xff] %vm291, %v3659
  %3724 = vst.msk [vmem:[%s5 + $0x10] sm:$0xff] %vm291, %v3660
  %3725 = vst.msk [vmem:[%s5 + $0x18] sm:$0xff] %vm291, %v3661
  %3726 = vst.msk [vmem:[%s5 + $0x20] sm:$0xff] %vm291, %v3662
  %3727 = vst.msk [vmem:[%s5 + $0x28] sm:$0xff] %vm291, %v3663
  %3728 = vst.msk [vmem:[%s5 + $0x30] sm:$0xff] %vm291, %v3664
  %3729 = vst.msk [vmem:[%s5 + $0x38] sm:$0xff] %vm291, %v3665
  %3730 = vst.msk [vmem:[%s5 + $0x40] sm:$0xff] %vm291, %v3666
  %3731 = vst.msk [vmem:[%s5 + $0x48] sm:$0xff] %vm291, %v3667
  %3732 = vst.msk [vmem:[%s5 + $0x50] sm:$0xff] %vm291, %v3668
  %3733 = vst.msk [vmem:[%s5 + $0x58] sm:$0xff] %vm291, %v3669
  %3734 = vst.msk [vmem:[%s5 + $0x60] sm:$0xff] %vm291, %v3670
  %3735 = vst.msk [vmem:[%s5 + $0x68] sm:$0xff] %vm291, %v3671
  %3736 = vst.msk [vmem:[%s5 + $0x70] sm:$0xff] %vm291, %v3672
  %3737 = vst.msk [vmem:[%s5 + $0x78] sm:$0xff] %vm291, %v3673
  %3738 = vst.msk [vmem:[%s5 + $0x80] sm:$0xff] %vm291, %v3674
  %3739 = vst.msk [vmem:[%s5 + $0x88] sm:$0xff] %vm291, %v3675
  %3740 = vst.msk [vmem:[%s5 + $0x90] sm:$0xff] %vm291, %v3676
  %3741 = vst.msk [vmem:[%s5 + $0x98] sm:$0xff] %vm291, %v3677
  %3742 = vst.msk [vmem:[%s5 + $0xa0] sm:$0xff] %vm291, %v3678
  %3743 = vst.msk [vmem:[%s5 + $0xa8] sm:$0xff] %vm291, %v3679
  %3744 = vst.msk [vmem:[%s5 + $0xb0] sm:$0xff] %vm291, %v3680
  %3745 = vst.msk [vmem:[%s5 + $0xb8] sm:$0xff] %vm291, %v3681
  %3746 = vst.msk [vmem:[%s5 + $0xc0] sm:$0xff] %vm291, %v3682
  %3747 = vst.msk [vmem:[%s5 + $0xc8] sm:$0xff] %vm291, %v3683
  %3748 = vst.msk [vmem:[%s5 + $0xd0] sm:$0xff] %vm291, %v3684
  %3749 = vst.msk [vmem:[%s5 + $0xd8] sm:$0xff] %vm291, %v3685
  %3750 = vst.msk [vmem:[%s5 + $0xe0] sm:$0xff] %vm291, %v3686
  %3751 = vst.msk [vmem:[%s5 + $0xe8] sm:$0xff] %vm291, %v3687
  %3752 = vst.msk [vmem:[%s5 + $0xf0] sm:$0xff] %vm291, %v3688
  %3753 = vst.msk [vmem:[%s5 + $0xf8] sm:$0xff] %vm291, %v3689
  %3754 = vst.msk [vmem:[%s5 + $0x100] sm:$0xff] %vm291, %v3690
  %3755 = vst.msk [vmem:[%s5 + $0x108] sm:$0xff] %vm291, %v3691
  %3756 = vst.msk [vmem:[%s5 + $0x110] sm:$0xff] %vm291, %v3692
  %3757 = vst.msk [vmem:[%s5 + $0x118] sm:$0xff] %vm291, %v3693
  %3758 = vst.msk [vmem:[%s5 + $0x120] sm:$0xff] %vm291, %v3694
  %3759 = vst.msk [vmem:[%s5 + $0x128] sm:$0xff] %vm291, %v3695
  %3760 = vst.msk [vmem:[%s5 + $0x130] sm:$0xff] %vm291, %v3696
  %3761 = vst.msk [vmem:[%s5 + $0x138] sm:$0xff] %vm291, %v3697
  %3762 = vst.msk [vmem:[%s5 + $0x140] sm:$0xff] %vm291, %v3698
  %3763 = vst.msk [vmem:[%s5 + $0x148] sm:$0xff] %vm291, %v3699
  %3764 = vst.msk [vmem:[%s5 + $0x150] sm:$0xff] %vm291, %v3700
  %3765 = vst.msk [vmem:[%s5 + $0x158] sm:$0xff] %vm291, %v3701
  %3766 = vst.msk [vmem:[%s5 + $0x160] sm:$0xff] %vm291, %v3702
  %3767 = vst.msk [vmem:[%s5 + $0x168] sm:$0xff] %vm291, %v3703
  %3768 = vst.msk [vmem:[%s5 + $0x170] sm:$0xff] %vm291, %v3704
  %3769 = vst.msk [vmem:[%s5 + $0x178] sm:$0xff] %vm291, %v3705
  %3770 = vst.msk [vmem:[%s5 + $0x180] sm:$0xff] %vm291, %v3706
  %3771 = vst.msk [vmem:[%s5 + $0x188] sm:$0xff] %vm291, %v3707
  %3772 = vst.msk [vmem:[%s5 + $0x190] sm:$0xff] %vm291, %v3708
  %3773 = vst.msk [vmem:[%s5 + $0x198] sm:$0xff] %vm291, %v3709
  %3774 = vst.msk [vmem:[%s5 + $0x1a0] sm:$0xff] %vm291, %v3710
  %3775 = vst.msk [vmem:[%s5 + $0x1a8] sm:$0xff] %vm291, %v3711
  %3776 = vst.msk [vmem:[%s5 + $0x1b0] sm:$0xff] %vm291, %v3712
  %3777 = vst.msk [vmem:[%s5 + $0x1b8] sm:$0xff] %vm291, %v3713
  %3778 = vst.msk [vmem:[%s5 + $0x1c0] sm:$0xff] %vm291, %v3714
  %3779 = vst.msk [vmem:[%s5 + $0x1c8] sm:$0xff] %vm291, %v3715
  %3780 = vst.msk [vmem:[%s5 + $0x1d0] sm:$0xff] %vm291, %v3716
  %3781 = vst.msk [vmem:[%s5 + $0x1d8] sm:$0xff] %vm291, %v3717
  %3782 = vst.msk [vmem:[%s5 + $0x1e0] sm:$0xff] %vm291, %v3718
  %3783 = vst.msk [vmem:[%s5 + $0x1e8] sm:$0xff] %vm291, %v3719
  %3784 = vst.msk [vmem:[%s5 + $0x1f0] sm:$0xff] %vm291, %v3720
  %3785 = vst.msk [vmem:[%s5 + $0x1f8] sm:$0xff] %vm291, %v3721
  // Predicated region
  $region18: #{tpu_custom_call.1} parent=0 // pred_check
    _
  $region19: #{tpu_custom_call.1} parent=0 // pred_check_branch
    %3787 = sbr.rel (0) target = $region21
  $region20: #{tpu_custom_call.1} parent=0 // pred_region
    _
  $region21: #{tpu_custom_call.1} parent=0 // pred_fallthru
    _
  // Predicated region
  $region22: #{tpu_custom_call.1} parent=0 // pred_check
    _
  $region23: #{tpu_custom_call.1} parent=0 // pred_check_branch
    %3789 = sbr.rel (0) target = $region25
  $region24: #{tpu_custom_call.1} parent=0 // pred_region
    _
  $region25: #{tpu_custom_call.1} parent=0 // pred_fallthru
    _

</llo_original>
